<compile_context>
chip_gen: v7x
topology: tpu7x:2x2x1
jax: 0.10.0
libtpu: 0.0.40
codegen_flags: <defaults>
</compile_context>

<pallas_src>
import jax
import jax.numpy as jnp
from jax import lax
from jax.experimental import pallas as pl
from jax.experimental.pallas import tpu as pltpu


def _layer_norm(x, gamma, beta, eps=1e-5):
    # PyTorch LayerNorm: biased variance, eps added to var before rsqrt.
    mean = jnp.mean(x, axis=-1, keepdims=True)
    var = jnp.mean(jnp.square(x - mean), axis=-1, keepdims=True)
    return (x - mean) * lax.rsqrt(var + eps) * gamma + beta


def _bf16_dot(a, b):
    """a @ b with bf16 MXU operands, f32 accumulation (2-D operands)."""
    return lax.dot_general(
        a.astype(jnp.bfloat16), b.astype(jnp.bfloat16),
        dimension_numbers=(((1,), (0,)), ((), ())),
        preferred_element_type=jnp.float32)


def _bdot_qkt(q, k):
    """Batched q @ k^T: contract last dims, batch dim 0 (no materialized transpose)."""
    return lax.dot_general(
        q.astype(jnp.bfloat16), k.astype(jnp.bfloat16),
        dimension_numbers=(((2,), (2,)), ((0,), (0,))),
        preferred_element_type=jnp.float32)


def _bdot_pv(p, v):
    """Batched p @ v: batch dim 0."""
    return lax.dot_general(
        p.astype(jnp.bfloat16), v.astype(jnp.bfloat16),
        dimension_numbers=(((2,), (1,)), ((0,), (0,))),
        preferred_element_type=jnp.float32)


def sarf_kernel(x_ref, wqkv_ref, wo_ref, wff_ref, slab_ref, o_ref):
    TB, S, E = x_ref.shape
    xf = x_ref[...].astype(jnp.float32)                       # (TB, S, E)

    # normalize_data: min-max over each (S, E) sequence (one PyTorch call each).
    # Reduce on the existing (TB, S, E) layout (lane axis, then sublane axis).
    # Note: a constant sequence (mx == mn) yields inf/NaN — faithful to PyTorch.
    mn = jnp.min(jnp.min(xf, axis=2, keepdims=True), axis=1, keepdims=True)
    mx = jnp.max(jnp.max(xf, axis=2, keepdims=True), axis=1, keepdims=True)
    xn = (xf - mn) / (mx - mn)                                 # exact f32 divide

    # Packed bias / LayerNorm parameter slab (f32, VMEM-resident).
    bqkv = slab_ref[0:1, :]                                    # (1, 3E)
    bo = slab_ref[1:2, 0:E]
    g1 = slab_ref[1:2, E:2 * E]
    b1 = slab_ref[1:2, 2 * E:3 * E]
    bff = slab_ref[2:3, 0:E]
    g2 = slab_ref[2:3, E:2 * E]
    b2 = slab_ref[2:3, 2 * E:3 * E]

    # Row-wise weight matmuls on the flattened (TB*S, E) view -> M fills the MXU.
    xn2 = xn.reshape(TB * S, E)
    qkv = _bf16_dot(xn2, wqkv_ref[...]) + bqkv                 # (TB*S, 3E)
    q = qkv[:, 0:E].reshape(TB, S, E)
    k = qkv[:, E:2 * E].reshape(TB, S, E)
    v = qkv[:, 2 * E:3 * E].reshape(TB, S, E)

    # nn.MultiheadAttention(num_heads=1): scores, softmax, weighted values.
    s = _bdot_qkt(q, k) * (float(E) ** -0.5)                   # (TB, S, S)
    s = s - jnp.max(s, axis=-1, keepdims=True)
    p = jnp.exp(s)
    p = p / jnp.sum(p, axis=-1, keepdims=True)                 # exact divide
    # TODO(synk): attention-weight / residual dropout omitted (eval-mode forward).
    a = _bdot_pv(p, v)                                         # (TB, S, E)

    attn = _bf16_dot(a.reshape(TB * S, E), wo_ref[...]) + bo   # out projection
    h1 = _layer_norm(xn2 + attn, g1, b1)                       # residual + LN1
    ff = _bf16_dot(h1, wff_ref[...]) + bff                     # feed-forward
    h2 = _layer_norm(h1 + ff, g2, b2)                          # residual + LN2
    o_ref[...] = h2.reshape(TB, S, E).astype(o_ref.dtype)


def _pack_slab(params, E):
    slab = jnp.zeros((3, 3 * E), jnp.float32)
    slab = slab.at[0, :].set(params["bqkv"][0])
    slab = slab.at[1, 0:E].set(params["bo"][0])
    slab = slab.at[1, E:2 * E].set(params["g1"][0])
    slab = slab.at[1, 2 * E:].set(params["b1"][0])
    slab = slab.at[2, 0:E].set(params["bff"][0])
    slab = slab.at[2, E:2 * E].set(params["g2"][0])
    slab = slab.at[2, 2 * E:].set(params["b2"][0])
    return slab


def sarf_forward(x, params, tb=32):
    """x: (B, S, E) — B independent support sets, one SARF forward each."""
    B, S, E = x.shape
    # Cap TB so the "parallel" batch grid has >= 2 steps (v7x has 2 TensorCores).
    tb = max(1, min(tb, B // 2 if B >= 2 else 1))
    n_blocks = pl.cdiv(B, tb)
    Bp = n_blocks * tb
    if Bp != B:
        # Pad batch by replicating the first sequence; padded rows are dropped.
        x = jnp.concatenate([x, jnp.broadcast_to(x[:1], (Bp - B, S, E))], axis=0)

    slab = _pack_slab(params, E)
    wqkv, wo, wff = params["wqkv"], params["wo"], params["wff"]

    def resident(a):
        return pl.BlockSpec(a.shape, lambda b, _n=a.ndim: (0,) * _n)

    out = pl.pallas_call(
        sarf_kernel,
        out_shape=jax.ShapeDtypeStruct((Bp, S, E), x.dtype),
        grid=(n_blocks,),
        in_specs=[pl.BlockSpec((tb, S, E), lambda b: (b, 0, 0)),
                  resident(wqkv), resident(wo), resident(wff), resident(slab)],
        out_specs=pl.BlockSpec((tb, S, E), lambda b: (b, 0, 0)),
        compiler_params=pltpu.CompilerParams(
            dimension_semantics=("parallel",)),
    )(x, wqkv, wo, wff, slab)
    return out[:B]


def sarf_reference(x, params):
    """Pure-JAX reference with math matched to the kernel (bf16 MXU operands)."""
    B, S, E = x.shape
    xf = x.astype(jnp.float32)
    mn = jnp.min(xf, axis=(1, 2), keepdims=True)
    mx = jnp.max(xf, axis=(1, 2), keepdims=True)
    xn = (xf - mn) / (mx - mn)
    xn2 = xn.reshape(B * S, E)
    qkv = _bf16_dot(xn2, params["wqkv"]) + params["bqkv"]
    q = qkv[:, 0:E].reshape(B, S, E)
    k = qkv[:, E:2 * E].reshape(B, S, E)
    v = qkv[:, 2 * E:3 * E].reshape(B, S, E)
    s = _bdot_qkt(q, k) * (float(E) ** -0.5)
    s = s - jnp.max(s, axis=-1, keepdims=True)
    p = jnp.exp(s)
    p = p / jnp.sum(p, axis=-1, keepdims=True)
    a = _bdot_pv(p, v)
    attn = _bf16_dot(a.reshape(B * S, E), params["wo"]) + params["bo"]
    h1 = _layer_norm(xn2 + attn, params["g1"], params["b1"])
    ff = _bf16_dot(h1, params["wff"]) + params["bff"]
    h2 = _layer_norm(h1 + ff, params["g2"], params["b2"])
    return h2.reshape(B, S, E).astype(x.dtype)


def init_params(key, E):
    # Shapes follow nn.MultiheadAttention / nn.Linear:
    #   in_proj_weight (3E, E), in_proj_bias = 0, out_proj (E, E) with bias = 0,
    #   feedforward Linear weight = ones, bias = zeros (per init_weights),
    #   LayerNorm gamma = ones, beta = zeros.
    # Weights are pre-transposed (y = x @ W == x @ W_pt.T), Q|K|V packed into a
    # single (E, 3E) matrix, and MXU operands pre-cast to bf16.
    k1, k2 = jax.random.split(key)
    in_proj_w = jax.random.normal(k1, (3 * E, E), jnp.float32) / jnp.sqrt(E)
    out_proj_w = jax.random.normal(k2, (E, E), jnp.float32) / jnp.sqrt(E)
    wqkv = jnp.concatenate(
        [in_proj_w[0:E].T, in_proj_w[E:2 * E].T, in_proj_w[2 * E:].T], axis=1)
    zeros_row = jnp.zeros((1, E), jnp.float32)
    ones_row = jnp.ones((1, E), jnp.float32)
    return dict(
        wqkv=wqkv.astype(jnp.bfloat16),
        bqkv=jnp.zeros((1, 3 * E), jnp.float32),
        wo=out_proj_w.T.astype(jnp.bfloat16),
        bo=zeros_row,
        wff=jnp.ones((E, E), jnp.bfloat16),
        bff=zeros_row,
        g1=ones_row, b1=zeros_row,
        g2=ones_row, b2=zeros_row,
    )


if __name__ == "__main__":
    key = jax.random.PRNGKey(0)
    kx, kp = jax.random.split(key)
    # 64 independent support sets of 8 tokens, embedding 128:
    # TB=32 -> (TB*S, E) = (256, 128) weight-matmul tiles, grid = (2,).
    B, S, E = 64, 8, 128
    x = jax.random.normal(kx, (B, S, E), jnp.float32)
    params = init_params(kp, E)

    out = jax.block_until_ready(sarf_forward(x, params, tb=32))
    ref = sarf_reference(x, params)
    assert out.shape == (B, S, E)
    # Kernel and reference use identical math (bf16 operands, f32 accumulation,
    # exact divides); remaining differences are reduction-order / transcendental
    # implementation level (~1e-4), so 1e-2 is a comfortable but meaningful bound.
    assert jnp.allclose(out, ref, atol=1e-2, rtol=1e-2), "Pallas kernel mismatch vs reference"

    # bf16 activation I/O path (halves HBM traffic); same kernel, output dtype
    # follows input dtype, internal math stays f32.
    out_bf16 = jax.block_until_ready(sarf_forward(x.astype(jnp.bfloat16), params, tb=32))
    assert out_bf16.shape == (B, S, E) and out_bf16.dtype == jnp.bfloat16

    print("KERNEL_OK")
</pallas_src>

<mosaic_0001>
module attributes {stable_mosaic.version = 11 : i64} {
  func.func @sarf_kernel(%arg0: i32, %arg1: memref<32x8x128xf32, #tpu.memory_space<vmem>>, %arg2: memref<128x384xbf16, #tpu.memory_space<vmem>>, %arg3: memref<128x128xbf16, #tpu.memory_space<vmem>>, %arg4: memref<128x128xbf16, #tpu.memory_space<vmem>>, %arg5: memref<3x384xf32, #tpu.memory_space<vmem>>, %arg6: memref<32x8x128xf32, #tpu.memory_space<vmem>>) attributes {dimension_semantics = [#tpu.dimension_semantics<parallel>], iteration_bounds = array<i64: 2>, scalar_prefetch = 0 : i64, scratch_operands = 0 : i64, tpu.core_type = #tpu.core_type<tc>, window_params = [{transform_indices = @transform_0, window_bounds = array<i64: 32, 8, 128>}, {pipeline_mode = #tpu.pipeline_mode<synchronous>, transform_indices = @transform_1, window_bounds = array<i64: 128, 384>}, {pipeline_mode = #tpu.pipeline_mode<synchronous>, transform_indices = @transform_2, window_bounds = array<i64: 128, 128>}, {pipeline_mode = #tpu.pipeline_mode<synchronous>, transform_indices = @transform_3, window_bounds = array<i64: 128, 128>}, {pipeline_mode = #tpu.pipeline_mode<synchronous>, transform_indices = @transform_4, window_bounds = array<i64: 3, 384>}, {transform_indices = @transform_5, window_bounds = array<i64: 32, 8, 128>}]} {
    %c0 = arith.constant 0 : index
    %c0_0 = arith.constant 0 : index
    %c0_1 = arith.constant 0 : index
    %0 = vector.load %arg1[%c0, %c0_0, %c0_1] : memref<32x8x128xf32, #tpu.memory_space<vmem>>, vector<32x8x128xf32>
    %cst = arith.constant dense<0x7F800000> : vector<32x8xf32>
    %1 = vector.multi_reduction <minimumf>, %0, %cst [2] : vector<32x8x128xf32> to vector<32x8xf32>
    %2 = vector.shape_cast %1 : vector<32x8xf32> to vector<32x8x1xf32>
    %cst_2 = arith.constant dense<0x7F800000> : vector<32x1xf32>
    %3 = vector.multi_reduction <minimumf>, %2, %cst_2 [1] : vector<32x8x1xf32> to vector<32x1xf32>
    %4 = vector.shape_cast %3 : vector<32x1xf32> to vector<32x1x1xf32>
    %cst_3 = arith.constant dense<0xFF800000> : vector<32x8xf32>
    %5 = vector.multi_reduction <maximumf>, %0, %cst_3 [2] : vector<32x8x128xf32> to vector<32x8xf32>
    %6 = vector.shape_cast %5 : vector<32x8xf32> to vector<32x8x1xf32>
    %cst_4 = arith.constant dense<0xFF800000> : vector<32x1xf32>
    %7 = vector.multi_reduction <maximumf>, %6, %cst_4 [1] : vector<32x8x1xf32> to vector<32x1xf32>
    %8 = vector.shape_cast %7 : vector<32x1xf32> to vector<32x1x1xf32>
    %9 = vector.broadcast %4 : vector<32x1x1xf32> to vector<32x8x128xf32>
    %10 = arith.subf %0, %9 : vector<32x8x128xf32>
    %11 = arith.subf %8, %4 : vector<32x1x1xf32>
    %12 = vector.broadcast %11 : vector<32x1x1xf32> to vector<32x8x128xf32>
    %13 = arith.divf %10, %12 : vector<32x8x128xf32>
    %c0_5 = arith.constant 0 : index
    %c0_6 = arith.constant 0 : index
    %14 = vector.load %arg5[%c0_5, %c0_6] : memref<3x384xf32, #tpu.memory_space<vmem>>, vector<1x384xf32>
    %c1 = arith.constant 1 : index
    %c0_7 = arith.constant 0 : index
    %15 = vector.load %arg5[%c1, %c0_7] : memref<3x384xf32, #tpu.memory_space<vmem>>, vector<1x128xf32>
    %c1_8 = arith.constant 1 : index
    %c128 = arith.constant 128 : index
    %16 = vector.load %arg5[%c1_8, %c128] : memref<3x384xf32, #tpu.memory_space<vmem>>, vector<1x128xf32>
    %c1_9 = arith.constant 1 : index
    %c256 = arith.constant 256 : index
    %17 = vector.load %arg5[%c1_9, %c256] : memref<3x384xf32, #tpu.memory_space<vmem>>, vector<1x128xf32>
    %c2 = arith.constant 2 : index
    %c0_10 = arith.constant 0 : index
    %18 = vector.load %arg5[%c2, %c0_10] : memref<3x384xf32, #tpu.memory_space<vmem>>, vector<1x128xf32>
    %c2_11 = arith.constant 2 : index
    %c128_12 = arith.constant 128 : index
    %19 = vector.load %arg5[%c2_11, %c128_12] : memref<3x384xf32, #tpu.memory_space<vmem>>, vector<1x128xf32>
    %c2_13 = arith.constant 2 : index
    %c256_14 = arith.constant 256 : index
    %20 = vector.load %arg5[%c2_13, %c256_14] : memref<3x384xf32, #tpu.memory_space<vmem>>, vector<1x128xf32>
    %21 = vector.shape_cast %13 : vector<32x8x128xf32> to vector<256x128xf32>
    %c0_15 = arith.constant 0 : index
    %c0_16 = arith.constant 0 : index
    %22 = vector.load %arg2[%c0_15, %c0_16] : memref<128x384xbf16, #tpu.memory_space<vmem>>, vector<128x384xbf16>
    %23 = arith.truncf %21 : vector<256x128xf32> to vector<256x128xbf16>
    %cst_17 = arith.constant dense<0.000000e+00> : vector<256x384xf32>
    %24 = tpu.matmul %23, %22, %cst_17 {dimension_numbers = #tpu.dot_dimension_numbers<[1], [0], [0], [1], [0, 0, 1, 1], [], []>} : vector<256x128xbf16>, vector<128x384xbf16>, vector<256x384xf32> -> vector<256x384xf32>
    %25 = vector.broadcast %14 : vector<1x384xf32> to vector<256x384xf32>
    %26 = arith.addf %24, %25 : vector<256x384xf32>
    %27 = vector.extract_strided_slice %26 {offsets = [0, 0], sizes = [256, 128], strides = [1, 1]} : vector<256x384xf32> to vector<256x128xf32>
    %28 = vector.shape_cast %27 : vector<256x128xf32> to vector<32x8x128xf32>
    %29 = vector.extract_strided_slice %26 {offsets = [0, 128], sizes = [256, 128], strides = [1, 1]} : vector<256x384xf32> to vector<256x128xf32>
    %30 = vector.shape_cast %29 : vector<256x128xf32> to vector<32x8x128xf32>
    %31 = vector.extract_strided_slice %26 {offsets = [0, 256], sizes = [256, 128], strides = [1, 1]} : vector<256x384xf32> to vector<256x128xf32>
    %32 = vector.shape_cast %31 : vector<256x128xf32> to vector<32x8x128xf32>
    %33 = arith.truncf %28 : vector<32x8x128xf32> to vector<32x8x128xbf16>
    %34 = arith.truncf %30 : vector<32x8x128xf32> to vector<32x8x128xbf16>
    %cst_18 = arith.constant dense<0.000000e+00> : vector<32x8x8xf32>
    %35 = tpu.matmul %33, %34, %cst_18 {dimension_numbers = #tpu.dot_dimension_numbers<[2], [2], [1], [1], [0, 0, 0, 1, 1, 1], [0], [0]>} : vector<32x8x128xbf16>, vector<32x8x128xbf16>, vector<32x8x8xf32> -> vector<32x8x8xf32>
    %cst_19 = arith.constant 0.0883883461 : f32
    %36 = vector.broadcast %cst_19 : f32 to vector<32x8x8xf32>
    %37 = arith.mulf %35, %36 : vector<32x8x8xf32>
    %cst_20 = arith.constant dense<0xFF800000> : vector<32x8xf32>
    %38 = vector.multi_reduction <maximumf>, %37, %cst_20 [2] : vector<32x8x8xf32> to vector<32x8xf32>
    %39 = vector.shape_cast %38 : vector<32x8xf32> to vector<32x8x1xf32>
    %40 = vector.broadcast %39 : vector<32x8x1xf32> to vector<32x8x8xf32>
    %41 = arith.subf %37, %40 : vector<32x8x8xf32>
    %42 = math.exp %41 : vector<32x8x8xf32>
    %cst_21 = arith.constant dense<0.000000e+00> : vector<32x8xf32>
    %43 = vector.multi_reduction <add>, %42, %cst_21 [2] : vector<32x8x8xf32> to vector<32x8xf32>
    %44 = vector.shape_cast %43 : vector<32x8xf32> to vector<32x8x1xf32>
    %45 = vector.broadcast %44 : vector<32x8x1xf32> to vector<32x8x8xf32>
    %46 = arith.divf %42, %45 : vector<32x8x8xf32>
    %47 = arith.truncf %46 : vector<32x8x8xf32> to vector<32x8x8xbf16>
    %48 = arith.truncf %32 : vector<32x8x128xf32> to vector<32x8x128xbf16>
    %cst_22 = arith.constant dense<0.000000e+00> : vector<32x8x128xf32>
    %49 = tpu.matmul %47, %48, %cst_22 {dimension_numbers = #tpu.dot_dimension_numbers<[2], [1], [1], [2], [0, 0, 0, 1, 1, 2], [0], [0]>} : vector<32x8x8xbf16>, vector<32x8x128xbf16>, vector<32x8x128xf32> -> vector<32x8x128xf32>
    %50 = vector.shape_cast %49 : vector<32x8x128xf32> to vector<256x128xf32>
    %c0_23 = arith.constant 0 : index
    %c0_24 = arith.constant 0 : index
    %51 = vector.load %arg3[%c0_23, %c0_24] : memref<128x128xbf16, #tpu.memory_space<vmem>>, vector<128x128xbf16>
    %52 = arith.truncf %50 : vector<256x128xf32> to vector<256x128xbf16>
    %cst_25 = arith.constant dense<0.000000e+00> : vector<256x128xf32>
    %53 = tpu.matmul %52, %51, %cst_25 {dimension_numbers = #tpu.dot_dimension_numbers<[1], [0], [0], [1], [0, 0, 1, 1], [], []>} : vector<256x128xbf16>, vector<128x128xbf16>, vector<256x128xf32> -> vector<256x128xf32>
    %54 = vector.broadcast %15 : vector<1x128xf32> to vector<256x128xf32>
    %55 = arith.addf %53, %54 : vector<256x128xf32>
    %56 = arith.addf %21, %55 : vector<256x128xf32>
    %cst_26 = arith.constant dense<0.000000e+00> : vector<256xf32>
    %57 = vector.multi_reduction <add>, %56, %cst_26 [1] : vector<256x128xf32> to vector<256xf32>
    %58 = vector.shape_cast %57 : vector<256xf32> to vector<256x1xf32>
    %cst_27 = arith.constant 1.280000e+02 : f32
    %59 = vector.broadcast %cst_27 : f32 to vector<256x1xf32>
    %60 = arith.divf %58, %59 : vector<256x1xf32>
    %61 = vector.broadcast %60 : vector<256x1xf32> to vector<256x128xf32>
    %62 = arith.subf %56, %61 : vector<256x128xf32>
    %63 = arith.mulf %62, %62 : vector<256x128xf32>
    %cst_28 = arith.constant dense<0.000000e+00> : vector<256xf32>
    %64 = vector.multi_reduction <add>, %63, %cst_28 [1] : vector<256x128xf32> to vector<256xf32>
    %65 = vector.shape_cast %64 : vector<256xf32> to vector<256x1xf32>
    %cst_29 = arith.constant 1.280000e+02 : f32
    %66 = vector.broadcast %cst_29 : f32 to vector<256x1xf32>
    %67 = arith.divf %65, %66 : vector<256x1xf32>
    %68 = vector.broadcast %60 : vector<256x1xf32> to vector<256x128xf32>
    %69 = arith.subf %56, %68 : vector<256x128xf32>
    %cst_30 = arith.constant 9.99999974E-6 : f32
    %70 = vector.broadcast %cst_30 : f32 to vector<256x1xf32>
    %71 = arith.addf %67, %70 : vector<256x1xf32>
    %72 = math.rsqrt %71 : vector<256x1xf32>
    %73 = vector.broadcast %72 : vector<256x1xf32> to vector<256x128xf32>
    %74 = arith.mulf %69, %73 : vector<256x128xf32>
    %75 = vector.broadcast %16 : vector<1x128xf32> to vector<256x128xf32>
    %76 = arith.mulf %74, %75 : vector<256x128xf32>
    %77 = vector.broadcast %17 : vector<1x128xf32> to vector<256x128xf32>
    %78 = arith.addf %76, %77 : vector<256x128xf32>
    %c0_31 = arith.constant 0 : index
    %c0_32 = arith.constant 0 : index
    %79 = vector.load %arg4[%c0_31, %c0_32] : memref<128x128xbf16, #tpu.memory_space<vmem>>, vector<128x128xbf16>
    %80 = arith.truncf %78 : vector<256x128xf32> to vector<256x128xbf16>
    %cst_33 = arith.constant dense<0.000000e+00> : vector<256x128xf32>
    %81 = tpu.matmul %80, %79, %cst_33 {dimension_numbers = #tpu.dot_dimension_numbers<[1], [0], [0], [1], [0, 0, 1, 1], [], []>} : vector<256x128xbf16>, vector<128x128xbf16>, vector<256x128xf32> -> vector<256x128xf32>
    %82 = vector.broadcast %18 : vector<1x128xf32> to vector<256x128xf32>
    %83 = arith.addf %81, %82 : vector<256x128xf32>
    %84 = arith.addf %78, %83 : vector<256x128xf32>
    %cst_34 = arith.constant dense<0.000000e+00> : vector<256xf32>
    %85 = vector.multi_reduction <add>, %84, %cst_34 [1] : vector<256x128xf32> to vector<256xf32>
    %86 = vector.shape_cast %85 : vector<256xf32> to vector<256x1xf32>
    %cst_35 = arith.constant 1.280000e+02 : f32
    %87 = vector.broadcast %cst_35 : f32 to vector<256x1xf32>
    %88 = arith.divf %86, %87 : vector<256x1xf32>
    %89 = vector.broadcast %88 : vector<256x1xf32> to vector<256x128xf32>
    %90 = arith.subf %84, %89 : vector<256x128xf32>
    %91 = arith.mulf %90, %90 : vector<256x128xf32>
    %cst_36 = arith.constant dense<0.000000e+00> : vector<256xf32>
    %92 = vector.multi_reduction <add>, %91, %cst_36 [1] : vector<256x128xf32> to vector<256xf32>
    %93 = vector.shape_cast %92 : vector<256xf32> to vector<256x1xf32>
    %cst_37 = arith.constant 1.280000e+02 : f32
    %94 = vector.broadcast %cst_37 : f32 to vector<256x1xf32>
    %95 = arith.divf %93, %94 : vector<256x1xf32>
    %96 = vector.broadcast %88 : vector<256x1xf32> to vector<256x128xf32>
    %97 = arith.subf %84, %96 : vector<256x128xf32>
    %cst_38 = arith.constant 9.99999974E-6 : f32
    %98 = vector.broadcast %cst_38 : f32 to vector<256x1xf32>
    %99 = arith.addf %95, %98 : vector<256x1xf32>
    %100 = math.rsqrt %99 : vector<256x1xf32>
    %101 = vector.broadcast %100 : vector<256x1xf32> to vector<256x128xf32>
    %102 = arith.mulf %97, %101 : vector<256x128xf32>
    %103 = vector.broadcast %19 : vector<1x128xf32> to vector<256x128xf32>
    %104 = arith.mulf %102, %103 : vector<256x128xf32>
    %105 = vector.broadcast %20 : vector<1x128xf32> to vector<256x128xf32>
    %106 = arith.addf %104, %105 : vector<256x128xf32>
    %107 = vector.shape_cast %106 : vector<256x128xf32> to vector<32x8x128xf32>
    %c0_39 = arith.constant 0 : index
    %c0_40 = arith.constant 0 : index
    %c0_41 = arith.constant 0 : index
    %108 = vector.load %arg6[%c0_39, %c0_40, %c0_41] : memref<32x8x128xf32, #tpu.memory_space<vmem>>, vector<32x8x128xf32>
    tpu.vector_store %arg6[%c0_39, %c0_40, %c0_41], %107 {strides = array<i32>} : memref<32x8x128xf32, #tpu.memory_space<vmem>>, vector<32x8x128xf32>,
    return
  }
  func.func @transform_0(%arg0: i32) -> (i32, i32, i32) {
    %c0_i32 = arith.constant 0 : i32
    %c0_i32_0 = arith.constant 0 : i32
    %c0_i32_1 = arith.constant 0 : i32
    return %arg0, %c0_i32, %c0_i32_0 : i32, i32, i32
  }
  func.func @transform_1(%arg0: i32) -> (i32, i32) {
    %c0_i32 = arith.constant 0 : i32
    %c0_i32_0 = arith.constant 0 : i32
    %c0_i32_1 = arith.constant 0 : i32
    return %c0_i32, %c0_i32_0 : i32, i32
  }
  func.func @transform_2(%arg0: i32) -> (i32, i32) {
    %c0_i32 = arith.constant 0 : i32
    %c0_i32_0 = arith.constant 0 : i32
    %c0_i32_1 = arith.constant 0 : i32
    return %c0_i32, %c0_i32_0 : i32, i32
  }
  func.func @transform_3(%arg0: i32) -> (i32, i32) {
    %c0_i32 = arith.constant 0 : i32
    %c0_i32_0 = arith.constant 0 : i32
    %c0_i32_1 = arith.constant 0 : i32
    return %c0_i32, %c0_i32_0 : i32, i32
  }
  func.func @transform_4(%arg0: i32) -> (i32, i32) {
    %c0_i32 = arith.constant 0 : i32
    %c0_i32_0 = arith.constant 0 : i32
    %c0_i32_1 = arith.constant 0 : i32
    return %c0_i32, %c0_i32_0 : i32, i32
  }
  func.func @transform_5(%arg0: i32) -> (i32, i32, i32) {
    %c0_i32 = arith.constant 0 : i32
    %c0_i32_0 = arith.constant 0 : i32
    %c0_i32_1 = arith.constant 0 : i32
    return %arg0, %c0_i32, %c0_i32_0 : i32, i32, i32
  }
}

</mosaic_0001>

<llo_original>
// kernel: tpu_custom_call.1
$region0: #{tpu_custom_call.1}
  #allocation0 [shape = 'u32[]', space=smem, size = 0x4, offset = 0x4, fixed_abs, tag = 'smem constant byte address 0x4 - core index']
  #allocation1 [shape = 'u32[144,128]{1,0:T(1,128)}', space=vmem, size = 0x12000, scoped, tag = 'internal scratch']
  %s0 = inlined_call_operand.hbm [shape: f32[64,8,128], index: 0, kind: input, shape index: {}]
  %s1 = inlined_call_operand.hbm [shape: bf16[128,384], index: 1, kind: input, shape index: {}]
  %s2 = inlined_call_operand.hbm [shape: bf16[128,128], index: 2, kind: input, shape index: {}]
  %s3 = inlined_call_operand.hbm [shape: bf16[128,128], index: 3, kind: input, shape index: {}]
  %s4 = inlined_call_operand.vmem [shape: f32[3,384], index: 4, kind: input, shape index: {}]
  %s5 = inlined_call_operand.hbm [shape: f32[64,8,128], index: 5, kind: output, shape index: {}]
  %s6 = sld [smem:[#allocation0]]
  $region69: #{tpu_custom_call.1} parent=0
    _
  %s8 = ssub.s32 1, %s6
  %s9 = scalar_select 0, %s8, %s6
  $region1: #{tpu_custom_call.1} parent=0
    #allocation2 [shape = 'u8[262144]{0}', space=vmem, size = 0x40000, scoped, tag = 'input window, operand 0']
    #allocation3 [shape = 's32[2]{0}', space=sflag, size = 0x8, scoped, tag = 'scoped memory for tpu_custom_call.1']
    #allocation4 [shape = 's32[2]{0}', space=sflag, size = 0x8, scoped, tag = 'scoped memory for tpu_custom_call.1']
    #allocation5 [shape = 'u8[98304]{0}', space=vmem, size = 0x18000, scoped, tag = 'input window, operand 1, single buffered']
    #allocation6 [shape = 's32[1]{0}', space=sflag, size = 0x4, scoped, tag = 'scoped memory for tpu_custom_call.1']
    #allocation7 [shape = 'u8[32768]{0}', space=vmem, size = 0x8000, scoped, tag = 'input window, operand 2, single buffered']
    #allocation8 [shape = 'u8[32768]{0}', space=vmem, size = 0x8000, scoped, tag = 'input window, operand 3, single buffered']
    #allocation9 [shape = 's32[1]{0}', space=sflag, size = 0x4, scoped, tag = 'scoped memory for tpu_custom_call.1']
    #allocation10 [shape = 'u8[262144]{0}', space=vmem, size = 0x40000, scoped, tag = 'output window, operand 0']
    %10 = vsyncpa [#allocation3], 0
    %s11 = scalar_lea.sflag [#allocation3], 1
    %12 = vsyncpa %s11, 0
    %13 = vsyncpa [#allocation6], 0
    %14 = vsyncpa [#allocation9], 0
    %15 = vsyncpa [#allocation4], 0
    %s16 = scalar_lea.sflag [#allocation4], 1
    %17 = vsyncpa %s16, 0
    loop: start=0, step=1, limit=4
    $region2: #{tpu_custom_call.1} parent=1 // loop_pre_header
      _
    $region3: #{tpu_custom_call.1} parent=1 // loop_header
      %s19 = sphi 0, %s23
      %p20 = scmp.ge.s32.totalorder %s19, 4
      %s29 = sphi 0, %s31
      %s32 = sphi 0, %s29
      %s33 = sphi 0, %s32
      %s49 = sphi 0, %s33
      %s53 = sphi 0, %s53
      %s55 = sphi 0, %s53
      %s56 = sphi 0, %s55
      %s70 = sphi 0, %s56
      %s74 = sphi 0, %s74
      %s76 = sphi 0, %s74
      %s77 = sphi 0, %s76
      %s91 = sphi 0, %s77
      %s95 = sphi 0, %s95
      %s97 = sphi 0, %s95
      %s98 = sphi 0, %s97
      %s112 = sphi 0, %s98
      %s116 = sphi 0, %s116
      %s118 = sphi 0, %s116
      %s119 = sphi 0, %s118
      %s133 = sphi 0, %s119
      %s139 = sphi 0, %s141
      %s142 = sphi 0, %s139
      %s143 = sphi 0, %s142
      %s159 = sphi 0, %s143
    $region4: #{tpu_custom_call.1} parent=1 // loop_header_branch
      %22 = sbr.rel (%p20) target = $region8
    $region5: #{tpu_custom_call.1} parent=1 // loop_body
      %s24 = ssub.s32 %s19, 1
      %s25 = ssub.s32 %s19, 2
      %s26 = sadd.s32 %s19, 1
      %s27 = ssub.s32 %s19, %s26
      %p28 = scmp.eq.s32.totalorder %s27, 0
      %s30 = sadd.s32 %s29, 1
      %s31 = scalar_select %p28, %s29, %s30
      %p34 = pneg %p28
      %p35 = scmp.eq.s32.totalorder %s19, 1
      %p36 = por %p34, %p35
      %p37 = scmp.ne.s32.totalorder %s29, %s32
      %p38 = scmp.eq.s32.totalorder %s19, 0
      %p39 = por %p37, %p38
      %p40 = scmp.ne.s32.totalorder %s29, %s32
      %p41 = scmp.eq.s32.totalorder %s24, 1
      %p42 = por %p40, %p41
      %p43 = scmp.ne.s32.totalorder %s32, %s33
      %p44 = scmp.eq.s32.totalorder %s24, 0
      %p45 = por %p43, %p44
      %p46 = scmp.ne.s32.totalorder %s32, %s33
      %p47 = scmp.eq.s32.totalorder %s25, 1
      %p48 = por %p46, %p47
      %p50 = scmp.ne.s32.totalorder %s33, %s49
      %p51 = scmp.eq.s32.totalorder %s25, 0
      %p52 = por %p50, %p51
      %s54 = sadd.s32 %s53, 1
      %p57 = scmp.eq.s32.totalorder %s19, 1
      %p58 = scmp.ne.s32.totalorder %s53, %s55
      %p59 = scmp.eq.s32.totalorder %s19, 0
      %p60 = por %p58, %p59
      %p61 = scmp.ne.s32.totalorder %s53, %s55
      %p62 = scmp.eq.s32.totalorder %s24, 1
      %p63 = por %p61, %p62
      %p64 = scmp.ne.s32.totalorder %s55, %s56
      %p65 = scmp.eq.s32.totalorder %s24, 0
      %p66 = por %p64, %p65
      %p67 = scmp.ne.s32.totalorder %s55, %s56
      %p68 = scmp.eq.s32.totalorder %s25, 1
      %p69 = por %p67, %p68
      %p71 = scmp.ne.s32.totalorder %s56, %s70
      %p72 = scmp.eq.s32.totalorder %s25, 0
      %p73 = por %p71, %p72
      %s75 = sadd.s32 %s74, 1
      %p78 = scmp.eq.s32.totalorder %s19, 1
      %p79 = scmp.ne.s32.totalorder %s74, %s76
      %p80 = scmp.eq.s32.totalorder %s19, 0
      %p81 = por %p79, %p80
      %p82 = scmp.ne.s32.totalorder %s74, %s76
      %p83 = scmp.eq.s32.totalorder %s24, 1
      %p84 = por %p82, %p83
      %p85 = scmp.ne.s32.totalorder %s76, %s77
      %p86 = scmp.eq.s32.totalorder %s24, 0
      %p87 = por %p85, %p86
      %p88 = scmp.ne.s32.totalorder %s76, %s77
      %p89 = scmp.eq.s32.totalorder %s25, 1
      %p90 = por %p88, %p89
      %p92 = scmp.ne.s32.totalorder %s77, %s91
      %p93 = scmp.eq.s32.totalorder %s25, 0
      %p94 = por %p92, %p93
      %s96 = sadd.s32 %s95, 1
      %p99 = scmp.eq.s32.totalorder %s19, 1
      %p100 = scmp.ne.s32.totalorder %s95, %s97
      %p101 = scmp.eq.s32.totalorder %s19, 0
      %p102 = por %p100, %p101
      %p103 = scmp.ne.s32.totalorder %s95, %s97
      %p104 = scmp.eq.s32.totalorder %s24, 1
      %p105 = por %p103, %p104
      %p106 = scmp.ne.s32.totalorder %s97, %s98
      %p107 = scmp.eq.s32.totalorder %s24, 0
      %p108 = por %p106, %p107
      %p109 = scmp.ne.s32.totalorder %s97, %s98
      %p110 = scmp.eq.s32.totalorder %s25, 1
      %p111 = por %p109, %p110
      %p113 = scmp.ne.s32.totalorder %s98, %s112
      %p114 = scmp.eq.s32.totalorder %s25, 0
      %p115 = por %p113, %p114
      %s117 = sadd.s32 %s116, 1
      %p120 = scmp.eq.s32.totalorder %s19, 1
      %p121 = scmp.ne.s32.totalorder %s116, %s118
      %p122 = scmp.eq.s32.totalorder %s19, 0
      %p123 = por %p121, %p122
      %p124 = scmp.ne.s32.totalorder %s116, %s118
      %p125 = scmp.eq.s32.totalorder %s24, 1
      %p126 = por %p124, %p125
      %p127 = scmp.ne.s32.totalorder %s118, %s119
      %p128 = scmp.eq.s32.totalorder %s24, 0
      %p129 = por %p127, %p128
      %p130 = scmp.ne.s32.totalorder %s118, %s119
      %p131 = scmp.eq.s32.totalorder %s25, 1
      %p132 = por %p130, %p131
      %p134 = scmp.ne.s32.totalorder %s119, %s133
      %p135 = scmp.eq.s32.totalorder %s25, 0
      %p136 = por %p134, %p135
      %s137 = ssub.s32 %s19, %s26
      %p138 = scmp.eq.s32.totalorder %s137, 0
      %s140 = sadd.s32 %s139, 1
      %s141 = scalar_select %p138, %s139, %s140
      %p144 = pneg %p138
      %p145 = scmp.eq.s32.totalorder %s19, 1
      %p146 = por %p144, %p145
      %p147 = scmp.ne.s32.totalorder %s139, %s142
      %p148 = scmp.eq.s32.totalorder %s19, 0
      %p149 = por %p147, %p148
      %p150 = scmp.ne.s32.totalorder %s139, %s142
      %p151 = scmp.eq.s32.totalorder %s24, 1
      %p152 = por %p150, %p151
      %p153 = scmp.ne.s32.totalorder %s142, %s143
      %p154 = scmp.eq.s32.totalorder %s24, 0
      %p155 = por %p153, %p154
      %p156 = scmp.ne.s32.totalorder %s142, %s143
      %p157 = scmp.eq.s32.totalorder %s25, 1
      %p158 = por %p156, %p157
      %p160 = scmp.ne.s32.totalorder %s143, %s159
      %p161 = scmp.eq.s32.totalorder %s25, 0
      %p162 = por %p160, %p161
      %p163 = scmp.le.s32.totalorder 1, %s19
      %p164 = scmp.lt.s32.totalorder %s19, 3
      %p165 = pnand %p163, %p164
      %p166 = pneg %p165
      // Predicated region
      $region9: #{tpu_custom_call.1} parent=5 // pred_check
        _
      $region10: #{tpu_custom_call.1} parent=5 // pred_check_branch
        %168 = sbr.rel (%p165) target = $region12
      $region11: #{tpu_custom_call.1} parent=5 // pred_region
        %s169 = ssub.s32 %s19, 1
        // Predicated region
        $region13: #{tpu_custom_call.1} parent=11 // pred_check
          %p170 = pneg %p66
        $region14: #{tpu_custom_call.1} parent=11 // pred_check_branch
          %172 = sbr.rel (%p170) target = $region16
        $region15: #{tpu_custom_call.1} parent=11 // pred_region
          %s174 = ssub.s32 3072, 3072
          %175 = vsyncadd [#allocation6], %s174
          %s176 = sshll.u32 [#allocation5], 4
          %s177 = int_to_ptr.vmem [resolvable:$true] %s176
          %182 = dma.hbm_to_vmem [thread:$0]  %s1, 3072, %s177, [#allocation6], 192, 192, 12
        $region16: #{tpu_custom_call.1} parent=11 // pred_fallthru
          _
        // Predicated region
        $region17: #{tpu_custom_call.1} parent=11 // pred_check
          %p183 = pneg %p87
        $region18: #{tpu_custom_call.1} parent=11 // pred_check_branch
          %185 = sbr.rel (%p183) target = $region20
        $region19: #{tpu_custom_call.1} parent=11 // pred_region
          %s187 = ssub.s32 1024, 1024
          %188 = vsyncadd [#allocation6], %s187
          %s189 = sshll.u32 [#allocation7], 4
          %s190 = int_to_ptr.vmem [resolvable:$true] %s189
          %195 = dma.hbm_to_vmem [thread:$0]  %s2, 1024, %s190, [#allocation6], 64, 64, 4
        $region20: #{tpu_custom_call.1} parent=11 // pred_fallthru
          _
        // Predicated region
        $region21: #{tpu_custom_call.1} parent=11 // pred_check
          %p196 = pneg %p108
        $region22: #{tpu_custom_call.1} parent=11 // pred_check_branch
          %198 = sbr.rel (%p196) target = $region24
        $region23: #{tpu_custom_call.1} parent=11 // pred_region
          %s200 = ssub.s32 1024, 1024
          %201 = vsyncadd [#allocation9], %s200
          %s202 = sshll.u32 [#allocation8], 4
          %s203 = int_to_ptr.vmem [resolvable:$true] %s202
          %208 = dma.hbm_to_vmem [thread:$0]  %s3, 1024, %s203, [#allocation9], 64, 64, 4
        $region24: #{tpu_custom_call.1} parent=11 // pred_fallthru
          _
        // Predicated region
        $region25: #{tpu_custom_call.1} parent=11 // pred_check
          %p209 = pneg %p129
        $region26: #{tpu_custom_call.1} parent=11 // pred_check_branch
          %211 = sbr.rel (%p209) target = $region28
        $region27: #{tpu_custom_call.1} parent=11 // pred_region
          _
        $region28: #{tpu_custom_call.1} parent=11 // pred_fallthru
          _
      $region12: #{tpu_custom_call.1} parent=5 // pred_fallthru
        _
      %p212 = scmp.lt.s32.totalorder %s19, 2
      // Predicated region
      $region29: #{tpu_custom_call.1} parent=5 // pred_check
        %p213 = pneg %p212
      $region30: #{tpu_custom_call.1} parent=5 // pred_check_branch
        %215 = sbr.rel (%p213) target = $region32
      $region31: #{tpu_custom_call.1} parent=5 // pred_region
        // Predicated region
        $region33: #{tpu_custom_call.1} parent=31 // pred_check
          %p216 = pneg %p39
        $region34: #{tpu_custom_call.1} parent=31 // pred_check_branch
          %218 = sbr.rel (%p216) target = $region36
        $region35: #{tpu_custom_call.1} parent=31 // pred_region
          %s219 = sand.u32 %s29, 1
          %s220 = scalar_lea.sflag [#allocation3], %s219
          %s221 = sand.u32 %s29, 1
          %s222 = smul.addr %s221, 256
          %s223 = scalar_lea.vmem [#allocation2], %s222
          %s224 = smul.u32 32, %s19
          %s226 = ssub.s32 4096, 4096
          %227 = vsyncadd %s220, %s226
          %s228 = smul.addr %s224, 128
          %s229 = scalar_lea.hbm %s0, %s228
          %s230 = sshll.u32 %s223, 4
          %s231 = int_to_ptr.vmem [resolvable:$true] %s230
          %236 = dma.hbm_to_vmem [thread:$0]  %s229, 4096, %s231, %s220, 128, 128, 8
        $region36: #{tpu_custom_call.1} parent=31 // pred_fallthru
          _
      $region32: #{tpu_custom_call.1} parent=5 // pred_fallthru
        _
      %p237 = scmp.le.s32.totalorder 1, %s19
      %p238 = scmp.lt.s32.totalorder %s19, 3
      %p239 = pnand %p237, %p238
      %p240 = pneg %p239
      // Predicated region
      $region37: #{tpu_custom_call.1} parent=5 // pred_check
        _
      $region38: #{tpu_custom_call.1} parent=5 // pred_check_branch
        %242 = sbr.rel (%p239) target = $region40
      $region39: #{tpu_custom_call.1} parent=5 // pred_region
        %s243 = ssub.s32 %s19, 1
        %s244 = sand.u32 %s32, 1
        %s245 = scalar_lea.sflag [#allocation3], %s244
        %s246 = sand.u32 %s32, 1
        %s247 = smul.addr %s246, 256
        %s248 = scalar_lea.vmem [#allocation2], %s247
        // Predicated region
        $region41: #{tpu_custom_call.1} parent=39 // pred_check
          %p249 = pneg %p45
        $region42: #{tpu_custom_call.1} parent=39 // pred_check_branch
          %251 = sbr.rel (%p249) target = $region44
        $region43: #{tpu_custom_call.1} parent=39 // pred_region
          %252 = dma.done %s245, 4096
        $region44: #{tpu_custom_call.1} parent=39 // pred_fallthru
          _
        // Predicated region
        $region45: #{tpu_custom_call.1} parent=39 // pred_check
          %p253 = pneg %p66
        $region46: #{tpu_custom_call.1} parent=39 // pred_check_branch
          %255 = sbr.rel (%p253) target = $region48
        $region47: #{tpu_custom_call.1} parent=39 // pred_region
          %256 = dma.done [#allocation6], 3072
        $region48: #{tpu_custom_call.1} parent=39 // pred_fallthru
          _
        // Predicated region
        $region49: #{tpu_custom_call.1} parent=39 // pred_check
          %p257 = pneg %p87
        $region50: #{tpu_custom_call.1} parent=39 // pred_check_branch
          %259 = sbr.rel (%p257) target = $region52
        $region51: #{tpu_custom_call.1} parent=39 // pred_region
          %260 = dma.done [#allocation6], 1024
        $region52: #{tpu_custom_call.1} parent=39 // pred_fallthru
          _
        // Predicated region
        $region53: #{tpu_custom_call.1} parent=39 // pred_check
          %p261 = pneg %p108
        $region54: #{tpu_custom_call.1} parent=39 // pred_check_branch
          %263 = sbr.rel (%p261) target = $region56
        $region55: #{tpu_custom_call.1} parent=39 // pred_region
          %264 = dma.done [#allocation9], 1024
        $region56: #{tpu_custom_call.1} parent=39 // pred_fallthru
          _
        %s265 = sand.u32 %s32, 1
        %s266 = scalar_lea.sflag [#allocation3], %s265
        %s267 = sand.u32 %s32, 1
        %s268 = smul.addr %s267, 256
        %s269 = scalar_lea.vmem [#allocation2], %s268
        %p270 = pneg %p45
        %p271 = pneg %p42
        %p272 = pneg %p66
        %p273 = pneg %p63
        %p274 = pneg %p87
        %p275 = pneg %p84
        %p276 = pneg %p108
        %p277 = pneg %p105
        %p278 = pneg %p129
        %p279 = pneg %p126
        %p280 = pneg %p155
        %p281 = pneg %p152
        %s282 = sand.u32 %s142, 1
        %s283 = scalar_lea.sflag [#allocation4], %s282
        %s284 = sand.u32 %s142, 1
        %s285 = smul.addr %s284, 256
        %s286 = scalar_lea.vmem [#allocation10], %s285
        %s287 = smul.u32 32, %s24
        %s288 = smul.u32 32, %s24
        %v290 = vld [vmem:[%s248] sm:$0xff]
        %v291 = vld [vmem:[%s248 + $0x8] sm:$0xff]
        %v292 = vld [vmem:[%s248 + $0x10] sm:$0xff]
        %v293 = vld [vmem:[%s248 + $0x18] sm:$0xff]
        %v294 = vld [vmem:[%s248 + $0x20] sm:$0xff]
        %v295 = vld [vmem:[%s248 + $0x28] sm:$0xff]
        %v296 = vld [vmem:[%s248 + $0x30] sm:$0xff]
        %v297 = vld [vmem:[%s248 + $0x38] sm:$0xff]
        %v298 = vld [vmem:[%s248 + $0x40] sm:$0xff]
        %v299 = vld [vmem:[%s248 + $0x48] sm:$0xff]
        %v300 = vld [vmem:[%s248 + $0x50] sm:$0xff]
        %v301 = vld [vmem:[%s248 + $0x58] sm:$0xff]
        %v302 = vld [vmem:[%s248 + $0x60] sm:$0xff]
        %v303 = vld [vmem:[%s248 + $0x68] sm:$0xff]
        %v304 = vld [vmem:[%s248 + $0x70] sm:$0xff]
        %v305 = vld [vmem:[%s248 + $0x78] sm:$0xff]
        %v306 = vld [vmem:[%s248 + $0x80] sm:$0xff]
        %v307 = vld [vmem:[%s248 + $0x88] sm:$0xff]
        %v308 = vld [vmem:[%s248 + $0x90] sm:$0xff]
        %v309 = vld [vmem:[%s248 + $0x98] sm:$0xff]
        %v310 = vld [vmem:[%s248 + $0xa0] sm:$0xff]
        %v311 = vld [vmem:[%s248 + $0xa8] sm:$0xff]
        %v312 = vld [vmem:[%s248 + $0xb0] sm:$0xff]
        %v313 = vld [vmem:[%s248 + $0xb8] sm:$0xff]
        %v314 = vld [vmem:[%s248 + $0xc0] sm:$0xff]
        %v315 = vld [vmem:[%s248 + $0xc8] sm:$0xff]
        %v316 = vld [vmem:[%s248 + $0xd0] sm:$0xff]
        %v317 = vld [vmem:[%s248 + $0xd8] sm:$0xff]
        %v318 = vld [vmem:[%s248 + $0xe0] sm:$0xff]
        %v319 = vld [vmem:[%s248 + $0xe8] sm:$0xff]
        %v320 = vld [vmem:[%s248 + $0xf0] sm:$0xff]
        %v321 = vld [vmem:[%s248 + $0xf8] sm:$0xff]
        %322 = vmin.xlane.f32.xlu0 %v290
        %v323 = vpop.xlane.xlu0 %322
        %324 = vmin.xlane.f32.xlu0 %v291
        %v325 = vpop.xlane.xlu0 %324
        %326 = vmin.xlane.f32.xlu0 %v292
        %v327 = vpop.xlane.xlu0 %326
        %328 = vmin.xlane.f32.xlu0 %v293
        %v329 = vpop.xlane.xlu0 %328
        %330 = vmin.xlane.f32.xlu0 %v294
        %v331 = vpop.xlane.xlu0 %330
        %332 = vmin.xlane.f32.xlu0 %v295
        %v333 = vpop.xlane.xlu0 %332
        %334 = vmin.xlane.f32.xlu0 %v296
        %v335 = vpop.xlane.xlu0 %334
        %336 = vmin.xlane.f32.xlu0 %v297
        %v337 = vpop.xlane.xlu0 %336
        %338 = vmin.xlane.f32.xlu0 %v298
        %v339 = vpop.xlane.xlu0 %338
        %340 = vmin.xlane.f32.xlu0 %v299
        %v341 = vpop.xlane.xlu0 %340
        %342 = vmin.xlane.f32.xlu0 %v300
        %v343 = vpop.xlane.xlu0 %342
        %344 = vmin.xlane.f32.xlu0 %v301
        %v345 = vpop.xlane.xlu0 %344
        %346 = vmin.xlane.f32.xlu0 %v302
        %v347 = vpop.xlane.xlu0 %346
        %348 = vmin.xlane.f32.xlu0 %v303
        %v349 = vpop.xlane.xlu0 %348
        %350 = vmin.xlane.f32.xlu0 %v304
        %v351 = vpop.xlane.xlu0 %350
        %352 = vmin.xlane.f32.xlu0 %v305
        %v353 = vpop.xlane.xlu0 %352
        %354 = vmin.xlane.f32.xlu0 %v306
        %v355 = vpop.xlane.xlu0 %354
        %356 = vmin.xlane.f32.xlu0 %v307
        %v357 = vpop.xlane.xlu0 %356
        %358 = vmin.xlane.f32.xlu0 %v308
        %v359 = vpop.xlane.xlu0 %358
        %360 = vmin.xlane.f32.xlu0 %v309
        %v361 = vpop.xlane.xlu0 %360
        %362 = vmin.xlane.f32.xlu0 %v310
        %v363 = vpop.xlane.xlu0 %362
        %364 = vmin.xlane.f32.xlu0 %v311
        %v365 = vpop.xlane.xlu0 %364
        %366 = vmin.xlane.f32.xlu0 %v312
        %v367 = vpop.xlane.xlu0 %366
        %368 = vmin.xlane.f32.xlu0 %v313
        %v369 = vpop.xlane.xlu0 %368
        %370 = vmin.xlane.f32.xlu0 %v314
        %v371 = vpop.xlane.xlu0 %370
        %372 = vmin.xlane.f32.xlu0 %v315
        %v373 = vpop.xlane.xlu0 %372
        %374 = vmin.xlane.f32.xlu0 %v316
        %v375 = vpop.xlane.xlu0 %374
        %376 = vmin.xlane.f32.xlu0 %v317
        %v377 = vpop.xlane.xlu0 %376
        %378 = vmin.xlane.f32.xlu0 %v318
        %v379 = vpop.xlane.xlu0 %378
        %380 = vmin.xlane.f32.xlu0 %v319
        %v381 = vpop.xlane.xlu0 %380
        %382 = vmin.xlane.f32.xlu0 %v320
        %v383 = vpop.xlane.xlu0 %382
        %384 = vmin.xlane.f32.xlu0 %v321
        %v385 = vpop.xlane.xlu0 %384
        %v386 = vrot.slane %v323, 4
        %v387 = vmin.f32 %v323, %v386
        %v388 = vrot.slane %v387, 2
        %v389 = vmin.f32 %v387, %v388
        %v390 = vrot.slane %v389, 1
        %v391 = vmin.f32 %v389, %v390
        %v392 = vrot.slane %v325, 4
        %v393 = vmin.f32 %v325, %v392
        %v394 = vrot.slane %v393, 2
        %v395 = vmin.f32 %v393, %v394
        %v396 = vrot.slane %v395, 1
        %v397 = vmin.f32 %v395, %v396
        %v398 = vrot.slane %v327, 4
        %v399 = vmin.f32 %v327, %v398
        %v400 = vrot.slane %v399, 2
        %v401 = vmin.f32 %v399, %v400
        %v402 = vrot.slane %v401, 1
        %v403 = vmin.f32 %v401, %v402
        %v404 = vrot.slane %v329, 4
        %v405 = vmin.f32 %v329, %v404
        %v406 = vrot.slane %v405, 2
        %v407 = vmin.f32 %v405, %v406
        %v408 = vrot.slane %v407, 1
        %v409 = vmin.f32 %v407, %v408
        %v410 = vrot.slane %v331, 4
        %v411 = vmin.f32 %v331, %v410
        %v412 = vrot.slane %v411, 2
        %v413 = vmin.f32 %v411, %v412
        %v414 = vrot.slane %v413, 1
        %v415 = vmin.f32 %v413, %v414
        %v416 = vrot.slane %v333, 4
        %v417 = vmin.f32 %v333, %v416
        %v418 = vrot.slane %v417, 2
        %v419 = vmin.f32 %v417, %v418
        %v420 = vrot.slane %v419, 1
        %v421 = vmin.f32 %v419, %v420
        %v422 = vrot.slane %v335, 4
        %v423 = vmin.f32 %v335, %v422
        %v424 = vrot.slane %v423, 2
        %v425 = vmin.f32 %v423, %v424
        %v426 = vrot.slane %v425, 1
        %v427 = vmin.f32 %v425, %v426
        %v428 = vrot.slane %v337, 4
        %v429 = vmin.f32 %v337, %v428
        %v430 = vrot.slane %v429, 2
        %v431 = vmin.f32 %v429, %v430
        %v432 = vrot.slane %v431, 1
        %v433 = vmin.f32 %v431, %v432
        %v434 = vrot.slane %v339, 4
        %v435 = vmin.f32 %v339, %v434
        %v436 = vrot.slane %v435, 2
        %v437 = vmin.f32 %v435, %v436
        %v438 = vrot.slane %v437, 1
        %v439 = vmin.f32 %v437, %v438
        %v440 = vrot.slane %v341, 4
        %v441 = vmin.f32 %v341, %v440
        %v442 = vrot.slane %v441, 2
        %v443 = vmin.f32 %v441, %v442
        %v444 = vrot.slane %v443, 1
        %v445 = vmin.f32 %v443, %v444
        %v446 = vrot.slane %v343, 4
        %v447 = vmin.f32 %v343, %v446
        %v448 = vrot.slane %v447, 2
        %v449 = vmin.f32 %v447, %v448
        %v450 = vrot.slane %v449, 1
        %v451 = vmin.f32 %v449, %v450
        %v452 = vrot.slane %v345, 4
        %v453 = vmin.f32 %v345, %v452
        %v454 = vrot.slane %v453, 2
        %v455 = vmin.f32 %v453, %v454
        %v456 = vrot.slane %v455, 1
        %v457 = vmin.f32 %v455, %v456
        %v458 = vrot.slane %v347, 4
        %v459 = vmin.f32 %v347, %v458
        %v460 = vrot.slane %v459, 2
        %v461 = vmin.f32 %v459, %v460
        %v462 = vrot.slane %v461, 1
        %v463 = vmin.f32 %v461, %v462
        %v464 = vrot.slane %v349, 4
        %v465 = vmin.f32 %v349, %v464
        %v466 = vrot.slane %v465, 2
        %v467 = vmin.f32 %v465, %v466
        %v468 = vrot.slane %v467, 1
        %v469 = vmin.f32 %v467, %v468
        %v470 = vrot.slane %v351, 4
        %v471 = vmin.f32 %v351, %v470
        %v472 = vrot.slane %v471, 2
        %v473 = vmin.f32 %v471, %v472
        %v474 = vrot.slane %v473, 1
        %v475 = vmin.f32 %v473, %v474
        %v476 = vrot.slane %v353, 4
        %v477 = vmin.f32 %v353, %v476
        %v478 = vrot.slane %v477, 2
        %v479 = vmin.f32 %v477, %v478
        %v480 = vrot.slane %v479, 1
        %v481 = vmin.f32 %v479, %v480
        %v482 = vrot.slane %v355, 4
        %v483 = vmin.f32 %v355, %v482
        %v484 = vrot.slane %v483, 2
        %v485 = vmin.f32 %v483, %v484
        %v486 = vrot.slane %v485, 1
        %v487 = vmin.f32 %v485, %v486
        %v488 = vrot.slane %v357, 4
        %v489 = vmin.f32 %v357, %v488
        %v490 = vrot.slane %v489, 2
        %v491 = vmin.f32 %v489, %v490
        %v492 = vrot.slane %v491, 1
        %v493 = vmin.f32 %v491, %v492
        %v494 = vrot.slane %v359, 4
        %v495 = vmin.f32 %v359, %v494
        %v496 = vrot.slane %v495, 2
        %v497 = vmin.f32 %v495, %v496
        %v498 = vrot.slane %v497, 1
        %v499 = vmin.f32 %v497, %v498
        %v500 = vrot.slane %v361, 4
        %v501 = vmin.f32 %v361, %v500
        %v502 = vrot.slane %v501, 2
        %v503 = vmin.f32 %v501, %v502
        %v504 = vrot.slane %v503, 1
        %v505 = vmin.f32 %v503, %v504
        %v506 = vrot.slane %v363, 4
        %v507 = vmin.f32 %v363, %v506
        %v508 = vrot.slane %v507, 2
        %v509 = vmin.f32 %v507, %v508
        %v510 = vrot.slane %v509, 1
        %v511 = vmin.f32 %v509, %v510
        %v512 = vrot.slane %v365, 4
        %v513 = vmin.f32 %v365, %v512
        %v514 = vrot.slane %v513, 2
        %v515 = vmin.f32 %v513, %v514
        %v516 = vrot.slane %v515, 1
        %v517 = vmin.f32 %v515, %v516
        %v518 = vrot.slane %v367, 4
        %v519 = vmin.f32 %v367, %v518
        %v520 = vrot.slane %v519, 2
        %v521 = vmin.f32 %v519, %v520
        %v522 = vrot.slane %v521, 1
        %v523 = vmin.f32 %v521, %v522
        %v524 = vrot.slane %v369, 4
        %v525 = vmin.f32 %v369, %v524
        %v526 = vrot.slane %v525, 2
        %v527 = vmin.f32 %v525, %v526
        %v528 = vrot.slane %v527, 1
        %v529 = vmin.f32 %v527, %v528
        %v530 = vrot.slane %v371, 4
        %v531 = vmin.f32 %v371, %v530
        %v532 = vrot.slane %v531, 2
        %v533 = vmin.f32 %v531, %v532
        %v534 = vrot.slane %v533, 1
        %v535 = vmin.f32 %v533, %v534
        %v536 = vrot.slane %v373, 4
        %v537 = vmin.f32 %v373, %v536
        %v538 = vrot.slane %v537, 2
        %v539 = vmin.f32 %v537, %v538
        %v540 = vrot.slane %v539, 1
        %v541 = vmin.f32 %v539, %v540
        %v542 = vrot.slane %v375, 4
        %v543 = vmin.f32 %v375, %v542
        %v544 = vrot.slane %v543, 2
        %v545 = vmin.f32 %v543, %v544
        %v546 = vrot.slane %v545, 1
        %v547 = vmin.f32 %v545, %v546
        %v548 = vrot.slane %v377, 4
        %v549 = vmin.f32 %v377, %v548
        %v550 = vrot.slane %v549, 2
        %v551 = vmin.f32 %v549, %v550
        %v552 = vrot.slane %v551, 1
        %v553 = vmin.f32 %v551, %v552
        %v554 = vrot.slane %v379, 4
        %v555 = vmin.f32 %v379, %v554
        %v556 = vrot.slane %v555, 2
        %v557 = vmin.f32 %v555, %v556
        %v558 = vrot.slane %v557, 1
        %v559 = vmin.f32 %v557, %v558
        %v560 = vrot.slane %v381, 4
        %v561 = vmin.f32 %v381, %v560
        %v562 = vrot.slane %v561, 2
        %v563 = vmin.f32 %v561, %v562
        %v564 = vrot.slane %v563, 1
        %v565 = vmin.f32 %v563, %v564
        %v566 = vrot.slane %v383, 4
        %v567 = vmin.f32 %v383, %v566
        %v568 = vrot.slane %v567, 2
        %v569 = vmin.f32 %v567, %v568
        %v570 = vrot.slane %v569, 1
        %v571 = vmin.f32 %v569, %v570
        %v572 = vrot.slane %v385, 4
        %v573 = vmin.f32 %v385, %v572
        %v574 = vrot.slane %v573, 2
        %v575 = vmin.f32 %v573, %v574
        %v576 = vrot.slane %v575, 1
        %v577 = vmin.f32 %v575, %v576
        %578 = vmax.xlane.f32.xlu0 %v290
        %v579 = vpop.xlane.xlu0 %578
        %580 = vmax.xlane.f32.xlu0 %v291
        %v581 = vpop.xlane.xlu0 %580
        %582 = vmax.xlane.f32.xlu0 %v292
        %v583 = vpop.xlane.xlu0 %582
        %584 = vmax.xlane.f32.xlu0 %v293
        %v585 = vpop.xlane.xlu0 %584
        %586 = vmax.xlane.f32.xlu0 %v294
        %v587 = vpop.xlane.xlu0 %586
        %588 = vmax.xlane.f32.xlu0 %v295
        %v589 = vpop.xlane.xlu0 %588
        %590 = vmax.xlane.f32.xlu0 %v296
        %v591 = vpop.xlane.xlu0 %590
        %592 = vmax.xlane.f32.xlu0 %v297
        %v593 = vpop.xlane.xlu0 %592
        %594 = vmax.xlane.f32.xlu0 %v298
        %v595 = vpop.xlane.xlu0 %594
        %596 = vmax.xlane.f32.xlu0 %v299
        %v597 = vpop.xlane.xlu0 %596
        %598 = vmax.xlane.f32.xlu0 %v300
        %v599 = vpop.xlane.xlu0 %598
        %600 = vmax.xlane.f32.xlu0 %v301
        %v601 = vpop.xlane.xlu0 %600
        %602 = vmax.xlane.f32.xlu0 %v302
        %v603 = vpop.xlane.xlu0 %602
        %604 = vmax.xlane.f32.xlu0 %v303
        %v605 = vpop.xlane.xlu0 %604
        %606 = vmax.xlane.f32.xlu0 %v304
        %v607 = vpop.xlane.xlu0 %606
        %608 = vmax.xlane.f32.xlu0 %v305
        %v609 = vpop.xlane.xlu0 %608
        %610 = vmax.xlane.f32.xlu0 %v306
        %v611 = vpop.xlane.xlu0 %610
        %612 = vmax.xlane.f32.xlu0 %v307
        %v613 = vpop.xlane.xlu0 %612
        %614 = vmax.xlane.f32.xlu0 %v308
        %v615 = vpop.xlane.xlu0 %614
        %616 = vmax.xlane.f32.xlu0 %v309
        %v617 = vpop.xlane.xlu0 %616
        %618 = vmax.xlane.f32.xlu0 %v310
        %v619 = vpop.xlane.xlu0 %618
        %620 = vmax.xlane.f32.xlu0 %v311
        %v621 = vpop.xlane.xlu0 %620
        %622 = vmax.xlane.f32.xlu0 %v312
        %v623 = vpop.xlane.xlu0 %622
        %624 = vmax.xlane.f32.xlu0 %v313
        %v625 = vpop.xlane.xlu0 %624
        %626 = vmax.xlane.f32.xlu0 %v314
        %v627 = vpop.xlane.xlu0 %626
        %628 = vmax.xlane.f32.xlu0 %v315
        %v629 = vpop.xlane.xlu0 %628
        %630 = vmax.xlane.f32.xlu0 %v316
        %v631 = vpop.xlane.xlu0 %630
        %632 = vmax.xlane.f32.xlu0 %v317
        %v633 = vpop.xlane.xlu0 %632
        %634 = vmax.xlane.f32.xlu0 %v318
        %v635 = vpop.xlane.xlu0 %634
        %636 = vmax.xlane.f32.xlu0 %v319
        %v637 = vpop.xlane.xlu0 %636
        %638 = vmax.xlane.f32.xlu0 %v320
        %v639 = vpop.xlane.xlu0 %638
        %640 = vmax.xlane.f32.xlu0 %v321
        %v641 = vpop.xlane.xlu0 %640
        %v642 = vrot.slane %v579, 4
        %v643 = vmax.f32 %v579, %v642
        %v644 = vrot.slane %v643, 2
        %v645 = vmax.f32 %v643, %v644
        %v646 = vrot.slane %v645, 1
        %v647 = vmax.f32 %v645, %v646
        %v648 = vrot.slane %v581, 4
        %v649 = vmax.f32 %v581, %v648
        %v650 = vrot.slane %v649, 2
        %v651 = vmax.f32 %v649, %v650
        %v652 = vrot.slane %v651, 1
        %v653 = vmax.f32 %v651, %v652
        %v654 = vrot.slane %v583, 4
        %v655 = vmax.f32 %v583, %v654
        %v656 = vrot.slane %v655, 2
        %v657 = vmax.f32 %v655, %v656
        %v658 = vrot.slane %v657, 1
        %v659 = vmax.f32 %v657, %v658
        %v660 = vrot.slane %v585, 4
        %v661 = vmax.f32 %v585, %v660
        %v662 = vrot.slane %v661, 2
        %v663 = vmax.f32 %v661, %v662
        %v664 = vrot.slane %v663, 1
        %v665 = vmax.f32 %v663, %v664
        %v666 = vrot.slane %v587, 4
        %v667 = vmax.f32 %v587, %v666
        %v668 = vrot.slane %v667, 2
        %v669 = vmax.f32 %v667, %v668
        %v670 = vrot.slane %v669, 1
        %v671 = vmax.f32 %v669, %v670
        %v672 = vrot.slane %v589, 4
        %v673 = vmax.f32 %v589, %v672
        %v674 = vrot.slane %v673, 2
        %v675 = vmax.f32 %v673, %v674
        %v676 = vrot.slane %v675, 1
        %v677 = vmax.f32 %v675, %v676
        %v678 = vrot.slane %v591, 4
        %v679 = vmax.f32 %v591, %v678
        %v680 = vrot.slane %v679, 2
        %v681 = vmax.f32 %v679, %v680
        %v682 = vrot.slane %v681, 1
        %v683 = vmax.f32 %v681, %v682
        %v684 = vrot.slane %v593, 4
        %v685 = vmax.f32 %v593, %v684
        %v686 = vrot.slane %v685, 2
        %v687 = vmax.f32 %v685, %v686
        %v688 = vrot.slane %v687, 1
        %v689 = vmax.f32 %v687, %v688
        %v690 = vrot.slane %v595, 4
        %v691 = vmax.f32 %v595, %v690
        %v692 = vrot.slane %v691, 2
        %v693 = vmax.f32 %v691, %v692
        %v694 = vrot.slane %v693, 1
        %v695 = vmax.f32 %v693, %v694
        %v696 = vrot.slane %v597, 4
        %v697 = vmax.f32 %v597, %v696
        %v698 = vrot.slane %v697, 2
        %v699 = vmax.f32 %v697, %v698
        %v700 = vrot.slane %v699, 1
        %v701 = vmax.f32 %v699, %v700
        %v702 = vrot.slane %v599, 4
        %v703 = vmax.f32 %v599, %v702
        %v704 = vrot.slane %v703, 2
        %v705 = vmax.f32 %v703, %v704
        %v706 = vrot.slane %v705, 1
        %v707 = vmax.f32 %v705, %v706
        %v708 = vrot.slane %v601, 4
        %v709 = vmax.f32 %v601, %v708
        %v710 = vrot.slane %v709, 2
        %v711 = vmax.f32 %v709, %v710
        %v712 = vrot.slane %v711, 1
        %v713 = vmax.f32 %v711, %v712
        %v714 = vrot.slane %v603, 4
        %v715 = vmax.f32 %v603, %v714
        %v716 = vrot.slane %v715, 2
        %v717 = vmax.f32 %v715, %v716
        %v718 = vrot.slane %v717, 1
        %v719 = vmax.f32 %v717, %v718
        %v720 = vrot.slane %v605, 4
        %v721 = vmax.f32 %v605, %v720
        %v722 = vrot.slane %v721, 2
        %v723 = vmax.f32 %v721, %v722
        %v724 = vrot.slane %v723, 1
        %v725 = vmax.f32 %v723, %v724
        %v726 = vrot.slane %v607, 4
        %v727 = vmax.f32 %v607, %v726
        %v728 = vrot.slane %v727, 2
        %v729 = vmax.f32 %v727, %v728
        %v730 = vrot.slane %v729, 1
        %v731 = vmax.f32 %v729, %v730
        %v732 = vrot.slane %v609, 4
        %v733 = vmax.f32 %v609, %v732
        %v734 = vrot.slane %v733, 2
        %v735 = vmax.f32 %v733, %v734
        %v736 = vrot.slane %v735, 1
        %v737 = vmax.f32 %v735, %v736
        %v738 = vrot.slane %v611, 4
        %v739 = vmax.f32 %v611, %v738
        %v740 = vrot.slane %v739, 2
        %v741 = vmax.f32 %v739, %v740
        %v742 = vrot.slane %v741, 1
        %v743 = vmax.f32 %v741, %v742
        %v744 = vrot.slane %v613, 4
        %v745 = vmax.f32 %v613, %v744
        %v746 = vrot.slane %v745, 2
        %v747 = vmax.f32 %v745, %v746
        %v748 = vrot.slane %v747, 1
        %v749 = vmax.f32 %v747, %v748
        %v750 = vrot.slane %v615, 4
        %v751 = vmax.f32 %v615, %v750
        %v752 = vrot.slane %v751, 2
        %v753 = vmax.f32 %v751, %v752
        %v754 = vrot.slane %v753, 1
        %v755 = vmax.f32 %v753, %v754
        %v756 = vrot.slane %v617, 4
        %v757 = vmax.f32 %v617, %v756
        %v758 = vrot.slane %v757, 2
        %v759 = vmax.f32 %v757, %v758
        %v760 = vrot.slane %v759, 1
        %v761 = vmax.f32 %v759, %v760
        %v762 = vrot.slane %v619, 4
        %v763 = vmax.f32 %v619, %v762
        %v764 = vrot.slane %v763, 2
        %v765 = vmax.f32 %v763, %v764
        %v766 = vrot.slane %v765, 1
        %v767 = vmax.f32 %v765, %v766
        %v768 = vrot.slane %v621, 4
        %v769 = vmax.f32 %v621, %v768
        %v770 = vrot.slane %v769, 2
        %v771 = vmax.f32 %v769, %v770
        %v772 = vrot.slane %v771, 1
        %v773 = vmax.f32 %v771, %v772
        %v774 = vrot.slane %v623, 4
        %v775 = vmax.f32 %v623, %v774
        %v776 = vrot.slane %v775, 2
        %v777 = vmax.f32 %v775, %v776
        %v778 = vrot.slane %v777, 1
        %v779 = vmax.f32 %v777, %v778
        %v780 = vrot.slane %v625, 4
        %v781 = vmax.f32 %v625, %v780
        %v782 = vrot.slane %v781, 2
        %v783 = vmax.f32 %v781, %v782
        %v784 = vrot.slane %v783, 1
        %v785 = vmax.f32 %v783, %v784
        %v786 = vrot.slane %v627, 4
        %v787 = vmax.f32 %v627, %v786
        %v788 = vrot.slane %v787, 2
        %v789 = vmax.f32 %v787, %v788
        %v790 = vrot.slane %v789, 1
        %v791 = vmax.f32 %v789, %v790
        %v792 = vrot.slane %v629, 4
        %v793 = vmax.f32 %v629, %v792
        %v794 = vrot.slane %v793, 2
        %v795 = vmax.f32 %v793, %v794
        %v796 = vrot.slane %v795, 1
        %v797 = vmax.f32 %v795, %v796
        %v798 = vrot.slane %v631, 4
        %v799 = vmax.f32 %v631, %v798
        %v800 = vrot.slane %v799, 2
        %v801 = vmax.f32 %v799, %v800
        %v802 = vrot.slane %v801, 1
        %v803 = vmax.f32 %v801, %v802
        %v804 = vrot.slane %v633, 4
        %v805 = vmax.f32 %v633, %v804
        %v806 = vrot.slane %v805, 2
        %v807 = vmax.f32 %v805, %v806
        %v808 = vrot.slane %v807, 1
        %v809 = vmax.f32 %v807, %v808
        %v810 = vrot.slane %v635, 4
        %v811 = vmax.f32 %v635, %v810
        %v812 = vrot.slane %v811, 2
        %v813 = vmax.f32 %v811, %v812
        %v814 = vrot.slane %v813, 1
        %v815 = vmax.f32 %v813, %v814
        %v816 = vrot.slane %v637, 4
        %v817 = vmax.f32 %v637, %v816
        %v818 = vrot.slane %v817, 2
        %v819 = vmax.f32 %v817, %v818
        %v820 = vrot.slane %v819, 1
        %v821 = vmax.f32 %v819, %v820
        %v822 = vrot.slane %v639, 4
        %v823 = vmax.f32 %v639, %v822
        %v824 = vrot.slane %v823, 2
        %v825 = vmax.f32 %v823, %v824
        %v826 = vrot.slane %v825, 1
        %v827 = vmax.f32 %v825, %v826
        %v828 = vrot.slane %v641, 4
        %v829 = vmax.f32 %v641, %v828
        %v830 = vrot.slane %v829, 2
        %v831 = vmax.f32 %v829, %v830
        %v832 = vrot.slane %v831, 1
        %v833 = vmax.f32 %v831, %v832
        %v834 = vsub.f32 %v290, %v391
        %v835 = vsub.f32 %v291, %v397
        %v836 = vsub.f32 %v292, %v403
        %v837 = vsub.f32 %v293, %v409
        %v838 = vsub.f32 %v294, %v415
        %v839 = vsub.f32 %v295, %v421
        %v840 = vsub.f32 %v296, %v427
        %v841 = vsub.f32 %v297, %v433
        %v842 = vsub.f32 %v298, %v439
        %v843 = vsub.f32 %v299, %v445
        %v844 = vsub.f32 %v300, %v451
        %v845 = vsub.f32 %v301, %v457
        %v846 = vsub.f32 %v302, %v463
        %v847 = vsub.f32 %v303, %v469
        %v848 = vsub.f32 %v304, %v475
        %v849 = vsub.f32 %v305, %v481
        %v850 = vsub.f32 %v306, %v487
        %v851 = vsub.f32 %v307, %v493
        %v852 = vsub.f32 %v308, %v499
        %v853 = vsub.f32 %v309, %v505
        %v854 = vsub.f32 %v310, %v511
        %v855 = vsub.f32 %v311, %v517
        %v856 = vsub.f32 %v312, %v523
        %v857 = vsub.f32 %v313, %v529
        %v858 = vsub.f32 %v314, %v535
        %v859 = vsub.f32 %v315, %v541
        %v860 = vsub.f32 %v316, %v547
        %v861 = vsub.f32 %v317, %v553
        %v862 = vsub.f32 %v318, %v559
        %v863 = vsub.f32 %v319, %v565
        %v864 = vsub.f32 %v320, %v571
        %v865 = vsub.f32 %v321, %v577
        %v866 = vsub.f32 %v647, %v391
        %v867 = vsub.f32 %v653, %v397
        %v868 = vsub.f32 %v659, %v403
        %v869 = vsub.f32 %v665, %v409
        %v870 = vsub.f32 %v671, %v415
        %v871 = vsub.f32 %v677, %v421
        %v872 = vsub.f32 %v683, %v427
        %v873 = vsub.f32 %v689, %v433
        %v874 = vsub.f32 %v695, %v439
        %v875 = vsub.f32 %v701, %v445
        %v876 = vsub.f32 %v707, %v451
        %v877 = vsub.f32 %v713, %v457
        %v878 = vsub.f32 %v719, %v463
        %v879 = vsub.f32 %v725, %v469
        %v880 = vsub.f32 %v731, %v475
        %v881 = vsub.f32 %v737, %v481
        %v882 = vsub.f32 %v743, %v487
        %v883 = vsub.f32 %v749, %v493
        %v884 = vsub.f32 %v755, %v499
        %v885 = vsub.f32 %v761, %v505
        %v886 = vsub.f32 %v767, %v511
        %v887 = vsub.f32 %v773, %v517
        %v888 = vsub.f32 %v779, %v523
        %v889 = vsub.f32 %v785, %v529
        %v890 = vsub.f32 %v791, %v535
        %v891 = vsub.f32 %v797, %v541
        %v892 = vsub.f32 %v803, %v547
        %v893 = vsub.f32 %v809, %v553
        %v894 = vsub.f32 %v815, %v559
        %v895 = vsub.f32 %v821, %v565
        %v896 = vsub.f32 %v827, %v571
        %v897 = vsub.f32 %v833, %v577
        %v898 = vrcp.pop %v866
        %v899 = vmul.f32 %v834, %v898
        %v900 = vrcp.pop %v867
        %v901 = vmul.f32 %v835, %v900
        %v902 = vrcp.pop %v868
        %v903 = vmul.f32 %v836, %v902
        %v904 = vrcp.pop %v869
        %v905 = vmul.f32 %v837, %v904
        %v906 = vrcp.pop %v870
        %v907 = vmul.f32 %v838, %v906
        %v908 = vrcp.pop %v871
        %v909 = vmul.f32 %v839, %v908
        %v910 = vrcp.pop %v872
        %v911 = vmul.f32 %v840, %v910
        %v912 = vrcp.pop %v873
        %v913 = vmul.f32 %v841, %v912
        %v914 = vrcp.pop %v874
        %v915 = vmul.f32 %v842, %v914
        %v916 = vrcp.pop %v875
        %v917 = vmul.f32 %v843, %v916
        %v918 = vrcp.pop %v876
        %v919 = vmul.f32 %v844, %v918
        %v920 = vrcp.pop %v877
        %v921 = vmul.f32 %v845, %v920
        %v922 = vrcp.pop %v878
        %v923 = vmul.f32 %v846, %v922
        %v924 = vrcp.pop %v879
        %v925 = vmul.f32 %v847, %v924
        %v926 = vrcp.pop %v880
        %v927 = vmul.f32 %v848, %v926
        %v928 = vrcp.pop %v881
        %v929 = vmul.f32 %v849, %v928
        %v930 = vrcp.pop %v882
        %v931 = vmul.f32 %v850, %v930
        %v932 = vrcp.pop %v883
        %v933 = vmul.f32 %v851, %v932
        %v934 = vrcp.pop %v884
        %v935 = vmul.f32 %v852, %v934
        %v936 = vrcp.pop %v885
        %v937 = vmul.f32 %v853, %v936
        %v938 = vrcp.pop %v886
        %v939 = vmul.f32 %v854, %v938
        %v940 = vrcp.pop %v887
        %v941 = vmul.f32 %v855, %v940
        %v942 = vrcp.pop %v888
        %v943 = vmul.f32 %v856, %v942
        %v944 = vrcp.pop %v889
        %v945 = vmul.f32 %v857, %v944
        %v946 = vrcp.pop %v890
        %v947 = vmul.f32 %v858, %v946
        %v948 = vrcp.pop %v891
        %v949 = vmul.f32 %v859, %v948
        %v950 = vrcp.pop %v892
        %v951 = vmul.f32 %v860, %v950
        %v952 = vrcp.pop %v893
        %v953 = vmul.f32 %v861, %v952
        %v954 = vrcp.pop %v894
        %v955 = vmul.f32 %v862, %v954
        %v956 = vrcp.pop %v895
        %v957 = vmul.f32 %v863, %v956
        %v958 = vrcp.pop %v896
        %v959 = vmul.f32 %v864, %v958
        %v960 = vrcp.pop %v897
        %v961 = vmul.f32 %v865, %v960
        %v962 = vld [vmem:[%s4] ss:$4 sm:$0x7]
        %v963 = vld [vmem:[%s4 + $0x1] sm:$0x1]
        %v964 = vld [vmem:[%s4 + $0x5] sm:$0x1]
        %v965 = vld [vmem:[%s4 + $0x9] sm:$0x1]
        %v966 = vld [vmem:[%s4 + $0x2] sm:$0x1]
        %v967 = vld [vmem:[%s4 + $0x6] sm:$0x1]
        %v968 = vld [vmem:[%s4 + $0xa] sm:$0x1]
        %v969 = vld [vmem:[#allocation5] sm:$0xff]
        %v970 = vld [vmem:[#allocation5 + $0x8] sm:$0xf]
        %v971 = vld [vmem:[#allocation5 + $0xc] sm:$0xff]
        %v972 = vld [vmem:[#allocation5 + $0x14] sm:$0xf]
        %v973 = vld [vmem:[#allocation5 + $0x18] sm:$0xff]
        %v974 = vld [vmem:[#allocation5 + $0x20] sm:$0xf]
        %v975 = vld [vmem:[#allocation5 + $0x24] sm:$0xff]
        %v976 = vld [vmem:[#allocation5 + $0x2c] sm:$0xf]
        %v977 = vld [vmem:[#allocation5 + $0x30] sm:$0xff]
        %v978 = vld [vmem:[#allocation5 + $0x38] sm:$0xf]
        %v979 = vld [vmem:[#allocation5 + $0x3c] sm:$0xff]
        %v980 = vld [vmem:[#allocation5 + $0x44] sm:$0xf]
        %v981 = vld [vmem:[#allocation5 + $0x48] sm:$0xff]
        %v982 = vld [vmem:[#allocation5 + $0x50] sm:$0xf]
        %v983 = vld [vmem:[#allocation5 + $0x54] sm:$0xff]
        %v984 = vld [vmem:[#allocation5 + $0x5c] sm:$0xf]
        %v985 = vld [vmem:[#allocation5 + $0x60] sm:$0xff]
        %v986 = vld [vmem:[#allocation5 + $0x68] sm:$0xf]
        %v987 = vld [vmem:[#allocation5 + $0x6c] sm:$0xff]
        %v988 = vld [vmem:[#allocation5 + $0x74] sm:$0xf]
        %v989 = vld [vmem:[#allocation5 + $0x78] sm:$0xff]
        %v990 = vld [vmem:[#allocation5 + $0x80] sm:$0xf]
        %v991 = vld [vmem:[#allocation5 + $0x84] sm:$0xff]
        %v992 = vld [vmem:[#allocation5 + $0x8c] sm:$0xf]
        %v993 = vld [vmem:[#allocation5 + $0x90] sm:$0xff]
        %v994 = vld [vmem:[#allocation5 + $0x98] sm:$0xf]
        %v995 = vld [vmem:[#allocation5 + $0x9c] sm:$0xff]
        %v996 = vld [vmem:[#allocation5 + $0xa4] sm:$0xf]
        %v997 = vld [vmem:[#allocation5 + $0xa8] sm:$0xff]
        %v998 = vld [vmem:[#allocation5 + $0xb0] sm:$0xf]
        %v999 = vld [vmem:[#allocation5 + $0xb4] sm:$0xff]
        %v1000 = vld [vmem:[#allocation5 + $0xbc] sm:$0xf]
        %v1001 = vpack.c.bf16 %v901, %v899
        %v1002 = vpack.c.bf16 %v905, %v903
        %v1003 = vpack.c.bf16 %v909, %v907
        %v1004 = vpack.c.bf16 %v913, %v911
        %v1005 = vpack.c.bf16 %v917, %v915
        %v1006 = vpack.c.bf16 %v921, %v919
        %v1007 = vpack.c.bf16 %v925, %v923
        %v1008 = vpack.c.bf16 %v929, %v927
        %v1009 = vpack.c.bf16 %v933, %v931
        %v1010 = vpack.c.bf16 %v937, %v935
        %v1011 = vpack.c.bf16 %v941, %v939
        %v1012 = vpack.c.bf16 %v945, %v943
        %v1013 = vpack.c.bf16 %v949, %v947
        %v1014 = vpack.c.bf16 %v953, %v951
        %v1015 = vpack.c.bf16 %v957, %v955
        %v1016 = vpack.c.bf16 %v961, %v959
        %v1018 = vlaneseq
        %v1019 = vshrl.u32 %v1018, 7
        %v1020 = vsub.s32 0, %v1019
        %v1021 = vrot.slane %v962, %v1020
        %v1022 = vlaneseq
        %v1023 = vshrl.u32 %v1022, 7
        %v1024 = vsub.s32 1, %v1023
        %v1025 = vrot.slane %v962, %v1024
        %v1026 = vlaneseq
        %v1027 = vshrl.u32 %v1026, 7
        %v1028 = vsub.s32 2, %v1027
        %v1029 = vrot.slane %v962, %v1028
        %v1065 = vunpack.c.l.b16 %v969
        %v1066 = vunpack.c.h.b16 %v969
        %v1067 = vunpack.c.l.b16 %v970
        %v1068 = vunpack.c.l.b16 %v971
        %v1069 = vunpack.c.h.b16 %v971
        %v1070 = vunpack.c.l.b16 %v972
        %v1071 = vunpack.c.l.b16 %v973
        %v1072 = vunpack.c.h.b16 %v973
        %v1073 = vunpack.c.l.b16 %v974
        %v1074 = vunpack.c.l.b16 %v975
        %v1075 = vunpack.c.h.b16 %v975
        %v1076 = vunpack.c.l.b16 %v976
        %v1077 = vunpack.c.l.b16 %v977
        %v1078 = vunpack.c.h.b16 %v977
        %v1079 = vunpack.c.l.b16 %v978
        %v1080 = vunpack.c.l.b16 %v979
        %v1081 = vunpack.c.h.b16 %v979
        %v1082 = vunpack.c.l.b16 %v980
        %v1083 = vunpack.c.l.b16 %v981
        %v1084 = vunpack.c.h.b16 %v981
        %v1085 = vunpack.c.l.b16 %v982
        %v1086 = vunpack.c.l.b16 %v983
        %v1087 = vunpack.c.h.b16 %v983
        %v1088 = vunpack.c.l.b16 %v984
        %v1089 = vunpack.c.l.b16 %v985
        %v1090 = vunpack.c.h.b16 %v985
        %v1091 = vunpack.c.l.b16 %v986
        %v1092 = vunpack.c.l.b16 %v987
        %v1093 = vunpack.c.h.b16 %v987
        %v1094 = vunpack.c.l.b16 %v988
        %v1095 = vunpack.c.l.b16 %v989
        %v1096 = vunpack.c.h.b16 %v989
        %v1097 = vunpack.c.l.b16 %v990
        %v1098 = vunpack.c.l.b16 %v991
        %v1099 = vunpack.c.h.b16 %v991
        %v1100 = vunpack.c.l.b16 %v992
        %v1101 = vunpack.c.l.b16 %v993
        %v1102 = vunpack.c.h.b16 %v993
        %v1103 = vunpack.c.l.b16 %v994
        %v1104 = vunpack.c.l.b16 %v995
        %v1105 = vunpack.c.h.b16 %v995
        %v1106 = vunpack.c.l.b16 %v996
        %v1107 = vunpack.c.l.b16 %v997
        %v1108 = vunpack.c.h.b16 %v997
        %v1109 = vunpack.c.l.b16 %v998
        %v1110 = vunpack.c.l.b16 %v999
        %v1111 = vunpack.c.h.b16 %v999
        %v1112 = vunpack.c.l.b16 %v1000
        %v1113 = vpack.c.b16 %v1068, %v1065
        %v1114 = vpack.c.b16 %v1069, %v1066
        %v1115 = vpack.c.b16 %v1070, %v1067
        %v1116 = vpack.c.b16 %v1074, %v1071
        %v1117 = vpack.c.b16 %v1075, %v1072
        %v1118 = vpack.c.b16 %v1076, %v1073
        %v1119 = vpack.c.b16 %v1080, %v1077
        %v1120 = vpack.c.b16 %v1081, %v1078
        %v1121 = vpack.c.b16 %v1082, %v1079
        %v1122 = vpack.c.b16 %v1086, %v1083
        %v1123 = vpack.c.b16 %v1087, %v1084
        %v1124 = vpack.c.b16 %v1088, %v1085
        %v1125 = vpack.c.b16 %v1092, %v1089
        %v1126 = vpack.c.b16 %v1093, %v1090
        %v1127 = vpack.c.b16 %v1094, %v1091
        %v1128 = vpack.c.b16 %v1098, %v1095
        %v1129 = vpack.c.b16 %v1099, %v1096
        %v1130 = vpack.c.b16 %v1100, %v1097
        %v1131 = vpack.c.b16 %v1104, %v1101
        %v1132 = vpack.c.b16 %v1105, %v1102
        %v1133 = vpack.c.b16 %v1106, %v1103
        %v1134 = vpack.c.b16 %v1110, %v1107
        %v1135 = vpack.c.b16 %v1111, %v1108
        %v1136 = vpack.c.b16 %v1112, %v1109
        %1161 = vmatprep.subr.bf16.mxu0 %v1114
        %1162 = vmatpush1.bf16.msra.mxu0 %v1113
        %1163 = vmatprep.subr.bf16.mxu0 %v1117
        %1164 = vmatpush1.bf16.msra.mxu0 %v1116
        %1165 = vmatprep.subr.bf16.mxu0 %v1120
        %1166 = vmatpush1.bf16.msra.mxu0 %v1119
        %1167 = vmatprep.subr.bf16.mxu0 %v1123
        %1168 = vmatpush1.bf16.msra.mxu0 %v1122
        %1169 = vmatprep.subr.bf16.mxu0 %v1126
        %1170 = vmatpush1.bf16.msra.mxu0 %v1125
        %1171 = vmatprep.subr.bf16.mxu0 %v1129
        %1172 = vmatpush1.bf16.msra.mxu0 %v1128
        %1173 = vmatprep.subr.bf16.mxu0 %v1132
        %1174 = vmatpush1.bf16.msra.mxu0 %v1131
        %1175 = vmatprep.subr.bf16.mxu0 %v1135
        %1176 = vmatpush1.bf16.msra.mxu0 %v1134
        %1177 = vmatprep.subr.bf16.mxu0 0
        %1178 = vmatpush1.bf16.msra.mxu0 0
        %1179 = vmatprep.subr.bf16.mxu0 0
        %1180 = vmatpush1.bf16.msra.mxu0 0
        %1181 = vmatprep.subr.bf16.mxu0 0
        %1182 = vmatpush1.bf16.msra.mxu0 0
        %1183 = vmatprep.subr.bf16.mxu0 0
        %1184 = vmatpush1.bf16.msra.mxu0 0
        %1185 = vmatprep.subr.bf16.mxu0 0
        %1186 = vmatpush1.bf16.msra.mxu0 0
        %1187 = vmatprep.subr.bf16.mxu0 0
        %1188 = vmatpush1.bf16.msra.mxu0 0
        %1189 = vmatprep.subr.bf16.mxu0 0
        %1190 = vmatpush1.bf16.msra.mxu0 0
        %1191 = vmatprep.subr.bf16.mxu0 0
        %1192 = vmatpush1.bf16.msra.mxu0 0
        %1193 = vmatprep.mubr.bf16.mxu0 0
        %1194 = vmatmul.mubr.bf16.gmra.mrb[0].mxu0 %v1001
        %v1195 = vpop.f32.mrb[0].mxu0
        %v1196 = vadd.f32 %v1021, %v1195
        %v1197 = vpop.f32.mrb[0].mxu0
        %v1198 = vadd.f32 %v1025, %v1197
        %v1199 = vpop.f32.mrb[0].mxu0
        %v1200 = vadd.f32 %v1021, %v1199
        %v1201 = vpop.f32.mrb[0].mxu0
        %v1202 = vadd.f32 %v1025, %v1201
        %1203 = vmatprep.mubr.bf16.mxu0 0
        %1204 = vmatmul.mubr.bf16.gmra.mrb[0].mxu0 %v1002
        %v1205 = vpop.f32.mrb[0].mxu0
        %v1206 = vadd.f32 %v1021, %v1205
        %v1207 = vpop.f32.mrb[0].mxu0
        %v1208 = vadd.f32 %v1025, %v1207
        %v1209 = vpop.f32.mrb[0].mxu0
        %v1210 = vadd.f32 %v1021, %v1209
        %v1211 = vpop.f32.mrb[0].mxu0
        %v1212 = vadd.f32 %v1025, %v1211
        %1213 = vmatprep.mubr.bf16.mxu0 0
        %1214 = vmatmul.mubr.bf16.gmra.mrb[0].mxu0 %v1003
        %v1215 = vpop.f32.mrb[0].mxu0
        %v1216 = vadd.f32 %v1021, %v1215
        %v1217 = vpop.f32.mrb[0].mxu0
        %v1218 = vadd.f32 %v1025, %v1217
        %v1219 = vpop.f32.mrb[0].mxu0
        %v1220 = vadd.f32 %v1021, %v1219
        %v1221 = vpop.f32.mrb[0].mxu0
        %v1222 = vadd.f32 %v1025, %v1221
        %1223 = vmatprep.mubr.bf16.mxu0 0
        %1224 = vmatmul.mubr.bf16.gmra.mrb[0].mxu0 %v1004
        %v1225 = vpop.f32.mrb[0].mxu0
        %v1226 = vadd.f32 %v1021, %v1225
        %v1227 = vpop.f32.mrb[0].mxu0
        %v1228 = vadd.f32 %v1025, %v1227
        %v1229 = vpop.f32.mrb[0].mxu0
        %v1230 = vadd.f32 %v1021, %v1229
        %v1231 = vpop.f32.mrb[0].mxu0
        %v1232 = vadd.f32 %v1025, %v1231
        %1233 = vmatprep.mubr.bf16.mxu0 0
        %1234 = vmatmul.mubr.bf16.gmra.mrb[0].mxu0 %v1005
        %v1235 = vpop.f32.mrb[0].mxu0
        %v1236 = vadd.f32 %v1021, %v1235
        %v1237 = vpop.f32.mrb[0].mxu0
        %v1238 = vadd.f32 %v1025, %v1237
        %v1239 = vpop.f32.mrb[0].mxu0
        %v1240 = vadd.f32 %v1021, %v1239
        %v1241 = vpop.f32.mrb[0].mxu0
        %v1242 = vadd.f32 %v1025, %v1241
        %1243 = vmatprep.mubr.bf16.mxu0 0
        %1244 = vmatmul.mubr.bf16.gmra.mrb[0].mxu0 %v1006
        %v1245 = vpop.f32.mrb[0].mxu0
        %v1246 = vadd.f32 %v1021, %v1245
        %v1247 = vpop.f32.mrb[0].mxu0
        %v1248 = vadd.f32 %v1025, %v1247
        %v1249 = vpop.f32.mrb[0].mxu0
        %v1250 = vadd.f32 %v1021, %v1249
        %v1251 = vpop.f32.mrb[0].mxu0
        %v1252 = vadd.f32 %v1025, %v1251
        %1253 = vmatprep.mubr.bf16.mxu0 0
        %1254 = vmatmul.mubr.bf16.gmra.mrb[0].mxu0 %v1007
        %v1255 = vpop.f32.mrb[0].mxu0
        %v1256 = vadd.f32 %v1021, %v1255
        %v1257 = vpop.f32.mrb[0].mxu0
        %v1258 = vadd.f32 %v1025, %v1257
        %v1259 = vpop.f32.mrb[0].mxu0
        %v1260 = vadd.f32 %v1021, %v1259
        %v1261 = vpop.f32.mrb[0].mxu0
        %v1262 = vadd.f32 %v1025, %v1261
        %1263 = vmatprep.mubr.bf16.mxu0 0
        %1264 = vmatmul.mubr.bf16.gmra.mrb[0].mxu0 %v1008
        %v1265 = vpop.f32.mrb[0].mxu0
        %v1266 = vadd.f32 %v1021, %v1265
        %v1267 = vpop.f32.mrb[0].mxu0
        %v1268 = vadd.f32 %v1025, %v1267
        %v1269 = vpop.f32.mrb[0].mxu0
        %v1270 = vadd.f32 %v1021, %v1269
        %v1271 = vpop.f32.mrb[0].mxu0
        %v1272 = vadd.f32 %v1025, %v1271
        %1273 = vmatprep.mubr.bf16.mxu0 0
        %1274 = vmatmul.mubr.bf16.gmra.mrb[0].mxu0 %v1009
        %v1275 = vpop.f32.mrb[0].mxu0
        %v1276 = vadd.f32 %v1021, %v1275
        %v1277 = vpop.f32.mrb[0].mxu0
        %v1278 = vadd.f32 %v1025, %v1277
        %v1279 = vpop.f32.mrb[0].mxu0
        %v1280 = vadd.f32 %v1021, %v1279
        %v1281 = vpop.f32.mrb[0].mxu0
        %v1282 = vadd.f32 %v1025, %v1281
        %1283 = vmatprep.mubr.bf16.mxu0 0
        %1284 = vmatmul.mubr.bf16.gmra.mrb[0].mxu0 %v1010
        %v1285 = vpop.f32.mrb[0].mxu0
        %v1286 = vadd.f32 %v1021, %v1285
        %v1287 = vpop.f32.mrb[0].mxu0
        %v1288 = vadd.f32 %v1025, %v1287
        %v1289 = vpop.f32.mrb[0].mxu0
        %v1290 = vadd.f32 %v1021, %v1289
        %v1291 = vpop.f32.mrb[0].mxu0
        %v1292 = vadd.f32 %v1025, %v1291
        %1293 = vmatprep.mubr.bf16.mxu0 0
        %1294 = vmatmul.mubr.bf16.gmra.mrb[0].mxu0 %v1011
        %v1295 = vpop.f32.mrb[0].mxu0
        %v1296 = vadd.f32 %v1021, %v1295
        %v1297 = vpop.f32.mrb[0].mxu0
        %v1298 = vadd.f32 %v1025, %v1297
        %v1299 = vpop.f32.mrb[0].mxu0
        %v1300 = vadd.f32 %v1021, %v1299
        %v1301 = vpop.f32.mrb[0].mxu0
        %v1302 = vadd.f32 %v1025, %v1301
        %1303 = vmatprep.mubr.bf16.mxu0 0
        %1304 = vmatmul.mubr.bf16.gmra.mrb[0].mxu0 %v1012
        %v1305 = vpop.f32.mrb[0].mxu0
        %v1306 = vadd.f32 %v1021, %v1305
        %v1307 = vpop.f32.mrb[0].mxu0
        %v1308 = vadd.f32 %v1025, %v1307
        %v1309 = vpop.f32.mrb[0].mxu0
        %v1310 = vadd.f32 %v1021, %v1309
        %v1311 = vpop.f32.mrb[0].mxu0
        %v1312 = vadd.f32 %v1025, %v1311
        %1313 = vmatprep.mubr.bf16.mxu0 0
        %1314 = vmatmul.mubr.bf16.gmra.mrb[0].mxu0 %v1013
        %v1315 = vpop.f32.mrb[0].mxu0
        %v1316 = vadd.f32 %v1021, %v1315
        %v1317 = vpop.f32.mrb[0].mxu0
        %v1318 = vadd.f32 %v1025, %v1317
        %v1319 = vpop.f32.mrb[0].mxu0
        %v1320 = vadd.f32 %v1021, %v1319
        %v1321 = vpop.f32.mrb[0].mxu0
        %v1322 = vadd.f32 %v1025, %v1321
        %1323 = vmatprep.mubr.bf16.mxu0 0
        %1324 = vmatmul.mubr.bf16.gmra.mrb[0].mxu0 %v1014
        %v1325 = vpop.f32.mrb[0].mxu0
        %v1326 = vadd.f32 %v1021, %v1325
        %v1327 = vpop.f32.mrb[0].mxu0
        %v1328 = vadd.f32 %v1025, %v1327
        %v1329 = vpop.f32.mrb[0].mxu0
        %v1330 = vadd.f32 %v1021, %v1329
        %v1331 = vpop.f32.mrb[0].mxu0
        %v1332 = vadd.f32 %v1025, %v1331
        %1333 = vmatprep.mubr.bf16.mxu0 0
        %1334 = vmatmul.mubr.bf16.gmra.mrb[0].mxu0 %v1015
        %v1335 = vpop.f32.mrb[0].mxu0
        %v1336 = vadd.f32 %v1021, %v1335
        %v1337 = vpop.f32.mrb[0].mxu0
        %v1338 = vadd.f32 %v1025, %v1337
        %v1339 = vpop.f32.mrb[0].mxu0
        %v1340 = vadd.f32 %v1021, %v1339
        %v1341 = vpop.f32.mrb[0].mxu0
        %v1342 = vadd.f32 %v1025, %v1341
        %1343 = vmatprep.mubr.bf16.mxu0 0
        %1344 = vmatmul.mubr.bf16.gmra.mrb[0].mxu0 %v1016
        %v1345 = vpop.f32.mrb[0].mxu0
        %v1346 = vadd.f32 %v1021, %v1345
        %v1347 = vpop.f32.mrb[0].mxu0
        %v1348 = vadd.f32 %v1025, %v1347
        %v1349 = vpop.f32.mrb[0].mxu0
        %v1350 = vadd.f32 %v1021, %v1349
        %v1351 = vpop.f32.mrb[0].mxu0
        %v1352 = vadd.f32 %v1025, %v1351
        %1353 = vdwg.mxu0
        %1354 = vmatprep.subr.bf16.mxu0 0
        %1355 = vmatpush1.bf16.msra.mxu0 %v1115
        %1356 = vmatprep.subr.bf16.mxu0 0
        %1357 = vmatpush1.bf16.msra.mxu0 %v1118
        %1358 = vmatprep.subr.bf16.mxu0 0
        %1359 = vmatpush1.bf16.msra.mxu0 %v1121
        %1360 = vmatprep.subr.bf16.mxu0 0
        %1361 = vmatpush1.bf16.msra.mxu0 %v1124
        %1362 = vmatprep.subr.bf16.mxu0 0
        %1363 = vmatpush1.bf16.msra.mxu0 %v1127
        %1364 = vmatprep.subr.bf16.mxu0 0
        %1365 = vmatpush1.bf16.msra.mxu0 %v1130
        %1366 = vmatprep.subr.bf16.mxu0 0
        %1367 = vmatpush1.bf16.msra.mxu0 %v1133
        %1368 = vmatprep.subr.bf16.mxu0 0
        %1369 = vmatpush1.bf16.msra.mxu0 %v1136
        %1370 = vmatprep.subr.bf16.mxu0 0
        %1371 = vmatpush1.bf16.msra.mxu0 0
        %1372 = vmatprep.subr.bf16.mxu0 0
        %1373 = vmatpush1.bf16.msra.mxu0 0
        %1374 = vmatprep.subr.bf16.mxu0 0
        %1375 = vmatpush1.bf16.msra.mxu0 0
        %1376 = vmatprep.subr.bf16.mxu0 0
        %1377 = vmatpush1.bf16.msra.mxu0 0
        %1378 = vmatprep.subr.bf16.mxu0 0
        %1379 = vmatpush1.bf16.msra.mxu0 0
        %1380 = vmatprep.subr.bf16.mxu0 0
        %1381 = vmatpush1.bf16.msra.mxu0 0
        %1382 = vmatprep.subr.bf16.mxu0 0
        %1383 = vmatpush1.bf16.msra.mxu0 0
        %1384 = vmatprep.subr.bf16.mxu0 0
        %1385 = vmatpush1.bf16.msra.mxu0 0
        %1386 = vmatprep.mubr.bf16.mxu0 0
        %1387 = vmatmul.mubr.bf16.gmra.mrb[0].mxu0 %v1001
        %v1388 = vpop.f32.mrb[0].mxu0
        %v1389 = vadd.f32 %v1029, %v1388
        %v1390 = vpop.f32.mrb[0].mxu0
        %v1391 = vpop.f32.mrb[0].mxu0
        %v1392 = vadd.f32 %v1029, %v1391
        %v1393 = vpop.f32.mrb[0].mxu0
        %1394 = vmatprep.mubr.bf16.mxu0 0
        %1395 = vmatmul.mubr.bf16.gmra.mrb[0].mxu0 %v1002
        %v1396 = vpop.f32.mrb[0].mxu0
        %v1397 = vadd.f32 %v1029, %v1396
        %v1398 = vpop.f32.mrb[0].mxu0
        %v1399 = vpop.f32.mrb[0].mxu0
        %v1400 = vadd.f32 %v1029, %v1399
        %v1401 = vpop.f32.mrb[0].mxu0
        %1402 = vmatprep.mubr.bf16.mxu0 0
        %1403 = vmatmul.mubr.bf16.gmra.mrb[0].mxu0 %v1003
        %v1404 = vpop.f32.mrb[0].mxu0
        %v1405 = vadd.f32 %v1029, %v1404
        %v1406 = vpop.f32.mrb[0].mxu0
        %v1407 = vpop.f32.mrb[0].mxu0
        %v1408 = vadd.f32 %v1029, %v1407
        %v1409 = vpop.f32.mrb[0].mxu0
        %1410 = vmatprep.mubr.bf16.mxu0 0
        %1411 = vmatmul.mubr.bf16.gmra.mrb[0].mxu0 %v1004
        %v1412 = vpop.f32.mrb[0].mxu0
        %v1413 = vadd.f32 %v1029, %v1412
        %v1414 = vpop.f32.mrb[0].mxu0
        %v1415 = vpop.f32.mrb[0].mxu0
        %v1416 = vadd.f32 %v1029, %v1415
        %v1417 = vpop.f32.mrb[0].mxu0
        %1418 = vmatprep.mubr.bf16.mxu0 0
        %1419 = vmatmul.mubr.bf16.gmra.mrb[0].mxu0 %v1005
        %v1420 = vpop.f32.mrb[0].mxu0
        %v1421 = vadd.f32 %v1029, %v1420
        %v1422 = vpop.f32.mrb[0].mxu0
        %v1423 = vpop.f32.mrb[0].mxu0
        %v1424 = vadd.f32 %v1029, %v1423
        %v1425 = vpop.f32.mrb[0].mxu0
        %1426 = vmatprep.mubr.bf16.mxu0 0
        %1427 = vmatmul.mubr.bf16.gmra.mrb[0].mxu0 %v1006
        %v1428 = vpop.f32.mrb[0].mxu0
        %v1429 = vadd.f32 %v1029, %v1428
        %v1430 = vpop.f32.mrb[0].mxu0
        %v1431 = vpop.f32.mrb[0].mxu0
        %v1432 = vadd.f32 %v1029, %v1431
        %v1433 = vpop.f32.mrb[0].mxu0
        %1434 = vmatprep.mubr.bf16.mxu0 0
        %1435 = vmatmul.mubr.bf16.gmra.mrb[0].mxu0 %v1007
        %v1436 = vpop.f32.mrb[0].mxu0
        %v1437 = vadd.f32 %v1029, %v1436
        %v1438 = vpop.f32.mrb[0].mxu0
        %v1439 = vpop.f32.mrb[0].mxu0
        %v1440 = vadd.f32 %v1029, %v1439
        %v1441 = vpop.f32.mrb[0].mxu0
        %1442 = vmatprep.mubr.bf16.mxu0 0
        %1443 = vmatmul.mubr.bf16.gmra.mrb[0].mxu0 %v1008
        %v1444 = vpop.f32.mrb[0].mxu0
        %v1445 = vadd.f32 %v1029, %v1444
        %v1446 = vpop.f32.mrb[0].mxu0
        %v1447 = vpop.f32.mrb[0].mxu0
        %v1448 = vadd.f32 %v1029, %v1447
        %v1449 = vpop.f32.mrb[0].mxu0
        %1450 = vmatprep.mubr.bf16.mxu0 0
        %1451 = vmatmul.mubr.bf16.gmra.mrb[0].mxu0 %v1009
        %v1452 = vpop.f32.mrb[0].mxu0
        %v1453 = vadd.f32 %v1029, %v1452
        %v1454 = vpop.f32.mrb[0].mxu0
        %v1455 = vpop.f32.mrb[0].mxu0
        %v1456 = vadd.f32 %v1029, %v1455
        %v1457 = vpop.f32.mrb[0].mxu0
        %1458 = vmatprep.mubr.bf16.mxu0 0
        %1459 = vmatmul.mubr.bf16.gmra.mrb[0].mxu0 %v1010
        %v1460 = vpop.f32.mrb[0].mxu0
        %v1461 = vadd.f32 %v1029, %v1460
        %v1462 = vpop.f32.mrb[0].mxu0
        %v1463 = vpop.f32.mrb[0].mxu0
        %v1464 = vadd.f32 %v1029, %v1463
        %v1465 = vpop.f32.mrb[0].mxu0
        %1466 = vmatprep.mubr.bf16.mxu0 0
        %1467 = vmatmul.mubr.bf16.gmra.mrb[0].mxu0 %v1011
        %v1468 = vpop.f32.mrb[0].mxu0
        %v1469 = vadd.f32 %v1029, %v1468
        %v1470 = vpop.f32.mrb[0].mxu0
        %v1471 = vpop.f32.mrb[0].mxu0
        %v1472 = vadd.f32 %v1029, %v1471
        %v1473 = vpop.f32.mrb[0].mxu0
        %1474 = vmatprep.mubr.bf16.mxu0 0
        %1475 = vmatmul.mubr.bf16.gmra.mrb[0].mxu0 %v1012
        %v1476 = vpop.f32.mrb[0].mxu0
        %v1477 = vadd.f32 %v1029, %v1476
        %v1478 = vpop.f32.mrb[0].mxu0
        %v1479 = vpop.f32.mrb[0].mxu0
        %v1480 = vadd.f32 %v1029, %v1479
        %v1481 = vpop.f32.mrb[0].mxu0
        %1482 = vmatprep.mubr.bf16.mxu0 0
        %1483 = vmatmul.mubr.bf16.gmra.mrb[0].mxu0 %v1013
        %v1484 = vpop.f32.mrb[0].mxu0
        %v1485 = vadd.f32 %v1029, %v1484
        %v1486 = vpop.f32.mrb[0].mxu0
        %v1487 = vpop.f32.mrb[0].mxu0
        %v1488 = vadd.f32 %v1029, %v1487
        %v1489 = vpop.f32.mrb[0].mxu0
        %1490 = vmatprep.mubr.bf16.mxu0 0
        %1491 = vmatmul.mubr.bf16.gmra.mrb[0].mxu0 %v1014
        %v1492 = vpop.f32.mrb[0].mxu0
        %v1493 = vadd.f32 %v1029, %v1492
        %v1494 = vpop.f32.mrb[0].mxu0
        %v1495 = vpop.f32.mrb[0].mxu0
        %v1496 = vadd.f32 %v1029, %v1495
        %v1497 = vpop.f32.mrb[0].mxu0
        %1498 = vmatprep.mubr.bf16.mxu0 0
        %1499 = vmatmul.mubr.bf16.gmra.mrb[0].mxu0 %v1015
        %v1500 = vpop.f32.mrb[0].mxu0
        %v1501 = vadd.f32 %v1029, %v1500
        %v1502 = vpop.f32.mrb[0].mxu0
        %v1503 = vpop.f32.mrb[0].mxu0
        %v1504 = vadd.f32 %v1029, %v1503
        %v1505 = vpop.f32.mrb[0].mxu0
        %1506 = vmatprep.mubr.bf16.mxu0 0
        %1507 = vmatmul.mubr.bf16.gmra.mrb[0].mxu0 %v1016
        %v1508 = vpop.f32.mrb[0].mxu0
        %v1509 = vadd.f32 %v1029, %v1508
        %v1510 = vpop.f32.mrb[0].mxu0
        %v1511 = vpop.f32.mrb[0].mxu0
        %v1512 = vadd.f32 %v1029, %v1511
        %v1513 = vpop.f32.mrb[0].mxu0
        %1514 = vdwg.mxu0
        %v1515 = vpack.c.bf16 %v1196, %v1196
        %v1516 = vpack.c.bf16 %v1200, %v1200
        %v1517 = vpack.c.bf16 %v1206, %v1206
        %v1518 = vpack.c.bf16 %v1210, %v1210
        %v1519 = vpack.c.bf16 %v1216, %v1216
        %v1520 = vpack.c.bf16 %v1220, %v1220
        %v1521 = vpack.c.bf16 %v1226, %v1226
        %v1522 = vpack.c.bf16 %v1230, %v1230
        %v1523 = vpack.c.bf16 %v1236, %v1236
        %v1524 = vpack.c.bf16 %v1240, %v1240
        %v1525 = vpack.c.bf16 %v1246, %v1246
        %v1526 = vpack.c.bf16 %v1250, %v1250
        %v1527 = vpack.c.bf16 %v1256, %v1256
        %v1528 = vpack.c.bf16 %v1260, %v1260
        %v1529 = vpack.c.bf16 %v1266, %v1266
        %v1530 = vpack.c.bf16 %v1270, %v1270
        %v1531 = vpack.c.bf16 %v1276, %v1276
        %v1532 = vpack.c.bf16 %v1280, %v1280
        %v1533 = vpack.c.bf16 %v1286, %v1286
        %v1534 = vpack.c.bf16 %v1290, %v1290
        %v1535 = vpack.c.bf16 %v1296, %v1296
        %v1536 = vpack.c.bf16 %v1300, %v1300
        %v1537 = vpack.c.bf16 %v1306, %v1306
        %v1538 = vpack.c.bf16 %v1310, %v1310
        %v1539 = vpack.c.bf16 %v1316, %v1316
        %v1540 = vpack.c.bf16 %v1320, %v1320
        %v1541 = vpack.c.bf16 %v1326, %v1326
        %v1542 = vpack.c.bf16 %v1330, %v1330
        %v1543 = vpack.c.bf16 %v1336, %v1336
        %v1544 = vpack.c.bf16 %v1340, %v1340
        %v1545 = vpack.c.bf16 %v1346, %v1346
        %v1546 = vpack.c.bf16 %v1350, %v1350
        %v1547 = vpack.c.bf16 %v1198, %v1198
        %v1548 = vpack.c.bf16 %v1202, %v1202
        %v1549 = vpack.c.bf16 %v1208, %v1208
        %v1550 = vpack.c.bf16 %v1212, %v1212
        %v1551 = vpack.c.bf16 %v1218, %v1218
        %v1552 = vpack.c.bf16 %v1222, %v1222
        %v1553 = vpack.c.bf16 %v1228, %v1228
        %v1554 = vpack.c.bf16 %v1232, %v1232
        %v1555 = vpack.c.bf16 %v1238, %v1238
        %v1556 = vpack.c.bf16 %v1242, %v1242
        %v1557 = vpack.c.bf16 %v1248, %v1248
        %v1558 = vpack.c.bf16 %v1252, %v1252
        %v1559 = vpack.c.bf16 %v1258, %v1258
        %v1560 = vpack.c.bf16 %v1262, %v1262
        %v1561 = vpack.c.bf16 %v1268, %v1268
        %v1562 = vpack.c.bf16 %v1272, %v1272
        %v1563 = vpack.c.bf16 %v1278, %v1278
        %v1564 = vpack.c.bf16 %v1282, %v1282
        %v1565 = vpack.c.bf16 %v1288, %v1288
        %v1566 = vpack.c.bf16 %v1292, %v1292
        %v1567 = vpack.c.bf16 %v1298, %v1298
        %v1568 = vpack.c.bf16 %v1302, %v1302
        %v1569 = vpack.c.bf16 %v1308, %v1308
        %v1570 = vpack.c.bf16 %v1312, %v1312
        %v1571 = vpack.c.bf16 %v1318, %v1318
        %v1572 = vpack.c.bf16 %v1322, %v1322
        %v1573 = vpack.c.bf16 %v1328, %v1328
        %v1574 = vpack.c.bf16 %v1332, %v1332
        %v1575 = vpack.c.bf16 %v1338, %v1338
        %v1576 = vpack.c.bf16 %v1342, %v1342
        %v1577 = vpack.c.bf16 %v1348, %v1348
        %v1578 = vpack.c.bf16 %v1352, %v1352
        %1579 = vmatprep.subr.bf16.mxu0 0
        %1580 = vmatpush1.bf16.xpose.msra.mxu0 %v1547
        %1581 = vmatprep.subr.bf16.mxu0 0
        %1582 = vmatpush1.bf16.xpose.msra.mxu0 0
        %1583 = vmatprep.subr.bf16.mxu0 0
        %1584 = vmatpush1.bf16.xpose.msra.mxu0 0
        %1585 = vmatprep.subr.bf16.mxu0 0
        %1586 = vmatpush1.bf16.xpose.msra.mxu0 0
        %1587 = vmatprep.subr.bf16.mxu0 0
        %1588 = vmatpush1.bf16.xpose.msra.mxu0 0
        %1589 = vmatprep.subr.bf16.mxu0 0
        %1590 = vmatpush1.bf16.xpose.msra.mxu0 0
        %1591 = vmatprep.subr.bf16.mxu0 0
        %1592 = vmatpush1.bf16.xpose.msra.mxu0 0
        %1593 = vmatprep.subr.bf16.mxu0 0
        %1594 = vmatpush1.bf16.xpose.msra.mxu0 0
        %1595 = vmatprep.subr.bf16.mxu0 0
        %1596 = vmatpush1.bf16.xpose.msra.mxu0 0
        %1597 = vmatprep.subr.bf16.mxu0 0
        %1598 = vmatpush1.bf16.xpose.msra.mxu0 0
        %1599 = vmatprep.subr.bf16.mxu0 0
        %1600 = vmatpush1.bf16.xpose.msra.mxu0 0
        %1601 = vmatprep.subr.bf16.mxu0 0
        %1602 = vmatpush1.bf16.xpose.msra.mxu0 0
        %1603 = vmatprep.subr.bf16.mxu0 0
        %1604 = vmatpush1.bf16.xpose.msra.mxu0 0
        %1605 = vmatprep.subr.bf16.mxu0 0
        %1606 = vmatpush1.bf16.xpose.msra.mxu0 0
        %1607 = vmatprep.subr.bf16.mxu0 0
        %1608 = vmatpush1.bf16.xpose.msra.mxu0 0
        %1609 = vmatprep.subr.bf16.mxu0 0
        %1610 = vmatpush1.bf16.xpose.msra.mxu0 0
        %1611 = vmatprep.mubr.bf16.mxu0 0
        %1612 = vmatmul.mubr.bf16.gmra.mrb[0].mxu0 %v1515
        %v1613 = vpop.f32.mrb[0].mxu0
        %v1614 = vadd.f32 0.0, %v1613
        %v1615 = vpop.f32.mrb[0].mxu0
        %v1616 = vpop.f32.mrb[0].mxu0
        %v1617 = vpop.f32.mrb[0].mxu0
        %1618 = vdwg.mxu0
        %1619 = vmatprep.subr.bf16.mxu0 0
        %1620 = vmatpush1.bf16.xpose.msra.mxu0 %v1548
        %1621 = vmatprep.subr.bf16.mxu0 0
        %1622 = vmatpush1.bf16.xpose.msra.mxu0 0
        %1623 = vmatprep.subr.bf16.mxu0 0
        %1624 = vmatpush1.bf16.xpose.msra.mxu0 0
        %1625 = vmatprep.subr.bf16.mxu0 0
        %1626 = vmatpush1.bf16.xpose.msra.mxu0 0
        %1627 = vmatprep.subr.bf16.mxu0 0
        %1628 = vmatpush1.bf16.xpose.msra.mxu0 0
        %1629 = vmatprep.subr.bf16.mxu0 0
        %1630 = vmatpush1.bf16.xpose.msra.mxu0 0
        %1631 = vmatprep.subr.bf16.mxu0 0
        %1632 = vmatpush1.bf16.xpose.msra.mxu0 0
        %1633 = vmatprep.subr.bf16.mxu0 0
        %1634 = vmatpush1.bf16.xpose.msra.mxu0 0
        %1635 = vmatprep.subr.bf16.mxu0 0
        %1636 = vmatpush1.bf16.xpose.msra.mxu0 0
        %1637 = vmatprep.subr.bf16.mxu0 0
        %1638 = vmatpush1.bf16.xpose.msra.mxu0 0
        %1639 = vmatprep.subr.bf16.mxu0 0
        %1640 = vmatpush1.bf16.xpose.msra.mxu0 0
        %1641 = vmatprep.subr.bf16.mxu0 0
        %1642 = vmatpush1.bf16.xpose.msra.mxu0 0
        %1643 = vmatprep.subr.bf16.mxu0 0
        %1644 = vmatpush1.bf16.xpose.msra.mxu0 0
        %1645 = vmatprep.subr.bf16.mxu0 0
        %1646 = vmatpush1.bf16.xpose.msra.mxu0 0
        %1647 = vmatprep.subr.bf16.mxu0 0
        %1648 = vmatpush1.bf16.xpose.msra.mxu0 0
        %1649 = vmatprep.subr.bf16.mxu0 0
        %1650 = vmatpush1.bf16.xpose.msra.mxu0 0
        %1651 = vmatprep.mubr.bf16.mxu0 0
        %1652 = vmatmul.mubr.bf16.gmra.mrb[0].mxu0 %v1516
        %v1653 = vpop.f32.mrb[0].mxu0
        %v1654 = vadd.f32 0.0, %v1653
        %v1655 = vpop.f32.mrb[0].mxu0
        %v1656 = vpop.f32.mrb[0].mxu0
        %v1657 = vpop.f32.mrb[0].mxu0
        %1658 = vdwg.mxu0
        %1659 = vmatprep.subr.bf16.mxu0 0
        %1660 = vmatpush1.bf16.xpose.msra.mxu0 %v1549
        %1661 = vmatprep.subr.bf16.mxu0 0
        %1662 = vmatpush1.bf16.xpose.msra.mxu0 0
        %1663 = vmatprep.subr.bf16.mxu0 0
        %1664 = vmatpush1.bf16.xpose.msra.mxu0 0
        %1665 = vmatprep.subr.bf16.mxu0 0
        %1666 = vmatpush1.bf16.xpose.msra.mxu0 0
        %1667 = vmatprep.subr.bf16.mxu0 0
        %1668 = vmatpush1.bf16.xpose.msra.mxu0 0
        %1669 = vmatprep.subr.bf16.mxu0 0
        %1670 = vmatpush1.bf16.xpose.msra.mxu0 0
        %1671 = vmatprep.subr.bf16.mxu0 0
        %1672 = vmatpush1.bf16.xpose.msra.mxu0 0
        %1673 = vmatprep.subr.bf16.mxu0 0
        %1674 = vmatpush1.bf16.xpose.msra.mxu0 0
        %1675 = vmatprep.subr.bf16.mxu0 0
        %1676 = vmatpush1.bf16.xpose.msra.mxu0 0
        %1677 = vmatprep.subr.bf16.mxu0 0
        %1678 = vmatpush1.bf16.xpose.msra.mxu0 0
        %1679 = vmatprep.subr.bf16.mxu0 0
        %1680 = vmatpush1.bf16.xpose.msra.mxu0 0
        %1681 = vmatprep.subr.bf16.mxu0 0
        %1682 = vmatpush1.bf16.xpose.msra.mxu0 0
        %1683 = vmatprep.subr.bf16.mxu0 0
        %1684 = vmatpush1.bf16.xpose.msra.mxu0 0
        %1685 = vmatprep.subr.bf16.mxu0 0
        %1686 = vmatpush1.bf16.xpose.msra.mxu0 0
        %1687 = vmatprep.subr.bf16.mxu0 0
        %1688 = vmatpush1.bf16.xpose.msra.mxu0 0
        %1689 = vmatprep.subr.bf16.mxu0 0
        %1690 = vmatpush1.bf16.xpose.msra.mxu0 0
        %1691 = vmatprep.mubr.bf16.mxu0 0
        %1692 = vmatmul.mubr.bf16.gmra.mrb[0].mxu0 %v1517
        %v1693 = vpop.f32.mrb[0].mxu0
        %v1694 = vadd.f32 0.0, %v1693
        %v1695 = vpop.f32.mrb[0].mxu0
        %v1696 = vpop.f32.mrb[0].mxu0
        %v1697 = vpop.f32.mrb[0].mxu0
        %1698 = vdwg.mxu0
        %1699 = vmatprep.subr.bf16.mxu0 0
        %1700 = vmatpush1.bf16.xpose.msra.mxu0 %v1550
        %1701 = vmatprep.subr.bf16.mxu0 0
        %1702 = vmatpush1.bf16.xpose.msra.mxu0 0
        %1703 = vmatprep.subr.bf16.mxu0 0
        %1704 = vmatpush1.bf16.xpose.msra.mxu0 0
        %1705 = vmatprep.subr.bf16.mxu0 0
        %1706 = vmatpush1.bf16.xpose.msra.mxu0 0
        %1707 = vmatprep.subr.bf16.mxu0 0
        %1708 = vmatpush1.bf16.xpose.msra.mxu0 0
        %1709 = vmatprep.subr.bf16.mxu0 0
        %1710 = vmatpush1.bf16.xpose.msra.mxu0 0
        %1711 = vmatprep.subr.bf16.mxu0 0
        %1712 = vmatpush1.bf16.xpose.msra.mxu0 0
        %1713 = vmatprep.subr.bf16.mxu0 0
        %1714 = vmatpush1.bf16.xpose.msra.mxu0 0
        %1715 = vmatprep.subr.bf16.mxu0 0
        %1716 = vmatpush1.bf16.xpose.msra.mxu0 0
        %1717 = vmatprep.subr.bf16.mxu0 0
        %1718 = vmatpush1.bf16.xpose.msra.mxu0 0
        %1719 = vmatprep.subr.bf16.mxu0 0
        %1720 = vmatpush1.bf16.xpose.msra.mxu0 0
        %1721 = vmatprep.subr.bf16.mxu0 0
        %1722 = vmatpush1.bf16.xpose.msra.mxu0 0
        %1723 = vmatprep.subr.bf16.mxu0 0
        %1724 = vmatpush1.bf16.xpose.msra.mxu0 0
        %1725 = vmatprep.subr.bf16.mxu0 0
        %1726 = vmatpush1.bf16.xpose.msra.mxu0 0
        %1727 = vmatprep.subr.bf16.mxu0 0
        %1728 = vmatpush1.bf16.xpose.msra.mxu0 0
        %1729 = vmatprep.subr.bf16.mxu0 0
        %1730 = vmatpush1.bf16.xpose.msra.mxu0 0
        %1731 = vmatprep.mubr.bf16.mxu0 0
        %1732 = vmatmul.mubr.bf16.gmra.mrb[0].mxu0 %v1518
        %v1733 = vpop.f32.mrb[0].mxu0
        %v1734 = vadd.f32 0.0, %v1733
        %v1735 = vpop.f32.mrb[0].mxu0
        %v1736 = vpop.f32.mrb[0].mxu0
        %v1737 = vpop.f32.mrb[0].mxu0
        %1738 = vdwg.mxu0
        %1739 = vmatprep.subr.bf16.mxu0 0
        %1740 = vmatpush1.bf16.xpose.msra.mxu0 %v1551
        %1741 = vmatprep.subr.bf16.mxu0 0
        %1742 = vmatpush1.bf16.xpose.msra.mxu0 0
        %1743 = vmatprep.subr.bf16.mxu0 0
        %1744 = vmatpush1.bf16.xpose.msra.mxu0 0
        %1745 = vmatprep.subr.bf16.mxu0 0
        %1746 = vmatpush1.bf16.xpose.msra.mxu0 0
        %1747 = vmatprep.subr.bf16.mxu0 0
        %1748 = vmatpush1.bf16.xpose.msra.mxu0 0
        %1749 = vmatprep.subr.bf16.mxu0 0
        %1750 = vmatpush1.bf16.xpose.msra.mxu0 0
        %1751 = vmatprep.subr.bf16.mxu0 0
        %1752 = vmatpush1.bf16.xpose.msra.mxu0 0
        %1753 = vmatprep.subr.bf16.mxu0 0
        %1754 = vmatpush1.bf16.xpose.msra.mxu0 0
        %1755 = vmatprep.subr.bf16.mxu0 0
        %1756 = vmatpush1.bf16.xpose.msra.mxu0 0
        %1757 = vmatprep.subr.bf16.mxu0 0
        %1758 = vmatpush1.bf16.xpose.msra.mxu0 0
        %1759 = vmatprep.subr.bf16.mxu0 0
        %1760 = vmatpush1.bf16.xpose.msra.mxu0 0
        %1761 = vmatprep.subr.bf16.mxu0 0
        %1762 = vmatpush1.bf16.xpose.msra.mxu0 0
        %1763 = vmatprep.subr.bf16.mxu0 0
        %1764 = vmatpush1.bf16.xpose.msra.mxu0 0
        %1765 = vmatprep.subr.bf16.mxu0 0
        %1766 = vmatpush1.bf16.xpose.msra.mxu0 0
        %1767 = vmatprep.subr.bf16.mxu0 0
        %1768 = vmatpush1.bf16.xpose.msra.mxu0 0
        %1769 = vmatprep.subr.bf16.mxu0 0
        %1770 = vmatpush1.bf16.xpose.msra.mxu0 0
        %1771 = vmatprep.mubr.bf16.mxu0 0
        %1772 = vmatmul.mubr.bf16.gmra.mrb[0].mxu0 %v1519
        %v1773 = vpop.f32.mrb[0].mxu0
        %v1774 = vadd.f32 0.0, %v1773
        %v1775 = vpop.f32.mrb[0].mxu0
        %v1776 = vpop.f32.mrb[0].mxu0
        %v1777 = vpop.f32.mrb[0].mxu0
        %1778 = vdwg.mxu0
        %1779 = vmatprep.subr.bf16.mxu0 0
        %1780 = vmatpush1.bf16.xpose.msra.mxu0 %v1552
        %1781 = vmatprep.subr.bf16.mxu0 0
        %1782 = vmatpush1.bf16.xpose.msra.mxu0 0
        %1783 = vmatprep.subr.bf16.mxu0 0
        %1784 = vmatpush1.bf16.xpose.msra.mxu0 0
        %1785 = vmatprep.subr.bf16.mxu0 0
        %1786 = vmatpush1.bf16.xpose.msra.mxu0 0
        %1787 = vmatprep.subr.bf16.mxu0 0
        %1788 = vmatpush1.bf16.xpose.msra.mxu0 0
        %1789 = vmatprep.subr.bf16.mxu0 0
        %1790 = vmatpush1.bf16.xpose.msra.mxu0 0
        %1791 = vmatprep.subr.bf16.mxu0 0
        %1792 = vmatpush1.bf16.xpose.msra.mxu0 0
        %1793 = vmatprep.subr.bf16.mxu0 0
        %1794 = vmatpush1.bf16.xpose.msra.mxu0 0
        %1795 = vmatprep.subr.bf16.mxu0 0
        %1796 = vmatpush1.bf16.xpose.msra.mxu0 0
        %1797 = vmatprep.subr.bf16.mxu0 0
        %1798 = vmatpush1.bf16.xpose.msra.mxu0 0
        %1799 = vmatprep.subr.bf16.mxu0 0
        %1800 = vmatpush1.bf16.xpose.msra.mxu0 0
        %1801 = vmatprep.subr.bf16.mxu0 0
        %1802 = vmatpush1.bf16.xpose.msra.mxu0 0
        %1803 = vmatprep.subr.bf16.mxu0 0
        %1804 = vmatpush1.bf16.xpose.msra.mxu0 0
        %1805 = vmatprep.subr.bf16.mxu0 0
        %1806 = vmatpush1.bf16.xpose.msra.mxu0 0
        %1807 = vmatprep.subr.bf16.mxu0 0
        %1808 = vmatpush1.bf16.xpose.msra.mxu0 0
        %1809 = vmatprep.subr.bf16.mxu0 0
        %1810 = vmatpush1.bf16.xpose.msra.mxu0 0
        %1811 = vmatprep.mubr.bf16.mxu0 0
        %1812 = vmatmul.mubr.bf16.gmra.mrb[0].mxu0 %v1520
        %v1813 = vpop.f32.mrb[0].mxu0
        %v1814 = vadd.f32 0.0, %v1813
        %v1815 = vpop.f32.mrb[0].mxu0
        %v1816 = vpop.f32.mrb[0].mxu0
        %v1817 = vpop.f32.mrb[0].mxu0
        %1818 = vdwg.mxu0
        %1819 = vmatprep.subr.bf16.mxu0 0
        %1820 = vmatpush1.bf16.xpose.msra.mxu0 %v1553
        %1821 = vmatprep.subr.bf16.mxu0 0
        %1822 = vmatpush1.bf16.xpose.msra.mxu0 0
        %1823 = vmatprep.subr.bf16.mxu0 0
        %1824 = vmatpush1.bf16.xpose.msra.mxu0 0
        %1825 = vmatprep.subr.bf16.mxu0 0
        %1826 = vmatpush1.bf16.xpose.msra.mxu0 0
        %1827 = vmatprep.subr.bf16.mxu0 0
        %1828 = vmatpush1.bf16.xpose.msra.mxu0 0
        %1829 = vmatprep.subr.bf16.mxu0 0
        %1830 = vmatpush1.bf16.xpose.msra.mxu0 0
        %1831 = vmatprep.subr.bf16.mxu0 0
        %1832 = vmatpush1.bf16.xpose.msra.mxu0 0
        %1833 = vmatprep.subr.bf16.mxu0 0
        %1834 = vmatpush1.bf16.xpose.msra.mxu0 0
        %1835 = vmatprep.subr.bf16.mxu0 0
        %1836 = vmatpush1.bf16.xpose.msra.mxu0 0
        %1837 = vmatprep.subr.bf16.mxu0 0
        %1838 = vmatpush1.bf16.xpose.msra.mxu0 0
        %1839 = vmatprep.subr.bf16.mxu0 0
        %1840 = vmatpush1.bf16.xpose.msra.mxu0 0
        %1841 = vmatprep.subr.bf16.mxu0 0
        %1842 = vmatpush1.bf16.xpose.msra.mxu0 0
        %1843 = vmatprep.subr.bf16.mxu0 0
        %1844 = vmatpush1.bf16.xpose.msra.mxu0 0
        %1845 = vmatprep.subr.bf16.mxu0 0
        %1846 = vmatpush1.bf16.xpose.msra.mxu0 0
        %1847 = vmatprep.subr.bf16.mxu0 0
        %1848 = vmatpush1.bf16.xpose.msra.mxu0 0
        %1849 = vmatprep.subr.bf16.mxu0 0
        %1850 = vmatpush1.bf16.xpose.msra.mxu0 0
        %1851 = vmatprep.mubr.bf16.mxu0 0
        %1852 = vmatmul.mubr.bf16.gmra.mrb[0].mxu0 %v1521
        %v1853 = vpop.f32.mrb[0].mxu0
        %v1854 = vadd.f32 0.0, %v1853
        %v1855 = vpop.f32.mrb[0].mxu0
        %v1856 = vpop.f32.mrb[0].mxu0
        %v1857 = vpop.f32.mrb[0].mxu0
        %1858 = vdwg.mxu0
        %1859 = vmatprep.subr.bf16.mxu0 0
        %1860 = vmatpush1.bf16.xpose.msra.mxu0 %v1554
        %1861 = vmatprep.subr.bf16.mxu0 0
        %1862 = vmatpush1.bf16.xpose.msra.mxu0 0
        %1863 = vmatprep.subr.bf16.mxu0 0
        %1864 = vmatpush1.bf16.xpose.msra.mxu0 0
        %1865 = vmatprep.subr.bf16.mxu0 0
        %1866 = vmatpush1.bf16.xpose.msra.mxu0 0
        %1867 = vmatprep.subr.bf16.mxu0 0
        %1868 = vmatpush1.bf16.xpose.msra.mxu0 0
        %1869 = vmatprep.subr.bf16.mxu0 0
        %1870 = vmatpush1.bf16.xpose.msra.mxu0 0
        %1871 = vmatprep.subr.bf16.mxu0 0
        %1872 = vmatpush1.bf16.xpose.msra.mxu0 0
        %1873 = vmatprep.subr.bf16.mxu0 0
        %1874 = vmatpush1.bf16.xpose.msra.mxu0 0
        %1875 = vmatprep.subr.bf16.mxu0 0
        %1876 = vmatpush1.bf16.xpose.msra.mxu0 0
        %1877 = vmatprep.subr.bf16.mxu0 0
        %1878 = vmatpush1.bf16.xpose.msra.mxu0 0
        %1879 = vmatprep.subr.bf16.mxu0 0
        %1880 = vmatpush1.bf16.xpose.msra.mxu0 0
        %1881 = vmatprep.subr.bf16.mxu0 0
        %1882 = vmatpush1.bf16.xpose.msra.mxu0 0
        %1883 = vmatprep.subr.bf16.mxu0 0
        %1884 = vmatpush1.bf16.xpose.msra.mxu0 0
        %1885 = vmatprep.subr.bf16.mxu0 0
        %1886 = vmatpush1.bf16.xpose.msra.mxu0 0
        %1887 = vmatprep.subr.bf16.mxu0 0
        %1888 = vmatpush1.bf16.xpose.msra.mxu0 0
        %1889 = vmatprep.subr.bf16.mxu0 0
        %1890 = vmatpush1.bf16.xpose.msra.mxu0 0
        %1891 = vmatprep.mubr.bf16.mxu0 0
        %1892 = vmatmul.mubr.bf16.gmra.mrb[0].mxu0 %v1522
        %v1893 = vpop.f32.mrb[0].mxu0
        %v1894 = vadd.f32 0.0, %v1893
        %v1895 = vpop.f32.mrb[0].mxu0
        %v1896 = vpop.f32.mrb[0].mxu0
        %v1897 = vpop.f32.mrb[0].mxu0
        %1898 = vdwg.mxu0
        %1899 = vmatprep.subr.bf16.mxu0 0
        %1900 = vmatpush1.bf16.xpose.msra.mxu0 %v1555
        %1901 = vmatprep.subr.bf16.mxu0 0
        %1902 = vmatpush1.bf16.xpose.msra.mxu0 0
        %1903 = vmatprep.subr.bf16.mxu0 0
        %1904 = vmatpush1.bf16.xpose.msra.mxu0 0
        %1905 = vmatprep.subr.bf16.mxu0 0
        %1906 = vmatpush1.bf16.xpose.msra.mxu0 0
        %1907 = vmatprep.subr.bf16.mxu0 0
        %1908 = vmatpush1.bf16.xpose.msra.mxu0 0
        %1909 = vmatprep.subr.bf16.mxu0 0
        %1910 = vmatpush1.bf16.xpose.msra.mxu0 0
        %1911 = vmatprep.subr.bf16.mxu0 0
        %1912 = vmatpush1.bf16.xpose.msra.mxu0 0
        %1913 = vmatprep.subr.bf16.mxu0 0
        %1914 = vmatpush1.bf16.xpose.msra.mxu0 0
        %1915 = vmatprep.subr.bf16.mxu0 0
        %1916 = vmatpush1.bf16.xpose.msra.mxu0 0
        %1917 = vmatprep.subr.bf16.mxu0 0
        %1918 = vmatpush1.bf16.xpose.msra.mxu0 0
        %1919 = vmatprep.subr.bf16.mxu0 0
        %1920 = vmatpush1.bf16.xpose.msra.mxu0 0
        %1921 = vmatprep.subr.bf16.mxu0 0
        %1922 = vmatpush1.bf16.xpose.msra.mxu0 0
        %1923 = vmatprep.subr.bf16.mxu0 0
        %1924 = vmatpush1.bf16.xpose.msra.mxu0 0
        %1925 = vmatprep.subr.bf16.mxu0 0
        %1926 = vmatpush1.bf16.xpose.msra.mxu0 0
        %1927 = vmatprep.subr.bf16.mxu0 0
        %1928 = vmatpush1.bf16.xpose.msra.mxu0 0
        %1929 = vmatprep.subr.bf16.mxu0 0
        %1930 = vmatpush1.bf16.xpose.msra.mxu0 0
        %1931 = vmatprep.mubr.bf16.mxu0 0
        %1932 = vmatmul.mubr.bf16.gmra.mrb[0].mxu0 %v1523
        %v1933 = vpop.f32.mrb[0].mxu0
        %v1934 = vadd.f32 0.0, %v1933
        %v1935 = vpop.f32.mrb[0].mxu0
        %v1936 = vpop.f32.mrb[0].mxu0
        %v1937 = vpop.f32.mrb[0].mxu0
        %1938 = vdwg.mxu0
        %1939 = vmatprep.subr.bf16.mxu0 0
        %1940 = vmatpush1.bf16.xpose.msra.mxu0 %v1556
        %1941 = vmatprep.subr.bf16.mxu0 0
        %1942 = vmatpush1.bf16.xpose.msra.mxu0 0
        %1943 = vmatprep.subr.bf16.mxu0 0
        %1944 = vmatpush1.bf16.xpose.msra.mxu0 0
        %1945 = vmatprep.subr.bf16.mxu0 0
        %1946 = vmatpush1.bf16.xpose.msra.mxu0 0
        %1947 = vmatprep.subr.bf16.mxu0 0
        %1948 = vmatpush1.bf16.xpose.msra.mxu0 0
        %1949 = vmatprep.subr.bf16.mxu0 0
        %1950 = vmatpush1.bf16.xpose.msra.mxu0 0
        %1951 = vmatprep.subr.bf16.mxu0 0
        %1952 = vmatpush1.bf16.xpose.msra.mxu0 0
        %1953 = vmatprep.subr.bf16.mxu0 0
        %1954 = vmatpush1.bf16.xpose.msra.mxu0 0
        %1955 = vmatprep.subr.bf16.mxu0 0
        %1956 = vmatpush1.bf16.xpose.msra.mxu0 0
        %1957 = vmatprep.subr.bf16.mxu0 0
        %1958 = vmatpush1.bf16.xpose.msra.mxu0 0
        %1959 = vmatprep.subr.bf16.mxu0 0
        %1960 = vmatpush1.bf16.xpose.msra.mxu0 0
        %1961 = vmatprep.subr.bf16.mxu0 0
        %1962 = vmatpush1.bf16.xpose.msra.mxu0 0
        %1963 = vmatprep.subr.bf16.mxu0 0
        %1964 = vmatpush1.bf16.xpose.msra.mxu0 0
        %1965 = vmatprep.subr.bf16.mxu0 0
        %1966 = vmatpush1.bf16.xpose.msra.mxu0 0
        %1967 = vmatprep.subr.bf16.mxu0 0
        %1968 = vmatpush1.bf16.xpose.msra.mxu0 0
        %1969 = vmatprep.subr.bf16.mxu0 0
        %1970 = vmatpush1.bf16.xpose.msra.mxu0 0
        %1971 = vmatprep.mubr.bf16.mxu0 0
        %1972 = vmatmul.mubr.bf16.gmra.mrb[0].mxu0 %v1524
        %v1973 = vpop.f32.mrb[0].mxu0
        %v1974 = vadd.f32 0.0, %v1973
        %v1975 = vpop.f32.mrb[0].mxu0
        %v1976 = vpop.f32.mrb[0].mxu0
        %v1977 = vpop.f32.mrb[0].mxu0
        %1978 = vdwg.mxu0
        %1979 = vmatprep.subr.bf16.mxu0 0
        %1980 = vmatpush1.bf16.xpose.msra.mxu0 %v1557
        %1981 = vmatprep.subr.bf16.mxu0 0
        %1982 = vmatpush1.bf16.xpose.msra.mxu0 0
        %1983 = vmatprep.subr.bf16.mxu0 0
        %1984 = vmatpush1.bf16.xpose.msra.mxu0 0
        %1985 = vmatprep.subr.bf16.mxu0 0
        %1986 = vmatpush1.bf16.xpose.msra.mxu0 0
        %1987 = vmatprep.subr.bf16.mxu0 0
        %1988 = vmatpush1.bf16.xpose.msra.mxu0 0
        %1989 = vmatprep.subr.bf16.mxu0 0
        %1990 = vmatpush1.bf16.xpose.msra.mxu0 0
        %1991 = vmatprep.subr.bf16.mxu0 0
        %1992 = vmatpush1.bf16.xpose.msra.mxu0 0
        %1993 = vmatprep.subr.bf16.mxu0 0
        %1994 = vmatpush1.bf16.xpose.msra.mxu0 0
        %1995 = vmatprep.subr.bf16.mxu0 0
        %1996 = vmatpush1.bf16.xpose.msra.mxu0 0
        %1997 = vmatprep.subr.bf16.mxu0 0
        %1998 = vmatpush1.bf16.xpose.msra.mxu0 0
        %1999 = vmatprep.subr.bf16.mxu0 0
        %2000 = vmatpush1.bf16.xpose.msra.mxu0 0
        %2001 = vmatprep.subr.bf16.mxu0 0
        %2002 = vmatpush1.bf16.xpose.msra.mxu0 0
        %2003 = vmatprep.subr.bf16.mxu0 0
        %2004 = vmatpush1.bf16.xpose.msra.mxu0 0
        %2005 = vmatprep.subr.bf16.mxu0 0
        %2006 = vmatpush1.bf16.xpose.msra.mxu0 0
        %2007 = vmatprep.subr.bf16.mxu0 0
        %2008 = vmatpush1.bf16.xpose.msra.mxu0 0
        %2009 = vmatprep.subr.bf16.mxu0 0
        %2010 = vmatpush1.bf16.xpose.msra.mxu0 0
        %2011 = vmatprep.mubr.bf16.mxu0 0
        %2012 = vmatmul.mubr.bf16.gmra.mrb[0].mxu0 %v1525
        %v2013 = vpop.f32.mrb[0].mxu0
        %v2014 = vadd.f32 0.0, %v2013
        %v2015 = vpop.f32.mrb[0].mxu0
        %v2016 = vpop.f32.mrb[0].mxu0
        %v2017 = vpop.f32.mrb[0].mxu0
        %2018 = vdwg.mxu0
        %2019 = vmatprep.subr.bf16.mxu0 0
        %2020 = vmatpush1.bf16.xpose.msra.mxu0 %v1558
        %2021 = vmatprep.subr.bf16.mxu0 0
        %2022 = vmatpush1.bf16.xpose.msra.mxu0 0
        %2023 = vmatprep.subr.bf16.mxu0 0
        %2024 = vmatpush1.bf16.xpose.msra.mxu0 0
        %2025 = vmatprep.subr.bf16.mxu0 0
        %2026 = vmatpush1.bf16.xpose.msra.mxu0 0
        %2027 = vmatprep.subr.bf16.mxu0 0
        %2028 = vmatpush1.bf16.xpose.msra.mxu0 0
        %2029 = vmatprep.subr.bf16.mxu0 0
        %2030 = vmatpush1.bf16.xpose.msra.mxu0 0
        %2031 = vmatprep.subr.bf16.mxu0 0
        %2032 = vmatpush1.bf16.xpose.msra.mxu0 0
        %2033 = vmatprep.subr.bf16.mxu0 0
        %2034 = vmatpush1.bf16.xpose.msra.mxu0 0
        %2035 = vmatprep.subr.bf16.mxu0 0
        %2036 = vmatpush1.bf16.xpose.msra.mxu0 0
        %2037 = vmatprep.subr.bf16.mxu0 0
        %2038 = vmatpush1.bf16.xpose.msra.mxu0 0
        %2039 = vmatprep.subr.bf16.mxu0 0
        %2040 = vmatpush1.bf16.xpose.msra.mxu0 0
        %2041 = vmatprep.subr.bf16.mxu0 0
        %2042 = vmatpush1.bf16.xpose.msra.mxu0 0
        %2043 = vmatprep.subr.bf16.mxu0 0
        %2044 = vmatpush1.bf16.xpose.msra.mxu0 0
        %2045 = vmatprep.subr.bf16.mxu0 0
        %2046 = vmatpush1.bf16.xpose.msra.mxu0 0
        %2047 = vmatprep.subr.bf16.mxu0 0
        %2048 = vmatpush1.bf16.xpose.msra.mxu0 0
        %2049 = vmatprep.subr.bf16.mxu0 0
        %2050 = vmatpush1.bf16.xpose.msra.mxu0 0
        %2051 = vmatprep.mubr.bf16.mxu0 0
        %2052 = vmatmul.mubr.bf16.gmra.mrb[0].mxu0 %v1526
        %v2053 = vpop.f32.mrb[0].mxu0
        %v2054 = vadd.f32 0.0, %v2053
        %v2055 = vpop.f32.mrb[0].mxu0
        %v2056 = vpop.f32.mrb[0].mxu0
        %v2057 = vpop.f32.mrb[0].mxu0
        %2058 = vdwg.mxu0
        %2059 = vmatprep.subr.bf16.mxu0 0
        %2060 = vmatpush1.bf16.xpose.msra.mxu0 %v1559
        %2061 = vmatprep.subr.bf16.mxu0 0
        %2062 = vmatpush1.bf16.xpose.msra.mxu0 0
        %2063 = vmatprep.subr.bf16.mxu0 0
        %2064 = vmatpush1.bf16.xpose.msra.mxu0 0
        %2065 = vmatprep.subr.bf16.mxu0 0
        %2066 = vmatpush1.bf16.xpose.msra.mxu0 0
        %2067 = vmatprep.subr.bf16.mxu0 0
        %2068 = vmatpush1.bf16.xpose.msra.mxu0 0
        %2069 = vmatprep.subr.bf16.mxu0 0
        %2070 = vmatpush1.bf16.xpose.msra.mxu0 0
        %2071 = vmatprep.subr.bf16.mxu0 0
        %2072 = vmatpush1.bf16.xpose.msra.mxu0 0
        %2073 = vmatprep.subr.bf16.mxu0 0
        %2074 = vmatpush1.bf16.xpose.msra.mxu0 0
        %2075 = vmatprep.subr.bf16.mxu0 0
        %2076 = vmatpush1.bf16.xpose.msra.mxu0 0
        %2077 = vmatprep.subr.bf16.mxu0 0
        %2078 = vmatpush1.bf16.xpose.msra.mxu0 0
        %2079 = vmatprep.subr.bf16.mxu0 0
        %2080 = vmatpush1.bf16.xpose.msra.mxu0 0
        %2081 = vmatprep.subr.bf16.mxu0 0
        %2082 = vmatpush1.bf16.xpose.msra.mxu0 0
        %2083 = vmatprep.subr.bf16.mxu0 0
        %2084 = vmatpush1.bf16.xpose.msra.mxu0 0
        %2085 = vmatprep.subr.bf16.mxu0 0
        %2086 = vmatpush1.bf16.xpose.msra.mxu0 0
        %2087 = vmatprep.subr.bf16.mxu0 0
        %2088 = vmatpush1.bf16.xpose.msra.mxu0 0
        %2089 = vmatprep.subr.bf16.mxu0 0
        %2090 = vmatpush1.bf16.xpose.msra.mxu0 0
        %2091 = vmatprep.mubr.bf16.mxu0 0
        %2092 = vmatmul.mubr.bf16.gmra.mrb[0].mxu0 %v1527
        %v2093 = vpop.f32.mrb[0].mxu0
        %v2094 = vadd.f32 0.0, %v2093
        %v2095 = vpop.f32.mrb[0].mxu0
        %v2096 = vpop.f32.mrb[0].mxu0
        %v2097 = vpop.f32.mrb[0].mxu0
        %2098 = vdwg.mxu0
        %2099 = vmatprep.subr.bf16.mxu0 0
        %2100 = vmatpush1.bf16.xpose.msra.mxu0 %v1560
        %2101 = vmatprep.subr.bf16.mxu0 0
        %2102 = vmatpush1.bf16.xpose.msra.mxu0 0
        %2103 = vmatprep.subr.bf16.mxu0 0
        %2104 = vmatpush1.bf16.xpose.msra.mxu0 0
        %2105 = vmatprep.subr.bf16.mxu0 0
        %2106 = vmatpush1.bf16.xpose.msra.mxu0 0
        %2107 = vmatprep.subr.bf16.mxu0 0
        %2108 = vmatpush1.bf16.xpose.msra.mxu0 0
        %2109 = vmatprep.subr.bf16.mxu0 0
        %2110 = vmatpush1.bf16.xpose.msra.mxu0 0
        %2111 = vmatprep.subr.bf16.mxu0 0
        %2112 = vmatpush1.bf16.xpose.msra.mxu0 0
        %2113 = vmatprep.subr.bf16.mxu0 0
        %2114 = vmatpush1.bf16.xpose.msra.mxu0 0
        %2115 = vmatprep.subr.bf16.mxu0 0
        %2116 = vmatpush1.bf16.xpose.msra.mxu0 0
        %2117 = vmatprep.subr.bf16.mxu0 0
        %2118 = vmatpush1.bf16.xpose.msra.mxu0 0
        %2119 = vmatprep.subr.bf16.mxu0 0
        %2120 = vmatpush1.bf16.xpose.msra.mxu0 0
        %2121 = vmatprep.subr.bf16.mxu0 0
        %2122 = vmatpush1.bf16.xpose.msra.mxu0 0
        %2123 = vmatprep.subr.bf16.mxu0 0
        %2124 = vmatpush1.bf16.xpose.msra.mxu0 0
        %2125 = vmatprep.subr.bf16.mxu0 0
        %2126 = vmatpush1.bf16.xpose.msra.mxu0 0
        %2127 = vmatprep.subr.bf16.mxu0 0
        %2128 = vmatpush1.bf16.xpose.msra.mxu0 0
        %2129 = vmatprep.subr.bf16.mxu0 0
        %2130 = vmatpush1.bf16.xpose.msra.mxu0 0
        %2131 = vmatprep.mubr.bf16.mxu0 0
        %2132 = vmatmul.mubr.bf16.gmra.mrb[0].mxu0 %v1528
        %v2133 = vpop.f32.mrb[0].mxu0
        %v2134 = vadd.f32 0.0, %v2133
        %v2135 = vpop.f32.mrb[0].mxu0
        %v2136 = vpop.f32.mrb[0].mxu0
        %v2137 = vpop.f32.mrb[0].mxu0
        %2138 = vdwg.mxu0
        %2139 = vmatprep.subr.bf16.mxu0 0
        %2140 = vmatpush1.bf16.xpose.msra.mxu0 %v1561
        %2141 = vmatprep.subr.bf16.mxu0 0
        %2142 = vmatpush1.bf16.xpose.msra.mxu0 0
        %2143 = vmatprep.subr.bf16.mxu0 0
        %2144 = vmatpush1.bf16.xpose.msra.mxu0 0
        %2145 = vmatprep.subr.bf16.mxu0 0
        %2146 = vmatpush1.bf16.xpose.msra.mxu0 0
        %2147 = vmatprep.subr.bf16.mxu0 0
        %2148 = vmatpush1.bf16.xpose.msra.mxu0 0
        %2149 = vmatprep.subr.bf16.mxu0 0
        %2150 = vmatpush1.bf16.xpose.msra.mxu0 0
        %2151 = vmatprep.subr.bf16.mxu0 0
        %2152 = vmatpush1.bf16.xpose.msra.mxu0 0
        %2153 = vmatprep.subr.bf16.mxu0 0
        %2154 = vmatpush1.bf16.xpose.msra.mxu0 0
        %2155 = vmatprep.subr.bf16.mxu0 0
        %2156 = vmatpush1.bf16.xpose.msra.mxu0 0
        %2157 = vmatprep.subr.bf16.mxu0 0
        %2158 = vmatpush1.bf16.xpose.msra.mxu0 0
        %2159 = vmatprep.subr.bf16.mxu0 0
        %2160 = vmatpush1.bf16.xpose.msra.mxu0 0
        %2161 = vmatprep.subr.bf16.mxu0 0
        %2162 = vmatpush1.bf16.xpose.msra.mxu0 0
        %2163 = vmatprep.subr.bf16.mxu0 0
        %2164 = vmatpush1.bf16.xpose.msra.mxu0 0
        %2165 = vmatprep.subr.bf16.mxu0 0
        %2166 = vmatpush1.bf16.xpose.msra.mxu0 0
        %2167 = vmatprep.subr.bf16.mxu0 0
        %2168 = vmatpush1.bf16.xpose.msra.mxu0 0
        %2169 = vmatprep.subr.bf16.mxu0 0
        %2170 = vmatpush1.bf16.xpose.msra.mxu0 0
        %2171 = vmatprep.mubr.bf16.mxu0 0
        %2172 = vmatmul.mubr.bf16.gmra.mrb[0].mxu0 %v1529
        %v2173 = vpop.f32.mrb[0].mxu0
        %v2174 = vadd.f32 0.0, %v2173
        %v2175 = vpop.f32.mrb[0].mxu0
        %v2176 = vpop.f32.mrb[0].mxu0
        %v2177 = vpop.f32.mrb[0].mxu0
        %2178 = vdwg.mxu0
        %2179 = vmatprep.subr.bf16.mxu0 0
        %2180 = vmatpush1.bf16.xpose.msra.mxu0 %v1562
        %2181 = vmatprep.subr.bf16.mxu0 0
        %2182 = vmatpush1.bf16.xpose.msra.mxu0 0
        %2183 = vmatprep.subr.bf16.mxu0 0
        %2184 = vmatpush1.bf16.xpose.msra.mxu0 0
        %2185 = vmatprep.subr.bf16.mxu0 0
        %2186 = vmatpush1.bf16.xpose.msra.mxu0 0
        %2187 = vmatprep.subr.bf16.mxu0 0
        %2188 = vmatpush1.bf16.xpose.msra.mxu0 0
        %2189 = vmatprep.subr.bf16.mxu0 0
        %2190 = vmatpush1.bf16.xpose.msra.mxu0 0
        %2191 = vmatprep.subr.bf16.mxu0 0
        %2192 = vmatpush1.bf16.xpose.msra.mxu0 0
        %2193 = vmatprep.subr.bf16.mxu0 0
        %2194 = vmatpush1.bf16.xpose.msra.mxu0 0
        %2195 = vmatprep.subr.bf16.mxu0 0
        %2196 = vmatpush1.bf16.xpose.msra.mxu0 0
        %2197 = vmatprep.subr.bf16.mxu0 0
        %2198 = vmatpush1.bf16.xpose.msra.mxu0 0
        %2199 = vmatprep.subr.bf16.mxu0 0
        %2200 = vmatpush1.bf16.xpose.msra.mxu0 0
        %2201 = vmatprep.subr.bf16.mxu0 0
        %2202 = vmatpush1.bf16.xpose.msra.mxu0 0
        %2203 = vmatprep.subr.bf16.mxu0 0
        %2204 = vmatpush1.bf16.xpose.msra.mxu0 0
        %2205 = vmatprep.subr.bf16.mxu0 0
        %2206 = vmatpush1.bf16.xpose.msra.mxu0 0
        %2207 = vmatprep.subr.bf16.mxu0 0
        %2208 = vmatpush1.bf16.xpose.msra.mxu0 0
        %2209 = vmatprep.subr.bf16.mxu0 0
        %2210 = vmatpush1.bf16.xpose.msra.mxu0 0
        %2211 = vmatprep.mubr.bf16.mxu0 0
        %2212 = vmatmul.mubr.bf16.gmra.mrb[0].mxu0 %v1530
        %v2213 = vpop.f32.mrb[0].mxu0
        %v2214 = vadd.f32 0.0, %v2213
        %v2215 = vpop.f32.mrb[0].mxu0
        %v2216 = vpop.f32.mrb[0].mxu0
        %v2217 = vpop.f32.mrb[0].mxu0
        %2218 = vdwg.mxu0
        %2219 = vmatprep.subr.bf16.mxu0 0
        %2220 = vmatpush1.bf16.xpose.msra.mxu0 %v1563
        %2221 = vmatprep.subr.bf16.mxu0 0
        %2222 = vmatpush1.bf16.xpose.msra.mxu0 0
        %2223 = vmatprep.subr.bf16.mxu0 0
        %2224 = vmatpush1.bf16.xpose.msra.mxu0 0
        %2225 = vmatprep.subr.bf16.mxu0 0
        %2226 = vmatpush1.bf16.xpose.msra.mxu0 0
        %2227 = vmatprep.subr.bf16.mxu0 0
        %2228 = vmatpush1.bf16.xpose.msra.mxu0 0
        %2229 = vmatprep.subr.bf16.mxu0 0
        %2230 = vmatpush1.bf16.xpose.msra.mxu0 0
        %2231 = vmatprep.subr.bf16.mxu0 0
        %2232 = vmatpush1.bf16.xpose.msra.mxu0 0
        %2233 = vmatprep.subr.bf16.mxu0 0
        %2234 = vmatpush1.bf16.xpose.msra.mxu0 0
        %2235 = vmatprep.subr.bf16.mxu0 0
        %2236 = vmatpush1.bf16.xpose.msra.mxu0 0
        %2237 = vmatprep.subr.bf16.mxu0 0
        %2238 = vmatpush1.bf16.xpose.msra.mxu0 0
        %2239 = vmatprep.subr.bf16.mxu0 0
        %2240 = vmatpush1.bf16.xpose.msra.mxu0 0
        %2241 = vmatprep.subr.bf16.mxu0 0
        %2242 = vmatpush1.bf16.xpose.msra.mxu0 0
        %2243 = vmatprep.subr.bf16.mxu0 0
        %2244 = vmatpush1.bf16.xpose.msra.mxu0 0
        %2245 = vmatprep.subr.bf16.mxu0 0
        %2246 = vmatpush1.bf16.xpose.msra.mxu0 0
        %2247 = vmatprep.subr.bf16.mxu0 0
        %2248 = vmatpush1.bf16.xpose.msra.mxu0 0
        %2249 = vmatprep.subr.bf16.mxu0 0
        %2250 = vmatpush1.bf16.xpose.msra.mxu0 0
        %2251 = vmatprep.mubr.bf16.mxu0 0
        %2252 = vmatmul.mubr.bf16.gmra.mrb[0].mxu0 %v1531
        %v2253 = vpop.f32.mrb[0].mxu0
        %v2254 = vadd.f32 0.0, %v2253
        %v2255 = vpop.f32.mrb[0].mxu0
        %v2256 = vpop.f32.mrb[0].mxu0
        %v2257 = vpop.f32.mrb[0].mxu0
        %2258 = vdwg.mxu0
        %2259 = vmatprep.subr.bf16.mxu0 0
        %2260 = vmatpush1.bf16.xpose.msra.mxu0 %v1564
        %2261 = vmatprep.subr.bf16.mxu0 0
        %2262 = vmatpush1.bf16.xpose.msra.mxu0 0
        %2263 = vmatprep.subr.bf16.mxu0 0
        %2264 = vmatpush1.bf16.xpose.msra.mxu0 0
        %2265 = vmatprep.subr.bf16.mxu0 0
        %2266 = vmatpush1.bf16.xpose.msra.mxu0 0
        %2267 = vmatprep.subr.bf16.mxu0 0
        %2268 = vmatpush1.bf16.xpose.msra.mxu0 0
        %2269 = vmatprep.subr.bf16.mxu0 0
        %2270 = vmatpush1.bf16.xpose.msra.mxu0 0
        %2271 = vmatprep.subr.bf16.mxu0 0
        %2272 = vmatpush1.bf16.xpose.msra.mxu0 0
        %2273 = vmatprep.subr.bf16.mxu0 0
        %2274 = vmatpush1.bf16.xpose.msra.mxu0 0
        %2275 = vmatprep.subr.bf16.mxu0 0
        %2276 = vmatpush1.bf16.xpose.msra.mxu0 0
        %2277 = vmatprep.subr.bf16.mxu0 0
        %2278 = vmatpush1.bf16.xpose.msra.mxu0 0
        %2279 = vmatprep.subr.bf16.mxu0 0
        %2280 = vmatpush1.bf16.xpose.msra.mxu0 0
        %2281 = vmatprep.subr.bf16.mxu0 0
        %2282 = vmatpush1.bf16.xpose.msra.mxu0 0
        %2283 = vmatprep.subr.bf16.mxu0 0
        %2284 = vmatpush1.bf16.xpose.msra.mxu0 0
        %2285 = vmatprep.subr.bf16.mxu0 0
        %2286 = vmatpush1.bf16.xpose.msra.mxu0 0
        %2287 = vmatprep.subr.bf16.mxu0 0
        %2288 = vmatpush1.bf16.xpose.msra.mxu0 0
        %2289 = vmatprep.subr.bf16.mxu0 0
        %2290 = vmatpush1.bf16.xpose.msra.mxu0 0
        %2291 = vmatprep.mubr.bf16.mxu0 0
        %2292 = vmatmul.mubr.bf16.gmra.mrb[0].mxu0 %v1532
        %v2293 = vpop.f32.mrb[0].mxu0
        %v2294 = vadd.f32 0.0, %v2293
        %v2295 = vpop.f32.mrb[0].mxu0
        %v2296 = vpop.f32.mrb[0].mxu0
        %v2297 = vpop.f32.mrb[0].mxu0
        %2298 = vdwg.mxu0
        %2299 = vmatprep.subr.bf16.mxu0 0
        %2300 = vmatpush1.bf16.xpose.msra.mxu0 %v1565
        %2301 = vmatprep.subr.bf16.mxu0 0
        %2302 = vmatpush1.bf16.xpose.msra.mxu0 0
        %2303 = vmatprep.subr.bf16.mxu0 0
        %2304 = vmatpush1.bf16.xpose.msra.mxu0 0
        %2305 = vmatprep.subr.bf16.mxu0 0
        %2306 = vmatpush1.bf16.xpose.msra.mxu0 0
        %2307 = vmatprep.subr.bf16.mxu0 0
        %2308 = vmatpush1.bf16.xpose.msra.mxu0 0
        %2309 = vmatprep.subr.bf16.mxu0 0
        %2310 = vmatpush1.bf16.xpose.msra.mxu0 0
        %2311 = vmatprep.subr.bf16.mxu0 0
        %2312 = vmatpush1.bf16.xpose.msra.mxu0 0
        %2313 = vmatprep.subr.bf16.mxu0 0
        %2314 = vmatpush1.bf16.xpose.msra.mxu0 0
        %2315 = vmatprep.subr.bf16.mxu0 0
        %2316 = vmatpush1.bf16.xpose.msra.mxu0 0
        %2317 = vmatprep.subr.bf16.mxu0 0
        %2318 = vmatpush1.bf16.xpose.msra.mxu0 0
        %2319 = vmatprep.subr.bf16.mxu0 0
        %2320 = vmatpush1.bf16.xpose.msra.mxu0 0
        %2321 = vmatprep.subr.bf16.mxu0 0
        %2322 = vmatpush1.bf16.xpose.msra.mxu0 0
        %2323 = vmatprep.subr.bf16.mxu0 0
        %2324 = vmatpush1.bf16.xpose.msra.mxu0 0
        %2325 = vmatprep.subr.bf16.mxu0 0
        %2326 = vmatpush1.bf16.xpose.msra.mxu0 0
        %2327 = vmatprep.subr.bf16.mxu0 0
        %2328 = vmatpush1.bf16.xpose.msra.mxu0 0
        %2329 = vmatprep.subr.bf16.mxu0 0
        %2330 = vmatpush1.bf16.xpose.msra.mxu0 0
        %2331 = vmatprep.mubr.bf16.mxu0 0
        %2332 = vmatmul.mubr.bf16.gmra.mrb[0].mxu0 %v1533
        %v2333 = vpop.f32.mrb[0].mxu0
        %v2334 = vadd.f32 0.0, %v2333
        %v2335 = vpop.f32.mrb[0].mxu0
        %v2336 = vpop.f32.mrb[0].mxu0
        %v2337 = vpop.f32.mrb[0].mxu0
        %2338 = vdwg.mxu0
        %2339 = vmatprep.subr.bf16.mxu0 0
        %2340 = vmatpush1.bf16.xpose.msra.mxu0 %v1566
        %2341 = vmatprep.subr.bf16.mxu0 0
        %2342 = vmatpush1.bf16.xpose.msra.mxu0 0
        %2343 = vmatprep.subr.bf16.mxu0 0
        %2344 = vmatpush1.bf16.xpose.msra.mxu0 0
        %2345 = vmatprep.subr.bf16.mxu0 0
        %2346 = vmatpush1.bf16.xpose.msra.mxu0 0
        %2347 = vmatprep.subr.bf16.mxu0 0
        %2348 = vmatpush1.bf16.xpose.msra.mxu0 0
        %2349 = vmatprep.subr.bf16.mxu0 0
        %2350 = vmatpush1.bf16.xpose.msra.mxu0 0
        %2351 = vmatprep.subr.bf16.mxu0 0
        %2352 = vmatpush1.bf16.xpose.msra.mxu0 0
        %2353 = vmatprep.subr.bf16.mxu0 0
        %2354 = vmatpush1.bf16.xpose.msra.mxu0 0
        %2355 = vmatprep.subr.bf16.mxu0 0
        %2356 = vmatpush1.bf16.xpose.msra.mxu0 0
        %2357 = vmatprep.subr.bf16.mxu0 0
        %2358 = vmatpush1.bf16.xpose.msra.mxu0 0
        %2359 = vmatprep.subr.bf16.mxu0 0
        %2360 = vmatpush1.bf16.xpose.msra.mxu0 0
        %2361 = vmatprep.subr.bf16.mxu0 0
        %2362 = vmatpush1.bf16.xpose.msra.mxu0 0
        %2363 = vmatprep.subr.bf16.mxu0 0
        %2364 = vmatpush1.bf16.xpose.msra.mxu0 0
        %2365 = vmatprep.subr.bf16.mxu0 0
        %2366 = vmatpush1.bf16.xpose.msra.mxu0 0
        %2367 = vmatprep.subr.bf16.mxu0 0
        %2368 = vmatpush1.bf16.xpose.msra.mxu0 0
        %2369 = vmatprep.subr.bf16.mxu0 0
        %2370 = vmatpush1.bf16.xpose.msra.mxu0 0
        %2371 = vmatprep.mubr.bf16.mxu0 0
        %2372 = vmatmul.mubr.bf16.gmra.mrb[0].mxu0 %v1534
        %v2373 = vpop.f32.mrb[0].mxu0
        %v2374 = vadd.f32 0.0, %v2373
        %v2375 = vpop.f32.mrb[0].mxu0
        %v2376 = vpop.f32.mrb[0].mxu0
        %v2377 = vpop.f32.mrb[0].mxu0
        %2378 = vdwg.mxu0
        %2379 = vmatprep.subr.bf16.mxu0 0
        %2380 = vmatpush1.bf16.xpose.msra.mxu0 %v1567
        %2381 = vmatprep.subr.bf16.mxu0 0
        %2382 = vmatpush1.bf16.xpose.msra.mxu0 0
        %2383 = vmatprep.subr.bf16.mxu0 0
        %2384 = vmatpush1.bf16.xpose.msra.mxu0 0
        %2385 = vmatprep.subr.bf16.mxu0 0
        %2386 = vmatpush1.bf16.xpose.msra.mxu0 0
        %2387 = vmatprep.subr.bf16.mxu0 0
        %2388 = vmatpush1.bf16.xpose.msra.mxu0 0
        %2389 = vmatprep.subr.bf16.mxu0 0
        %2390 = vmatpush1.bf16.xpose.msra.mxu0 0
        %2391 = vmatprep.subr.bf16.mxu0 0
        %2392 = vmatpush1.bf16.xpose.msra.mxu0 0
        %2393 = vmatprep.subr.bf16.mxu0 0
        %2394 = vmatpush1.bf16.xpose.msra.mxu0 0
        %2395 = vmatprep.subr.bf16.mxu0 0
        %2396 = vmatpush1.bf16.xpose.msra.mxu0 0
        %2397 = vmatprep.subr.bf16.mxu0 0
        %2398 = vmatpush1.bf16.xpose.msra.mxu0 0
        %2399 = vmatprep.subr.bf16.mxu0 0
        %2400 = vmatpush1.bf16.xpose.msra.mxu0 0
        %2401 = vmatprep.subr.bf16.mxu0 0
        %2402 = vmatpush1.bf16.xpose.msra.mxu0 0
        %2403 = vmatprep.subr.bf16.mxu0 0
        %2404 = vmatpush1.bf16.xpose.msra.mxu0 0
        %2405 = vmatprep.subr.bf16.mxu0 0
        %2406 = vmatpush1.bf16.xpose.msra.mxu0 0
        %2407 = vmatprep.subr.bf16.mxu0 0
        %2408 = vmatpush1.bf16.xpose.msra.mxu0 0
        %2409 = vmatprep.subr.bf16.mxu0 0
        %2410 = vmatpush1.bf16.xpose.msra.mxu0 0
        %2411 = vmatprep.mubr.bf16.mxu0 0
        %2412 = vmatmul.mubr.bf16.gmra.mrb[0].mxu0 %v1535
        %v2413 = vpop.f32.mrb[0].mxu0
        %v2414 = vadd.f32 0.0, %v2413
        %v2415 = vpop.f32.mrb[0].mxu0
        %v2416 = vpop.f32.mrb[0].mxu0
        %v2417 = vpop.f32.mrb[0].mxu0
        %2418 = vdwg.mxu0
        %2419 = vmatprep.subr.bf16.mxu0 0
        %2420 = vmatpush1.bf16.xpose.msra.mxu0 %v1568
        %2421 = vmatprep.subr.bf16.mxu0 0
        %2422 = vmatpush1.bf16.xpose.msra.mxu0 0
        %2423 = vmatprep.subr.bf16.mxu0 0
        %2424 = vmatpush1.bf16.xpose.msra.mxu0 0
        %2425 = vmatprep.subr.bf16.mxu0 0
        %2426 = vmatpush1.bf16.xpose.msra.mxu0 0
        %2427 = vmatprep.subr.bf16.mxu0 0
        %2428 = vmatpush1.bf16.xpose.msra.mxu0 0
        %2429 = vmatprep.subr.bf16.mxu0 0
        %2430 = vmatpush1.bf16.xpose.msra.mxu0 0
        %2431 = vmatprep.subr.bf16.mxu0 0
        %2432 = vmatpush1.bf16.xpose.msra.mxu0 0
        %2433 = vmatprep.subr.bf16.mxu0 0
        %2434 = vmatpush1.bf16.xpose.msra.mxu0 0
        %2435 = vmatprep.subr.bf16.mxu0 0
        %2436 = vmatpush1.bf16.xpose.msra.mxu0 0
        %2437 = vmatprep.subr.bf16.mxu0 0
        %2438 = vmatpush1.bf16.xpose.msra.mxu0 0
        %2439 = vmatprep.subr.bf16.mxu0 0
        %2440 = vmatpush1.bf16.xpose.msra.mxu0 0
        %2441 = vmatprep.subr.bf16.mxu0 0
        %2442 = vmatpush1.bf16.xpose.msra.mxu0 0
        %2443 = vmatprep.subr.bf16.mxu0 0
        %2444 = vmatpush1.bf16.xpose.msra.mxu0 0
        %2445 = vmatprep.subr.bf16.mxu0 0
        %2446 = vmatpush1.bf16.xpose.msra.mxu0 0
        %2447 = vmatprep.subr.bf16.mxu0 0
        %2448 = vmatpush1.bf16.xpose.msra.mxu0 0
        %2449 = vmatprep.subr.bf16.mxu0 0
        %2450 = vmatpush1.bf16.xpose.msra.mxu0 0
        %2451 = vmatprep.mubr.bf16.mxu0 0
        %2452 = vmatmul.mubr.bf16.gmra.mrb[0].mxu0 %v1536
        %v2453 = vpop.f32.mrb[0].mxu0
        %v2454 = vadd.f32 0.0, %v2453
        %v2455 = vpop.f32.mrb[0].mxu0
        %v2456 = vpop.f32.mrb[0].mxu0
        %v2457 = vpop.f32.mrb[0].mxu0
        %2458 = vdwg.mxu0
        %2459 = vmatprep.subr.bf16.mxu0 0
        %2460 = vmatpush1.bf16.xpose.msra.mxu0 %v1569
        %2461 = vmatprep.subr.bf16.mxu0 0
        %2462 = vmatpush1.bf16.xpose.msra.mxu0 0
        %2463 = vmatprep.subr.bf16.mxu0 0
        %2464 = vmatpush1.bf16.xpose.msra.mxu0 0
        %2465 = vmatprep.subr.bf16.mxu0 0
        %2466 = vmatpush1.bf16.xpose.msra.mxu0 0
        %2467 = vmatprep.subr.bf16.mxu0 0
        %2468 = vmatpush1.bf16.xpose.msra.mxu0 0
        %2469 = vmatprep.subr.bf16.mxu0 0
        %2470 = vmatpush1.bf16.xpose.msra.mxu0 0
        %2471 = vmatprep.subr.bf16.mxu0 0
        %2472 = vmatpush1.bf16.xpose.msra.mxu0 0
        %2473 = vmatprep.subr.bf16.mxu0 0
        %2474 = vmatpush1.bf16.xpose.msra.mxu0 0
        %2475 = vmatprep.subr.bf16.mxu0 0
        %2476 = vmatpush1.bf16.xpose.msra.mxu0 0
        %2477 = vmatprep.subr.bf16.mxu0 0
        %2478 = vmatpush1.bf16.xpose.msra.mxu0 0
        %2479 = vmatprep.subr.bf16.mxu0 0
        %2480 = vmatpush1.bf16.xpose.msra.mxu0 0
        %2481 = vmatprep.subr.bf16.mxu0 0
        %2482 = vmatpush1.bf16.xpose.msra.mxu0 0
        %2483 = vmatprep.subr.bf16.mxu0 0
        %2484 = vmatpush1.bf16.xpose.msra.mxu0 0
        %2485 = vmatprep.subr.bf16.mxu0 0
        %2486 = vmatpush1.bf16.xpose.msra.mxu0 0
        %2487 = vmatprep.subr.bf16.mxu0 0
        %2488 = vmatpush1.bf16.xpose.msra.mxu0 0
        %2489 = vmatprep.subr.bf16.mxu0 0
        %2490 = vmatpush1.bf16.xpose.msra.mxu0 0
        %2491 = vmatprep.mubr.bf16.mxu0 0
        %2492 = vmatmul.mubr.bf16.gmra.mrb[0].mxu0 %v1537
        %v2493 = vpop.f32.mrb[0].mxu0
        %v2494 = vadd.f32 0.0, %v2493
        %v2495 = vpop.f32.mrb[0].mxu0
        %v2496 = vpop.f32.mrb[0].mxu0
        %v2497 = vpop.f32.mrb[0].mxu0
        %2498 = vdwg.mxu0
        %2499 = vmatprep.subr.bf16.mxu0 0
        %2500 = vmatpush1.bf16.xpose.msra.mxu0 %v1570
        %2501 = vmatprep.subr.bf16.mxu0 0
        %2502 = vmatpush1.bf16.xpose.msra.mxu0 0
        %2503 = vmatprep.subr.bf16.mxu0 0
        %2504 = vmatpush1.bf16.xpose.msra.mxu0 0
        %2505 = vmatprep.subr.bf16.mxu0 0
        %2506 = vmatpush1.bf16.xpose.msra.mxu0 0
        %2507 = vmatprep.subr.bf16.mxu0 0
        %2508 = vmatpush1.bf16.xpose.msra.mxu0 0
        %2509 = vmatprep.subr.bf16.mxu0 0
        %2510 = vmatpush1.bf16.xpose.msra.mxu0 0
        %2511 = vmatprep.subr.bf16.mxu0 0
        %2512 = vmatpush1.bf16.xpose.msra.mxu0 0
        %2513 = vmatprep.subr.bf16.mxu0 0
        %2514 = vmatpush1.bf16.xpose.msra.mxu0 0
        %2515 = vmatprep.subr.bf16.mxu0 0
        %2516 = vmatpush1.bf16.xpose.msra.mxu0 0
        %2517 = vmatprep.subr.bf16.mxu0 0
        %2518 = vmatpush1.bf16.xpose.msra.mxu0 0
        %2519 = vmatprep.subr.bf16.mxu0 0
        %2520 = vmatpush1.bf16.xpose.msra.mxu0 0
        %2521 = vmatprep.subr.bf16.mxu0 0
        %2522 = vmatpush1.bf16.xpose.msra.mxu0 0
        %2523 = vmatprep.subr.bf16.mxu0 0
        %2524 = vmatpush1.bf16.xpose.msra.mxu0 0
        %2525 = vmatprep.subr.bf16.mxu0 0
        %2526 = vmatpush1.bf16.xpose.msra.mxu0 0
        %2527 = vmatprep.subr.bf16.mxu0 0
        %2528 = vmatpush1.bf16.xpose.msra.mxu0 0
        %2529 = vmatprep.subr.bf16.mxu0 0
        %2530 = vmatpush1.bf16.xpose.msra.mxu0 0
        %2531 = vmatprep.mubr.bf16.mxu0 0
        %2532 = vmatmul.mubr.bf16.gmra.mrb[0].mxu0 %v1538
        %v2533 = vpop.f32.mrb[0].mxu0
        %v2534 = vadd.f32 0.0, %v2533
        %v2535 = vpop.f32.mrb[0].mxu0
        %v2536 = vpop.f32.mrb[0].mxu0
        %v2537 = vpop.f32.mrb[0].mxu0
        %2538 = vdwg.mxu0
        %2539 = vmatprep.subr.bf16.mxu0 0
        %2540 = vmatpush1.bf16.xpose.msra.mxu0 %v1571
        %2541 = vmatprep.subr.bf16.mxu0 0
        %2542 = vmatpush1.bf16.xpose.msra.mxu0 0
        %2543 = vmatprep.subr.bf16.mxu0 0
        %2544 = vmatpush1.bf16.xpose.msra.mxu0 0
        %2545 = vmatprep.subr.bf16.mxu0 0
        %2546 = vmatpush1.bf16.xpose.msra.mxu0 0
        %2547 = vmatprep.subr.bf16.mxu0 0
        %2548 = vmatpush1.bf16.xpose.msra.mxu0 0
        %2549 = vmatprep.subr.bf16.mxu0 0
        %2550 = vmatpush1.bf16.xpose.msra.mxu0 0
        %2551 = vmatprep.subr.bf16.mxu0 0
        %2552 = vmatpush1.bf16.xpose.msra.mxu0 0
        %2553 = vmatprep.subr.bf16.mxu0 0
        %2554 = vmatpush1.bf16.xpose.msra.mxu0 0
        %2555 = vmatprep.subr.bf16.mxu0 0
        %2556 = vmatpush1.bf16.xpose.msra.mxu0 0
        %2557 = vmatprep.subr.bf16.mxu0 0
        %2558 = vmatpush1.bf16.xpose.msra.mxu0 0
        %2559 = vmatprep.subr.bf16.mxu0 0
        %2560 = vmatpush1.bf16.xpose.msra.mxu0 0
        %2561 = vmatprep.subr.bf16.mxu0 0
        %2562 = vmatpush1.bf16.xpose.msra.mxu0 0
        %2563 = vmatprep.subr.bf16.mxu0 0
        %2564 = vmatpush1.bf16.xpose.msra.mxu0 0
        %2565 = vmatprep.subr.bf16.mxu0 0
        %2566 = vmatpush1.bf16.xpose.msra.mxu0 0
        %2567 = vmatprep.subr.bf16.mxu0 0
        %2568 = vmatpush1.bf16.xpose.msra.mxu0 0
        %2569 = vmatprep.subr.bf16.mxu0 0
        %2570 = vmatpush1.bf16.xpose.msra.mxu0 0
        %2571 = vmatprep.mubr.bf16.mxu0 0
        %2572 = vmatmul.mubr.bf16.gmra.mrb[0].mxu0 %v1539
        %v2573 = vpop.f32.mrb[0].mxu0
        %v2574 = vadd.f32 0.0, %v2573
        %v2575 = vpop.f32.mrb[0].mxu0
        %v2576 = vpop.f32.mrb[0].mxu0
        %v2577 = vpop.f32.mrb[0].mxu0
        %2578 = vdwg.mxu0
        %2579 = vmatprep.subr.bf16.mxu0 0
        %2580 = vmatpush1.bf16.xpose.msra.mxu0 %v1572
        %2581 = vmatprep.subr.bf16.mxu0 0
        %2582 = vmatpush1.bf16.xpose.msra.mxu0 0
        %2583 = vmatprep.subr.bf16.mxu0 0
        %2584 = vmatpush1.bf16.xpose.msra.mxu0 0
        %2585 = vmatprep.subr.bf16.mxu0 0
        %2586 = vmatpush1.bf16.xpose.msra.mxu0 0
        %2587 = vmatprep.subr.bf16.mxu0 0
        %2588 = vmatpush1.bf16.xpose.msra.mxu0 0
        %2589 = vmatprep.subr.bf16.mxu0 0
        %2590 = vmatpush1.bf16.xpose.msra.mxu0 0
        %2591 = vmatprep.subr.bf16.mxu0 0
        %2592 = vmatpush1.bf16.xpose.msra.mxu0 0
        %2593 = vmatprep.subr.bf16.mxu0 0
        %2594 = vmatpush1.bf16.xpose.msra.mxu0 0
        %2595 = vmatprep.subr.bf16.mxu0 0
        %2596 = vmatpush1.bf16.xpose.msra.mxu0 0
        %2597 = vmatprep.subr.bf16.mxu0 0
        %2598 = vmatpush1.bf16.xpose.msra.mxu0 0
        %2599 = vmatprep.subr.bf16.mxu0 0
        %2600 = vmatpush1.bf16.xpose.msra.mxu0 0
        %2601 = vmatprep.subr.bf16.mxu0 0
        %2602 = vmatpush1.bf16.xpose.msra.mxu0 0
        %2603 = vmatprep.subr.bf16.mxu0 0
        %2604 = vmatpush1.bf16.xpose.msra.mxu0 0
        %2605 = vmatprep.subr.bf16.mxu0 0
        %2606 = vmatpush1.bf16.xpose.msra.mxu0 0
        %2607 = vmatprep.subr.bf16.mxu0 0
        %2608 = vmatpush1.bf16.xpose.msra.mxu0 0
        %2609 = vmatprep.subr.bf16.mxu0 0
        %2610 = vmatpush1.bf16.xpose.msra.mxu0 0
        %2611 = vmatprep.mubr.bf16.mxu0 0
        %2612 = vmatmul.mubr.bf16.gmra.mrb[0].mxu0 %v1540
        %v2613 = vpop.f32.mrb[0].mxu0
        %v2614 = vadd.f32 0.0, %v2613
        %v2615 = vpop.f32.mrb[0].mxu0
        %v2616 = vpop.f32.mrb[0].mxu0
        %v2617 = vpop.f32.mrb[0].mxu0
        %2618 = vdwg.mxu0
        %2619 = vmatprep.subr.bf16.mxu0 0
        %2620 = vmatpush1.bf16.xpose.msra.mxu0 %v1573
        %2621 = vmatprep.subr.bf16.mxu0 0
        %2622 = vmatpush1.bf16.xpose.msra.mxu0 0
        %2623 = vmatprep.subr.bf16.mxu0 0
        %2624 = vmatpush1.bf16.xpose.msra.mxu0 0
        %2625 = vmatprep.subr.bf16.mxu0 0
        %2626 = vmatpush1.bf16.xpose.msra.mxu0 0
        %2627 = vmatprep.subr.bf16.mxu0 0
        %2628 = vmatpush1.bf16.xpose.msra.mxu0 0
        %2629 = vmatprep.subr.bf16.mxu0 0
        %2630 = vmatpush1.bf16.xpose.msra.mxu0 0
        %2631 = vmatprep.subr.bf16.mxu0 0
        %2632 = vmatpush1.bf16.xpose.msra.mxu0 0
        %2633 = vmatprep.subr.bf16.mxu0 0
        %2634 = vmatpush1.bf16.xpose.msra.mxu0 0
        %2635 = vmatprep.subr.bf16.mxu0 0
        %2636 = vmatpush1.bf16.xpose.msra.mxu0 0
        %2637 = vmatprep.subr.bf16.mxu0 0
        %2638 = vmatpush1.bf16.xpose.msra.mxu0 0
        %2639 = vmatprep.subr.bf16.mxu0 0
        %2640 = vmatpush1.bf16.xpose.msra.mxu0 0
        %2641 = vmatprep.subr.bf16.mxu0 0
        %2642 = vmatpush1.bf16.xpose.msra.mxu0 0
        %2643 = vmatprep.subr.bf16.mxu0 0
        %2644 = vmatpush1.bf16.xpose.msra.mxu0 0
        %2645 = vmatprep.subr.bf16.mxu0 0
        %2646 = vmatpush1.bf16.xpose.msra.mxu0 0
        %2647 = vmatprep.subr.bf16.mxu0 0
        %2648 = vmatpush1.bf16.xpose.msra.mxu0 0
        %2649 = vmatprep.subr.bf16.mxu0 0
        %2650 = vmatpush1.bf16.xpose.msra.mxu0 0
        %2651 = vmatprep.mubr.bf16.mxu0 0
        %2652 = vmatmul.mubr.bf16.gmra.mrb[0].mxu0 %v1541
        %v2653 = vpop.f32.mrb[0].mxu0
        %v2654 = vadd.f32 0.0, %v2653
        %v2655 = vpop.f32.mrb[0].mxu0
        %v2656 = vpop.f32.mrb[0].mxu0
        %v2657 = vpop.f32.mrb[0].mxu0
        %2658 = vdwg.mxu0
        %2659 = vmatprep.subr.bf16.mxu0 0
        %2660 = vmatpush1.bf16.xpose.msra.mxu0 %v1574
        %2661 = vmatprep.subr.bf16.mxu0 0
        %2662 = vmatpush1.bf16.xpose.msra.mxu0 0
        %2663 = vmatprep.subr.bf16.mxu0 0
        %2664 = vmatpush1.bf16.xpose.msra.mxu0 0
        %2665 = vmatprep.subr.bf16.mxu0 0
        %2666 = vmatpush1.bf16.xpose.msra.mxu0 0
        %2667 = vmatprep.subr.bf16.mxu0 0
        %2668 = vmatpush1.bf16.xpose.msra.mxu0 0
        %2669 = vmatprep.subr.bf16.mxu0 0
        %2670 = vmatpush1.bf16.xpose.msra.mxu0 0
        %2671 = vmatprep.subr.bf16.mxu0 0
        %2672 = vmatpush1.bf16.xpose.msra.mxu0 0
        %2673 = vmatprep.subr.bf16.mxu0 0
        %2674 = vmatpush1.bf16.xpose.msra.mxu0 0
        %2675 = vmatprep.subr.bf16.mxu0 0
        %2676 = vmatpush1.bf16.xpose.msra.mxu0 0
        %2677 = vmatprep.subr.bf16.mxu0 0
        %2678 = vmatpush1.bf16.xpose.msra.mxu0 0
        %2679 = vmatprep.subr.bf16.mxu0 0
        %2680 = vmatpush1.bf16.xpose.msra.mxu0 0
        %2681 = vmatprep.subr.bf16.mxu0 0
        %2682 = vmatpush1.bf16.xpose.msra.mxu0 0
        %2683 = vmatprep.subr.bf16.mxu0 0
        %2684 = vmatpush1.bf16.xpose.msra.mxu0 0
        %2685 = vmatprep.subr.bf16.mxu0 0
        %2686 = vmatpush1.bf16.xpose.msra.mxu0 0
        %2687 = vmatprep.subr.bf16.mxu0 0
        %2688 = vmatpush1.bf16.xpose.msra.mxu0 0
        %2689 = vmatprep.subr.bf16.mxu0 0
        %2690 = vmatpush1.bf16.xpose.msra.mxu0 0
        %2691 = vmatprep.mubr.bf16.mxu0 0
        %2692 = vmatmul.mubr.bf16.gmra.mrb[0].mxu0 %v1542
        %v2693 = vpop.f32.mrb[0].mxu0
        %v2694 = vadd.f32 0.0, %v2693
        %v2695 = vpop.f32.mrb[0].mxu0
        %v2696 = vpop.f32.mrb[0].mxu0
        %v2697 = vpop.f32.mrb[0].mxu0
        %2698 = vdwg.mxu0
        %2699 = vmatprep.subr.bf16.mxu0 0
        %2700 = vmatpush1.bf16.xpose.msra.mxu0 %v1575
        %2701 = vmatprep.subr.bf16.mxu0 0
        %2702 = vmatpush1.bf16.xpose.msra.mxu0 0
        %2703 = vmatprep.subr.bf16.mxu0 0
        %2704 = vmatpush1.bf16.xpose.msra.mxu0 0
        %2705 = vmatprep.subr.bf16.mxu0 0
        %2706 = vmatpush1.bf16.xpose.msra.mxu0 0
        %2707 = vmatprep.subr.bf16.mxu0 0
        %2708 = vmatpush1.bf16.xpose.msra.mxu0 0
        %2709 = vmatprep.subr.bf16.mxu0 0
        %2710 = vmatpush1.bf16.xpose.msra.mxu0 0
        %2711 = vmatprep.subr.bf16.mxu0 0
        %2712 = vmatpush1.bf16.xpose.msra.mxu0 0
        %2713 = vmatprep.subr.bf16.mxu0 0
        %2714 = vmatpush1.bf16.xpose.msra.mxu0 0
        %2715 = vmatprep.subr.bf16.mxu0 0
        %2716 = vmatpush1.bf16.xpose.msra.mxu0 0
        %2717 = vmatprep.subr.bf16.mxu0 0
        %2718 = vmatpush1.bf16.xpose.msra.mxu0 0
        %2719 = vmatprep.subr.bf16.mxu0 0
        %2720 = vmatpush1.bf16.xpose.msra.mxu0 0
        %2721 = vmatprep.subr.bf16.mxu0 0
        %2722 = vmatpush1.bf16.xpose.msra.mxu0 0
        %2723 = vmatprep.subr.bf16.mxu0 0
        %2724 = vmatpush1.bf16.xpose.msra.mxu0 0
        %2725 = vmatprep.subr.bf16.mxu0 0
        %2726 = vmatpush1.bf16.xpose.msra.mxu0 0
        %2727 = vmatprep.subr.bf16.mxu0 0
        %2728 = vmatpush1.bf16.xpose.msra.mxu0 0
        %2729 = vmatprep.subr.bf16.mxu0 0
        %2730 = vmatpush1.bf16.xpose.msra.mxu0 0
        %2731 = vmatprep.mubr.bf16.mxu0 0
        %2732 = vmatmul.mubr.bf16.gmra.mrb[0].mxu0 %v1543
        %v2733 = vpop.f32.mrb[0].mxu0
        %v2734 = vadd.f32 0.0, %v2733
        %v2735 = vpop.f32.mrb[0].mxu0
        %v2736 = vpop.f32.mrb[0].mxu0
        %v2737 = vpop.f32.mrb[0].mxu0
        %2738 = vdwg.mxu0
        %2739 = vmatprep.subr.bf16.mxu0 0
        %2740 = vmatpush1.bf16.xpose.msra.mxu0 %v1576
        %2741 = vmatprep.subr.bf16.mxu0 0
        %2742 = vmatpush1.bf16.xpose.msra.mxu0 0
        %2743 = vmatprep.subr.bf16.mxu0 0
        %2744 = vmatpush1.bf16.xpose.msra.mxu0 0
        %2745 = vmatprep.subr.bf16.mxu0 0
        %2746 = vmatpush1.bf16.xpose.msra.mxu0 0
        %2747 = vmatprep.subr.bf16.mxu0 0
        %2748 = vmatpush1.bf16.xpose.msra.mxu0 0
        %2749 = vmatprep.subr.bf16.mxu0 0
        %2750 = vmatpush1.bf16.xpose.msra.mxu0 0
        %2751 = vmatprep.subr.bf16.mxu0 0
        %2752 = vmatpush1.bf16.xpose.msra.mxu0 0
        %2753 = vmatprep.subr.bf16.mxu0 0
        %2754 = vmatpush1.bf16.xpose.msra.mxu0 0
        %2755 = vmatprep.subr.bf16.mxu0 0
        %2756 = vmatpush1.bf16.xpose.msra.mxu0 0
        %2757 = vmatprep.subr.bf16.mxu0 0
        %2758 = vmatpush1.bf16.xpose.msra.mxu0 0
        %2759 = vmatprep.subr.bf16.mxu0 0
        %2760 = vmatpush1.bf16.xpose.msra.mxu0 0
        %2761 = vmatprep.subr.bf16.mxu0 0
        %2762 = vmatpush1.bf16.xpose.msra.mxu0 0
        %2763 = vmatprep.subr.bf16.mxu0 0
        %2764 = vmatpush1.bf16.xpose.msra.mxu0 0
        %2765 = vmatprep.subr.bf16.mxu0 0
        %2766 = vmatpush1.bf16.xpose.msra.mxu0 0
        %2767 = vmatprep.subr.bf16.mxu0 0
        %2768 = vmatpush1.bf16.xpose.msra.mxu0 0
        %2769 = vmatprep.subr.bf16.mxu0 0
        %2770 = vmatpush1.bf16.xpose.msra.mxu0 0
        %2771 = vmatprep.mubr.bf16.mxu0 0
        %2772 = vmatmul.mubr.bf16.gmra.mrb[0].mxu0 %v1544
        %v2773 = vpop.f32.mrb[0].mxu0
        %v2774 = vadd.f32 0.0, %v2773
        %v2775 = vpop.f32.mrb[0].mxu0
        %v2776 = vpop.f32.mrb[0].mxu0
        %v2777 = vpop.f32.mrb[0].mxu0
        %2778 = vdwg.mxu0
        %2779 = vmatprep.subr.bf16.mxu0 0
        %2780 = vmatpush1.bf16.xpose.msra.mxu0 %v1577
        %2781 = vmatprep.subr.bf16.mxu0 0
        %2782 = vmatpush1.bf16.xpose.msra.mxu0 0
        %2783 = vmatprep.subr.bf16.mxu0 0
        %2784 = vmatpush1.bf16.xpose.msra.mxu0 0
        %2785 = vmatprep.subr.bf16.mxu0 0
        %2786 = vmatpush1.bf16.xpose.msra.mxu0 0
        %2787 = vmatprep.subr.bf16.mxu0 0
        %2788 = vmatpush1.bf16.xpose.msra.mxu0 0
        %2789 = vmatprep.subr.bf16.mxu0 0
        %2790 = vmatpush1.bf16.xpose.msra.mxu0 0
        %2791 = vmatprep.subr.bf16.mxu0 0
        %2792 = vmatpush1.bf16.xpose.msra.mxu0 0
        %2793 = vmatprep.subr.bf16.mxu0 0
        %2794 = vmatpush1.bf16.xpose.msra.mxu0 0
        %2795 = vmatprep.subr.bf16.mxu0 0
        %2796 = vmatpush1.bf16.xpose.msra.mxu0 0
        %2797 = vmatprep.subr.bf16.mxu0 0
        %2798 = vmatpush1.bf16.xpose.msra.mxu0 0
        %2799 = vmatprep.subr.bf16.mxu0 0
        %2800 = vmatpush1.bf16.xpose.msra.mxu0 0
        %2801 = vmatprep.subr.bf16.mxu0 0
        %2802 = vmatpush1.bf16.xpose.msra.mxu0 0
        %2803 = vmatprep.subr.bf16.mxu0 0
        %2804 = vmatpush1.bf16.xpose.msra.mxu0 0
        %2805 = vmatprep.subr.bf16.mxu0 0
        %2806 = vmatpush1.bf16.xpose.msra.mxu0 0
        %2807 = vmatprep.subr.bf16.mxu0 0
        %2808 = vmatpush1.bf16.xpose.msra.mxu0 0
        %2809 = vmatprep.subr.bf16.mxu0 0
        %2810 = vmatpush1.bf16.xpose.msra.mxu0 0
        %2811 = vmatprep.mubr.bf16.mxu0 0
        %2812 = vmatmul.mubr.bf16.gmra.mrb[0].mxu0 %v1545
        %v2813 = vpop.f32.mrb[0].mxu0
        %v2814 = vadd.f32 0.0, %v2813
        %v2815 = vpop.f32.mrb[0].mxu0
        %v2816 = vpop.f32.mrb[0].mxu0
        %v2817 = vpop.f32.mrb[0].mxu0
        %2818 = vdwg.mxu0
        %2819 = vmatprep.subr.bf16.mxu0 0
        %2820 = vmatpush1.bf16.xpose.msra.mxu0 %v1578
        %2821 = vmatprep.subr.bf16.mxu0 0
        %2822 = vmatpush1.bf16.xpose.msra.mxu0 0
        %2823 = vmatprep.subr.bf16.mxu0 0
        %2824 = vmatpush1.bf16.xpose.msra.mxu0 0
        %2825 = vmatprep.subr.bf16.mxu0 0
        %2826 = vmatpush1.bf16.xpose.msra.mxu0 0
        %2827 = vmatprep.subr.bf16.mxu0 0
        %2828 = vmatpush1.bf16.xpose.msra.mxu0 0
        %2829 = vmatprep.subr.bf16.mxu0 0
        %2830 = vmatpush1.bf16.xpose.msra.mxu0 0
        %2831 = vmatprep.subr.bf16.mxu0 0
        %2832 = vmatpush1.bf16.xpose.msra.mxu0 0
        %2833 = vmatprep.subr.bf16.mxu0 0
        %2834 = vmatpush1.bf16.xpose.msra.mxu0 0
        %2835 = vmatprep.subr.bf16.mxu0 0
        %2836 = vmatpush1.bf16.xpose.msra.mxu0 0
        %2837 = vmatprep.subr.bf16.mxu0 0
        %2838 = vmatpush1.bf16.xpose.msra.mxu0 0
        %2839 = vmatprep.subr.bf16.mxu0 0
        %2840 = vmatpush1.bf16.xpose.msra.mxu0 0
        %2841 = vmatprep.subr.bf16.mxu0 0
        %2842 = vmatpush1.bf16.xpose.msra.mxu0 0
        %2843 = vmatprep.subr.bf16.mxu0 0
        %2844 = vmatpush1.bf16.xpose.msra.mxu0 0
        %2845 = vmatprep.subr.bf16.mxu0 0
        %2846 = vmatpush1.bf16.xpose.msra.mxu0 0
        %2847 = vmatprep.subr.bf16.mxu0 0
        %2848 = vmatpush1.bf16.xpose.msra.mxu0 0
        %2849 = vmatprep.subr.bf16.mxu0 0
        %2850 = vmatpush1.bf16.xpose.msra.mxu0 0
        %2851 = vmatprep.mubr.bf16.mxu0 0
        %2852 = vmatmul.mubr.bf16.gmra.mrb[0].mxu0 %v1546
        %v2853 = vpop.f32.mrb[0].mxu0
        %v2854 = vadd.f32 0.0, %v2853
        %v2855 = vpop.f32.mrb[0].mxu0
        %v2856 = vpop.f32.mrb[0].mxu0
        %v2857 = vpop.f32.mrb[0].mxu0
        %2858 = vdwg.mxu0
        %v2859 = vmul.f32 %v1614, 0.088388346
        %v2860 = vmul.f32 %v1654, 0.088388346
        %v2861 = vmul.f32 %v1694, 0.088388346
        %v2862 = vmul.f32 %v1734, 0.088388346
        %v2863 = vmul.f32 %v1774, 0.088388346
        %v2864 = vmul.f32 %v1814, 0.088388346
        %v2865 = vmul.f32 %v1854, 0.088388346
        %v2866 = vmul.f32 %v1894, 0.088388346
        %v2867 = vmul.f32 %v1934, 0.088388346
        %v2868 = vmul.f32 %v1974, 0.088388346
        %v2869 = vmul.f32 %v2014, 0.088388346
        %v2870 = vmul.f32 %v2054, 0.088388346
        %v2871 = vmul.f32 %v2094, 0.088388346
        %v2872 = vmul.f32 %v2134, 0.088388346
        %v2873 = vmul.f32 %v2174, 0.088388346
        %v2874 = vmul.f32 %v2214, 0.088388346
        %v2875 = vmul.f32 %v2254, 0.088388346
        %v2876 = vmul.f32 %v2294, 0.088388346
        %v2877 = vmul.f32 %v2334, 0.088388346
        %v2878 = vmul.f32 %v2374, 0.088388346
        %v2879 = vmul.f32 %v2414, 0.088388346
        %v2880 = vmul.f32 %v2454, 0.088388346
        %v2881 = vmul.f32 %v2494, 0.088388346
        %v2882 = vmul.f32 %v2534, 0.088388346
        %v2883 = vmul.f32 %v2574, 0.088388346
        %v2884 = vmul.f32 %v2614, 0.088388346
        %v2885 = vmul.f32 %v2654, 0.088388346
        %v2886 = vmul.f32 %v2694, 0.088388346
        %v2887 = vmul.f32 %v2734, 0.088388346
        %v2888 = vmul.f32 %v2774, 0.088388346
        %v2889 = vmul.f32 %v2814, 0.088388346
        %v2890 = vmul.f32 %v2854, 0.088388346
        %vm2891 = vcmask 64512
        %v2892 = vsel %vm2891, %v2859, -inf
        %2893 = vmax.xlane.f32.xlu0 %v2892
        %v2894 = vpop.xlane.xlu0 %2893
        %v2895 = vsel %vm2891, %v2860, -inf
        %2896 = vmax.xlane.f32.xlu0 %v2895
        %v2897 = vpop.xlane.xlu0 %2896
        %v2898 = vsel %vm2891, %v2861, -inf
        %2899 = vmax.xlane.f32.xlu0 %v2898
        %v2900 = vpop.xlane.xlu0 %2899
        %v2901 = vsel %vm2891, %v2862, -inf
        %2902 = vmax.xlane.f32.xlu0 %v2901
        %v2903 = vpop.xlane.xlu0 %2902
        %v2904 = vsel %vm2891, %v2863, -inf
        %2905 = vmax.xlane.f32.xlu0 %v2904
        %v2906 = vpop.xlane.xlu0 %2905
        %v2907 = vsel %vm2891, %v2864, -inf
        %2908 = vmax.xlane.f32.xlu0 %v2907
        %v2909 = vpop.xlane.xlu0 %2908
        %v2910 = vsel %vm2891, %v2865, -inf
        %2911 = vmax.xlane.f32.xlu0 %v2910
        %v2912 = vpop.xlane.xlu0 %2911
        %v2913 = vsel %vm2891, %v2866, -inf
        %2914 = vmax.xlane.f32.xlu0 %v2913
        %v2915 = vpop.xlane.xlu0 %2914
        %v2916 = vsel %vm2891, %v2867, -inf
        %2917 = vmax.xlane.f32.xlu0 %v2916
        %v2918 = vpop.xlane.xlu0 %2917
        %v2919 = vsel %vm2891, %v2868, -inf
        %2920 = vmax.xlane.f32.xlu0 %v2919
        %v2921 = vpop.xlane.xlu0 %2920
        %v2922 = vsel %vm2891, %v2869, -inf
        %2923 = vmax.xlane.f32.xlu0 %v2922
        %v2924 = vpop.xlane.xlu0 %2923
        %v2925 = vsel %vm2891, %v2870, -inf
        %2926 = vmax.xlane.f32.xlu0 %v2925
        %v2927 = vpop.xlane.xlu0 %2926
        %v2928 = vsel %vm2891, %v2871, -inf
        %2929 = vmax.xlane.f32.xlu0 %v2928
        %v2930 = vpop.xlane.xlu0 %2929
        %v2931 = vsel %vm2891, %v2872, -inf
        %2932 = vmax.xlane.f32.xlu0 %v2931
        %v2933 = vpop.xlane.xlu0 %2932
        %v2934 = vsel %vm2891, %v2873, -inf
        %2935 = vmax.xlane.f32.xlu0 %v2934
        %v2936 = vpop.xlane.xlu0 %2935
        %v2937 = vsel %vm2891, %v2874, -inf
        %2938 = vmax.xlane.f32.xlu0 %v2937
        %v2939 = vpop.xlane.xlu0 %2938
        %v2940 = vsel %vm2891, %v2875, -inf
        %2941 = vmax.xlane.f32.xlu0 %v2940
        %v2942 = vpop.xlane.xlu0 %2941
        %v2943 = vsel %vm2891, %v2876, -inf
        %2944 = vmax.xlane.f32.xlu0 %v2943
        %v2945 = vpop.xlane.xlu0 %2944
        %v2946 = vsel %vm2891, %v2877, -inf
        %2947 = vmax.xlane.f32.xlu0 %v2946
        %v2948 = vpop.xlane.xlu0 %2947
        %v2949 = vsel %vm2891, %v2878, -inf
        %2950 = vmax.xlane.f32.xlu0 %v2949
        %v2951 = vpop.xlane.xlu0 %2950
        %v2952 = vsel %vm2891, %v2879, -inf
        %2953 = vmax.xlane.f32.xlu0 %v2952
        %v2954 = vpop.xlane.xlu0 %2953
        %v2955 = vsel %vm2891, %v2880, -inf
        %2956 = vmax.xlane.f32.xlu0 %v2955
        %v2957 = vpop.xlane.xlu0 %2956
        %v2958 = vsel %vm2891, %v2881, -inf
        %2959 = vmax.xlane.f32.xlu0 %v2958
        %v2960 = vpop.xlane.xlu0 %2959
        %v2961 = vsel %vm2891, %v2882, -inf
        %2962 = vmax.xlane.f32.xlu0 %v2961
        %v2963 = vpop.xlane.xlu0 %2962
        %v2964 = vsel %vm2891, %v2883, -inf
        %2965 = vmax.xlane.f32.xlu0 %v2964
        %v2966 = vpop.xlane.xlu0 %2965
        %v2967 = vsel %vm2891, %v2884, -inf
        %2968 = vmax.xlane.f32.xlu0 %v2967
        %v2969 = vpop.xlane.xlu0 %2968
        %v2970 = vsel %vm2891, %v2885, -inf
        %2971 = vmax.xlane.f32.xlu0 %v2970
        %v2972 = vpop.xlane.xlu0 %2971
        %v2973 = vsel %vm2891, %v2886, -inf
        %2974 = vmax.xlane.f32.xlu0 %v2973
        %v2975 = vpop.xlane.xlu0 %2974
        %v2976 = vsel %vm2891, %v2887, -inf
        %2977 = vmax.xlane.f32.xlu0 %v2976
        %v2978 = vpop.xlane.xlu0 %2977
        %v2979 = vsel %vm2891, %v2888, -inf
        %2980 = vmax.xlane.f32.xlu0 %v2979
        %v2981 = vpop.xlane.xlu0 %2980
        %v2982 = vsel %vm2891, %v2889, -inf
        %2983 = vmax.xlane.f32.xlu0 %v2982
        %v2984 = vpop.xlane.xlu0 %2983
        %v2985 = vsel %vm2891, %v2890, -inf
        %2986 = vmax.xlane.f32.xlu0 %v2985
        %v2987 = vpop.xlane.xlu0 %2986
        %v2988 = vsub.f32 %v2859, %v2894
        %v2989 = vsub.f32 %v2860, %v2897
        %v2990 = vsub.f32 %v2861, %v2900
        %v2991 = vsub.f32 %v2862, %v2903
        %v2992 = vsub.f32 %v2863, %v2906
        %v2993 = vsub.f32 %v2864, %v2909
        %v2994 = vsub.f32 %v2865, %v2912
        %v2995 = vsub.f32 %v2866, %v2915
        %v2996 = vsub.f32 %v2867, %v2918
        %v2997 = vsub.f32 %v2868, %v2921
        %v2998 = vsub.f32 %v2869, %v2924
        %v2999 = vsub.f32 %v2870, %v2927
        %v3000 = vsub.f32 %v2871, %v2930
        %v3001 = vsub.f32 %v2872, %v2933
        %v3002 = vsub.f32 %v2873, %v2936
        %v3003 = vsub.f32 %v2874, %v2939
        %v3004 = vsub.f32 %v2875, %v2942
        %v3005 = vsub.f32 %v2876, %v2945
        %v3006 = vsub.f32 %v2877, %v2948
        %v3007 = vsub.f32 %v2878, %v2951
        %v3008 = vsub.f32 %v2879, %v2954
        %v3009 = vsub.f32 %v2880, %v2957
        %v3010 = vsub.f32 %v2881, %v2960
        %v3011 = vsub.f32 %v2882, %v2963
        %v3012 = vsub.f32 %v2883, %v2966
        %v3013 = vsub.f32 %v2884, %v2969
        %v3014 = vsub.f32 %v2885, %v2972
        %v3015 = vsub.f32 %v2886, %v2975
        %v3016 = vsub.f32 %v2887, %v2978
        %v3017 = vsub.f32 %v2888, %v2981
        %v3018 = vsub.f32 %v2889, %v2984
        %v3019 = vsub.f32 %v2890, %v2987
        %v3020 = vmul.f32 %v2988, 1.442695
        %v3021 = vpow.pop %v3020
        %v3022 = vmul.f32 %v2989, 1.442695
        %v3023 = vpow.pop %v3022
        %v3024 = vmul.f32 %v2990, 1.442695
        %v3025 = vpow.pop %v3024
        %v3026 = vmul.f32 %v2991, 1.442695
        %v3027 = vpow.pop %v3026
        %v3028 = vmul.f32 %v2992, 1.442695
        %v3029 = vpow.pop %v3028
        %v3030 = vmul.f32 %v2993, 1.442695
        %v3031 = vpow.pop %v3030
        %v3032 = vmul.f32 %v2994, 1.442695
        %v3033 = vpow.pop %v3032
        %v3034 = vmul.f32 %v2995, 1.442695
        %v3035 = vpow.pop %v3034
        %v3036 = vmul.f32 %v2996, 1.442695
        %v3037 = vpow.pop %v3036
        %v3038 = vmul.f32 %v2997, 1.442695
        %v3039 = vpow.pop %v3038
        %v3040 = vmul.f32 %v2998, 1.442695
        %v3041 = vpow.pop %v3040
        %v3042 = vmul.f32 %v2999, 1.442695
        %v3043 = vpow.pop %v3042
        %v3044 = vmul.f32 %v3000, 1.442695
        %v3045 = vpow.pop %v3044
        %v3046 = vmul.f32 %v3001, 1.442695
        %v3047 = vpow.pop %v3046
        %v3048 = vmul.f32 %v3002, 1.442695
        %v3049 = vpow.pop %v3048
        %v3050 = vmul.f32 %v3003, 1.442695
        %v3051 = vpow.pop %v3050
        %v3052 = vmul.f32 %v3004, 1.442695
        %v3053 = vpow.pop %v3052
        %v3054 = vmul.f32 %v3005, 1.442695
        %v3055 = vpow.pop %v3054
        %v3056 = vmul.f32 %v3006, 1.442695
        %v3057 = vpow.pop %v3056
        %v3058 = vmul.f32 %v3007, 1.442695
        %v3059 = vpow.pop %v3058
        %v3060 = vmul.f32 %v3008, 1.442695
        %v3061 = vpow.pop %v3060
        %v3062 = vmul.f32 %v3009, 1.442695
        %v3063 = vpow.pop %v3062
        %v3064 = vmul.f32 %v3010, 1.442695
        %v3065 = vpow.pop %v3064
        %v3066 = vmul.f32 %v3011, 1.442695
        %v3067 = vpow.pop %v3066
        %v3068 = vmul.f32 %v3012, 1.442695
        %v3069 = vpow.pop %v3068
        %v3070 = vmul.f32 %v3013, 1.442695
        %v3071 = vpow.pop %v3070
        %v3072 = vmul.f32 %v3014, 1.442695
        %v3073 = vpow.pop %v3072
        %v3074 = vmul.f32 %v3015, 1.442695
        %v3075 = vpow.pop %v3074
        %v3076 = vmul.f32 %v3016, 1.442695
        %v3077 = vpow.pop %v3076
        %v3078 = vmul.f32 %v3017, 1.442695
        %v3079 = vpow.pop %v3078
        %v3080 = vmul.f32 %v3018, 1.442695
        %v3081 = vpow.pop %v3080
        %v3082 = vmul.f32 %v3019, 1.442695
        %v3083 = vpow.pop %v3082
        %v3084 = vsel %vm2891, %v3021, 0.0
        %3085 = vadd.xlane.f32.xlu0 %v3084
        %v3086 = vpop.xlane.xlu0 %3085
        %v3087 = vsel %vm2891, %v3023, 0.0
        %3088 = vadd.xlane.f32.xlu0 %v3087
        %v3089 = vpop.xlane.xlu0 %3088
        %v3090 = vsel %vm2891, %v3025, 0.0
        %3091 = vadd.xlane.f32.xlu0 %v3090
        %v3092 = vpop.xlane.xlu0 %3091
        %v3093 = vsel %vm2891, %v3027, 0.0
        %3094 = vadd.xlane.f32.xlu0 %v3093
        %v3095 = vpop.xlane.xlu0 %3094
        %v3096 = vsel %vm2891, %v3029, 0.0
        %3097 = vadd.xlane.f32.xlu0 %v3096
        %v3098 = vpop.xlane.xlu0 %3097
        %v3099 = vsel %vm2891, %v3031, 0.0
        %3100 = vadd.xlane.f32.xlu0 %v3099
        %v3101 = vpop.xlane.xlu0 %3100
        %v3102 = vsel %vm2891, %v3033, 0.0
        %3103 = vadd.xlane.f32.xlu0 %v3102
        %v3104 = vpop.xlane.xlu0 %3103
        %v3105 = vsel %vm2891, %v3035, 0.0
        %3106 = vadd.xlane.f32.xlu0 %v3105
        %v3107 = vpop.xlane.xlu0 %3106
        %v3108 = vsel %vm2891, %v3037, 0.0
        %3109 = vadd.xlane.f32.xlu0 %v3108
        %v3110 = vpop.xlane.xlu0 %3109
        %v3111 = vsel %vm2891, %v3039, 0.0
        %3112 = vadd.xlane.f32.xlu0 %v3111
        %v3113 = vpop.xlane.xlu0 %3112
        %v3114 = vsel %vm2891, %v3041, 0.0
        %3115 = vadd.xlane.f32.xlu0 %v3114
        %v3116 = vpop.xlane.xlu0 %3115
        %v3117 = vsel %vm2891, %v3043, 0.0
        %3118 = vadd.xlane.f32.xlu0 %v3117
        %v3119 = vpop.xlane.xlu0 %3118
        %v3120 = vsel %vm2891, %v3045, 0.0
        %3121 = vadd.xlane.f32.xlu0 %v3120
        %v3122 = vpop.xlane.xlu0 %3121
        %v3123 = vsel %vm2891, %v3047, 0.0
        %3124 = vadd.xlane.f32.xlu0 %v3123
        %v3125 = vpop.xlane.xlu0 %3124
        %v3126 = vsel %vm2891, %v3049, 0.0
        %3127 = vadd.xlane.f32.xlu0 %v3126
        %v3128 = vpop.xlane.xlu0 %3127
        %v3129 = vsel %vm2891, %v3051, 0.0
        %3130 = vadd.xlane.f32.xlu0 %v3129
        %v3131 = vpop.xlane.xlu0 %3130
        %v3132 = vsel %vm2891, %v3053, 0.0
        %3133 = vadd.xlane.f32.xlu0 %v3132
        %v3134 = vpop.xlane.xlu0 %3133
        %v3135 = vsel %vm2891, %v3055, 0.0
        %3136 = vadd.xlane.f32.xlu0 %v3135
        %v3137 = vpop.xlane.xlu0 %3136
        %v3138 = vsel %vm2891, %v3057, 0.0
        %3139 = vadd.xlane.f32.xlu0 %v3138
        %v3140 = vpop.xlane.xlu0 %3139
        %v3141 = vsel %vm2891, %v3059, 0.0
        %3142 = vadd.xlane.f32.xlu0 %v3141
        %v3143 = vpop.xlane.xlu0 %3142
        %v3144 = vsel %vm2891, %v3061, 0.0
        %3145 = vadd.xlane.f32.xlu0 %v3144
        %v3146 = vpop.xlane.xlu0 %3145
        %v3147 = vsel %vm2891, %v3063, 0.0
        %3148 = vadd.xlane.f32.xlu0 %v3147
        %v3149 = vpop.xlane.xlu0 %3148
        %v3150 = vsel %vm2891, %v3065, 0.0
        %3151 = vadd.xlane.f32.xlu0 %v3150
        %v3152 = vpop.xlane.xlu0 %3151
        %v3153 = vsel %vm2891, %v3067, 0.0
        %3154 = vadd.xlane.f32.xlu0 %v3153
        %v3155 = vpop.xlane.xlu0 %3154
        %v3156 = vsel %vm2891, %v3069, 0.0
        %3157 = vadd.xlane.f32.xlu0 %v3156
        %v3158 = vpop.xlane.xlu0 %3157
        %v3159 = vsel %vm2891, %v3071, 0.0
        %3160 = vadd.xlane.f32.xlu0 %v3159
        %v3161 = vpop.xlane.xlu0 %3160
        %v3162 = vsel %vm2891, %v3073, 0.0
        %3163 = vadd.xlane.f32.xlu0 %v3162
        %v3164 = vpop.xlane.xlu0 %3163
        %v3165 = vsel %vm2891, %v3075, 0.0
        %3166 = vadd.xlane.f32.xlu0 %v3165
        %v3167 = vpop.xlane.xlu0 %3166
        %v3168 = vsel %vm2891, %v3077, 0.0
        %3169 = vadd.xlane.f32.xlu0 %v3168
        %v3170 = vpop.xlane.xlu0 %3169
        %v3171 = vsel %vm2891, %v3079, 0.0
        %3172 = vadd.xlane.f32.xlu0 %v3171
        %v3173 = vpop.xlane.xlu0 %3172
        %v3174 = vsel %vm2891, %v3081, 0.0
        %3175 = vadd.xlane.f32.xlu0 %v3174
        %v3176 = vpop.xlane.xlu0 %3175
        %v3177 = vsel %vm2891, %v3083, 0.0
        %3178 = vadd.xlane.f32.xlu0 %v3177
        %v3179 = vpop.xlane.xlu0 %3178
        %v3180 = vrcp.pop %v3086
        %v3181 = vmul.f32 %v3021, %v3180
        %v3182 = vrcp.pop %v3089
        %v3183 = vmul.f32 %v3023, %v3182
        %v3184 = vrcp.pop %v3092
        %v3185 = vmul.f32 %v3025, %v3184
        %v3186 = vrcp.pop %v3095
        %v3187 = vmul.f32 %v3027, %v3186
        %v3188 = vrcp.pop %v3098
        %v3189 = vmul.f32 %v3029, %v3188
        %v3190 = vrcp.pop %v3101
        %v3191 = vmul.f32 %v3031, %v3190
        %v3192 = vrcp.pop %v3104
        %v3193 = vmul.f32 %v3033, %v3192
        %v3194 = vrcp.pop %v3107
        %v3195 = vmul.f32 %v3035, %v3194
        %v3196 = vrcp.pop %v3110
        %v3197 = vmul.f32 %v3037, %v3196
        %v3198 = vrcp.pop %v3113
        %v3199 = vmul.f32 %v3039, %v3198
        %v3200 = vrcp.pop %v3116
        %v3201 = vmul.f32 %v3041, %v3200
        %v3202 = vrcp.pop %v3119
        %v3203 = vmul.f32 %v3043, %v3202
        %v3204 = vrcp.pop %v3122
        %v3205 = vmul.f32 %v3045, %v3204
        %v3206 = vrcp.pop %v3125
        %v3207 = vmul.f32 %v3047, %v3206
        %v3208 = vrcp.pop %v3128
        %v3209 = vmul.f32 %v3049, %v3208
        %v3210 = vrcp.pop %v3131
        %v3211 = vmul.f32 %v3051, %v3210
        %v3212 = vrcp.pop %v3134
        %v3213 = vmul.f32 %v3053, %v3212
        %v3214 = vrcp.pop %v3137
        %v3215 = vmul.f32 %v3055, %v3214
        %v3216 = vrcp.pop %v3140
        %v3217 = vmul.f32 %v3057, %v3216
        %v3218 = vrcp.pop %v3143
        %v3219 = vmul.f32 %v3059, %v3218
        %v3220 = vrcp.pop %v3146
        %v3221 = vmul.f32 %v3061, %v3220
        %v3222 = vrcp.pop %v3149
        %v3223 = vmul.f32 %v3063, %v3222
        %v3224 = vrcp.pop %v3152
        %v3225 = vmul.f32 %v3065, %v3224
        %v3226 = vrcp.pop %v3155
        %v3227 = vmul.f32 %v3067, %v3226
        %v3228 = vrcp.pop %v3158
        %v3229 = vmul.f32 %v3069, %v3228
        %v3230 = vrcp.pop %v3161
        %v3231 = vmul.f32 %v3071, %v3230
        %v3232 = vrcp.pop %v3164
        %v3233 = vmul.f32 %v3073, %v3232
        %v3234 = vrcp.pop %v3167
        %v3235 = vmul.f32 %v3075, %v3234
        %v3236 = vrcp.pop %v3170
        %v3237 = vmul.f32 %v3077, %v3236
        %v3238 = vrcp.pop %v3173
        %v3239 = vmul.f32 %v3079, %v3238
        %v3240 = vrcp.pop %v3176
        %v3241 = vmul.f32 %v3081, %v3240
        %v3242 = vrcp.pop %v3179
        %v3243 = vmul.f32 %v3083, %v3242
        %v3244 = vpack.c.bf16 %v3181, %v3181
        %v3245 = vpack.c.bf16 %v3183, %v3183
        %v3246 = vpack.c.bf16 %v3185, %v3185
        %v3247 = vpack.c.bf16 %v3187, %v3187
        %v3248 = vpack.c.bf16 %v3189, %v3189
        %v3249 = vpack.c.bf16 %v3191, %v3191
        %v3250 = vpack.c.bf16 %v3193, %v3193
        %v3251 = vpack.c.bf16 %v3195, %v3195
        %v3252 = vpack.c.bf16 %v3197, %v3197
        %v3253 = vpack.c.bf16 %v3199, %v3199
        %v3254 = vpack.c.bf16 %v3201, %v3201
        %v3255 = vpack.c.bf16 %v3203, %v3203
        %v3256 = vpack.c.bf16 %v3205, %v3205
        %v3257 = vpack.c.bf16 %v3207, %v3207
        %v3258 = vpack.c.bf16 %v3209, %v3209
        %v3259 = vpack.c.bf16 %v3211, %v3211
        %v3260 = vpack.c.bf16 %v3213, %v3213
        %v3261 = vpack.c.bf16 %v3215, %v3215
        %v3262 = vpack.c.bf16 %v3217, %v3217
        %v3263 = vpack.c.bf16 %v3219, %v3219
        %v3264 = vpack.c.bf16 %v3221, %v3221
        %v3265 = vpack.c.bf16 %v3223, %v3223
        %v3266 = vpack.c.bf16 %v3225, %v3225
        %v3267 = vpack.c.bf16 %v3227, %v3227
        %v3268 = vpack.c.bf16 %v3229, %v3229
        %v3269 = vpack.c.bf16 %v3231, %v3231
        %v3270 = vpack.c.bf16 %v3233, %v3233
        %v3271 = vpack.c.bf16 %v3235, %v3235
        %v3272 = vpack.c.bf16 %v3237, %v3237
        %v3273 = vpack.c.bf16 %v3239, %v3239
        %v3274 = vpack.c.bf16 %v3241, %v3241
        %v3275 = vpack.c.bf16 %v3243, %v3243
        %v3276 = vpack.c.bf16 %v1389, %v1389
        %v3277 = vpack.c.bf16 %v1392, %v1392
        %v3278 = vpack.c.bf16 %v1397, %v1397
        %v3279 = vpack.c.bf16 %v1400, %v1400
        %v3280 = vpack.c.bf16 %v1405, %v1405
        %v3281 = vpack.c.bf16 %v1408, %v1408
        %v3282 = vpack.c.bf16 %v1413, %v1413
        %v3283 = vpack.c.bf16 %v1416, %v1416
        %v3284 = vpack.c.bf16 %v1421, %v1421
        %v3285 = vpack.c.bf16 %v1424, %v1424
        %v3286 = vpack.c.bf16 %v1429, %v1429
        %v3287 = vpack.c.bf16 %v1432, %v1432
        %v3288 = vpack.c.bf16 %v1437, %v1437
        %v3289 = vpack.c.bf16 %v1440, %v1440
        %v3290 = vpack.c.bf16 %v1445, %v1445
        %v3291 = vpack.c.bf16 %v1448, %v1448
        %v3292 = vpack.c.bf16 %v1453, %v1453
        %v3293 = vpack.c.bf16 %v1456, %v1456
        %v3294 = vpack.c.bf16 %v1461, %v1461
        %v3295 = vpack.c.bf16 %v1464, %v1464
        %v3296 = vpack.c.bf16 %v1469, %v1469
        %v3297 = vpack.c.bf16 %v1472, %v1472
        %v3298 = vpack.c.bf16 %v1477, %v1477
        %v3299 = vpack.c.bf16 %v1480, %v1480
        %v3300 = vpack.c.bf16 %v1485, %v1485
        %v3301 = vpack.c.bf16 %v1488, %v1488
        %v3302 = vpack.c.bf16 %v1493, %v1493
        %v3303 = vpack.c.bf16 %v1496, %v1496
        %v3304 = vpack.c.bf16 %v1501, %v1501
        %v3305 = vpack.c.bf16 %v1504, %v1504
        %v3306 = vpack.c.bf16 %v1509, %v1509
        %v3307 = vpack.c.bf16 %v1512, %v1512
        %v3309 = vsel %vm2891, %v3244, 0
        %vm3311 = vcmask 1043456
        %v3313 = vsel %vm3311, %v3276, 0
        %3315 = vmatprep.subr.bf16.mxu0 0
        %3316 = vmatpush1.bf16.msra.mxu0 %v3313
        %3317 = vmatprep.subr.bf16.mxu0 0
        %3318 = vmatpush1.bf16.msra.mxu0 0
        %3319 = vmatprep.subr.bf16.mxu0 0
        %3320 = vmatpush1.bf16.msra.mxu0 0
        %3321 = vmatprep.subr.bf16.mxu0 0
        %3322 = vmatpush1.bf16.msra.mxu0 0
        %3323 = vmatprep.subr.bf16.mxu0 0
        %3324 = vmatpush1.bf16.msra.mxu0 0
        %3325 = vmatprep.subr.bf16.mxu0 0
        %3326 = vmatpush1.bf16.msra.mxu0 0
        %3327 = vmatprep.subr.bf16.mxu0 0
        %3328 = vmatpush1.bf16.msra.mxu0 0
        %3329 = vmatprep.subr.bf16.mxu0 0
        %3330 = vmatpush1.bf16.msra.mxu0 0
        %3331 = vmatprep.subr.bf16.mxu0 0
        %3332 = vmatpush1.bf16.msra.mxu0 0
        %3333 = vmatprep.subr.bf16.mxu0 0
        %3334 = vmatpush1.bf16.msra.mxu0 0
        %3335 = vmatprep.subr.bf16.mxu0 0
        %3336 = vmatpush1.bf16.msra.mxu0 0
        %3337 = vmatprep.subr.bf16.mxu0 0
        %3338 = vmatpush1.bf16.msra.mxu0 0
        %3339 = vmatprep.subr.bf16.mxu0 0
        %3340 = vmatpush1.bf16.msra.mxu0 0
        %3341 = vmatprep.subr.bf16.mxu0 0
        %3342 = vmatpush1.bf16.msra.mxu0 0
        %3343 = vmatprep.subr.bf16.mxu0 0
        %3344 = vmatpush1.bf16.msra.mxu0 0
        %3345 = vmatprep.subr.bf16.mxu0 0
        %3346 = vmatpush1.bf16.msra.mxu0 0
        %3347 = vmatprep.mubr.bf16.mxu0 0
        %3348 = vmatmul.mubr.bf16.gmra.mrb[0].mxu0 %v3309
        %v3349 = vpop.f32.mrb[0].mxu0
        %v3350 = vadd.f32 0.0, %v3349
        %v3351 = vpop.f32.mrb[0].mxu0
        %v3352 = vpop.f32.mrb[0].mxu0
        %v3353 = vpop.f32.mrb[0].mxu0
        %3354 = vdwg.mxu0
        %v3356 = vsel %vm2891, %v3245, 0
        %v3359 = vsel %vm3311, %v3277, 0
        %3361 = vmatprep.subr.bf16.mxu0 0
        %3362 = vmatpush1.bf16.msra.mxu0 %v3359
        %3363 = vmatprep.subr.bf16.mxu0 0
        %3364 = vmatpush1.bf16.msra.mxu0 0
        %3365 = vmatprep.subr.bf16.mxu0 0
        %3366 = vmatpush1.bf16.msra.mxu0 0
        %3367 = vmatprep.subr.bf16.mxu0 0
        %3368 = vmatpush1.bf16.msra.mxu0 0
        %3369 = vmatprep.subr.bf16.mxu0 0
        %3370 = vmatpush1.bf16.msra.mxu0 0
        %3371 = vmatprep.subr.bf16.mxu0 0
        %3372 = vmatpush1.bf16.msra.mxu0 0
        %3373 = vmatprep.subr.bf16.mxu0 0
        %3374 = vmatpush1.bf16.msra.mxu0 0
        %3375 = vmatprep.subr.bf16.mxu0 0
        %3376 = vmatpush1.bf16.msra.mxu0 0
        %3377 = vmatprep.subr.bf16.mxu0 0
        %3378 = vmatpush1.bf16.msra.mxu0 0
        %3379 = vmatprep.subr.bf16.mxu0 0
        %3380 = vmatpush1.bf16.msra.mxu0 0
        %3381 = vmatprep.subr.bf16.mxu0 0
        %3382 = vmatpush1.bf16.msra.mxu0 0
        %3383 = vmatprep.subr.bf16.mxu0 0
        %3384 = vmatpush1.bf16.msra.mxu0 0
        %3385 = vmatprep.subr.bf16.mxu0 0
        %3386 = vmatpush1.bf16.msra.mxu0 0
        %3387 = vmatprep.subr.bf16.mxu0 0
        %3388 = vmatpush1.bf16.msra.mxu0 0
        %3389 = vmatprep.subr.bf16.mxu0 0
        %3390 = vmatpush1.bf16.msra.mxu0 0
        %3391 = vmatprep.subr.bf16.mxu0 0
        %3392 = vmatpush1.bf16.msra.mxu0 0
        %3393 = vmatprep.mubr.bf16.mxu0 0
        %3394 = vmatmul.mubr.bf16.gmra.mrb[0].mxu0 %v3356
        %v3395 = vpop.f32.mrb[0].mxu0
        %v3396 = vadd.f32 0.0, %v3395
        %v3397 = vpop.f32.mrb[0].mxu0
        %v3398 = vpop.f32.mrb[0].mxu0
        %v3399 = vpop.f32.mrb[0].mxu0
        %3400 = vdwg.mxu0
        %v3402 = vsel %vm2891, %v3246, 0
        %v3405 = vsel %vm3311, %v3278, 0
        %3407 = vmatprep.subr.bf16.mxu0 0
        %3408 = vmatpush1.bf16.msra.mxu0 %v3405
        %3409 = vmatprep.subr.bf16.mxu0 0
        %3410 = vmatpush1.bf16.msra.mxu0 0
        %3411 = vmatprep.subr.bf16.mxu0 0
        %3412 = vmatpush1.bf16.msra.mxu0 0
        %3413 = vmatprep.subr.bf16.mxu0 0
        %3414 = vmatpush1.bf16.msra.mxu0 0
        %3415 = vmatprep.subr.bf16.mxu0 0
        %3416 = vmatpush1.bf16.msra.mxu0 0
        %3417 = vmatprep.subr.bf16.mxu0 0
        %3418 = vmatpush1.bf16.msra.mxu0 0
        %3419 = vmatprep.subr.bf16.mxu0 0
        %3420 = vmatpush1.bf16.msra.mxu0 0
        %3421 = vmatprep.subr.bf16.mxu0 0
        %3422 = vmatpush1.bf16.msra.mxu0 0
        %3423 = vmatprep.subr.bf16.mxu0 0
        %3424 = vmatpush1.bf16.msra.mxu0 0
        %3425 = vmatprep.subr.bf16.mxu0 0
        %3426 = vmatpush1.bf16.msra.mxu0 0
        %3427 = vmatprep.subr.bf16.mxu0 0
        %3428 = vmatpush1.bf16.msra.mxu0 0
        %3429 = vmatprep.subr.bf16.mxu0 0
        %3430 = vmatpush1.bf16.msra.mxu0 0
        %3431 = vmatprep.subr.bf16.mxu0 0
        %3432 = vmatpush1.bf16.msra.mxu0 0
        %3433 = vmatprep.subr.bf16.mxu0 0
        %3434 = vmatpush1.bf16.msra.mxu0 0
        %3435 = vmatprep.subr.bf16.mxu0 0
        %3436 = vmatpush1.bf16.msra.mxu0 0
        %3437 = vmatprep.subr.bf16.mxu0 0
        %3438 = vmatpush1.bf16.msra.mxu0 0
        %3439 = vmatprep.mubr.bf16.mxu0 0
        %3440 = vmatmul.mubr.bf16.gmra.mrb[0].mxu0 %v3402
        %v3441 = vpop.f32.mrb[0].mxu0
        %v3442 = vadd.f32 0.0, %v3441
        %v3443 = vpop.f32.mrb[0].mxu0
        %v3444 = vpop.f32.mrb[0].mxu0
        %v3445 = vpop.f32.mrb[0].mxu0
        %3446 = vdwg.mxu0
        %v3448 = vsel %vm2891, %v3247, 0
        %v3451 = vsel %vm3311, %v3279, 0
        %3453 = vmatprep.subr.bf16.mxu0 0
        %3454 = vmatpush1.bf16.msra.mxu0 %v3451
        %3455 = vmatprep.subr.bf16.mxu0 0
        %3456 = vmatpush1.bf16.msra.mxu0 0
        %3457 = vmatprep.subr.bf16.mxu0 0
        %3458 = vmatpush1.bf16.msra.mxu0 0
        %3459 = vmatprep.subr.bf16.mxu0 0
        %3460 = vmatpush1.bf16.msra.mxu0 0
        %3461 = vmatprep.subr.bf16.mxu0 0
        %3462 = vmatpush1.bf16.msra.mxu0 0
        %3463 = vmatprep.subr.bf16.mxu0 0
        %3464 = vmatpush1.bf16.msra.mxu0 0
        %3465 = vmatprep.subr.bf16.mxu0 0
        %3466 = vmatpush1.bf16.msra.mxu0 0
        %3467 = vmatprep.subr.bf16.mxu0 0
        %3468 = vmatpush1.bf16.msra.mxu0 0
        %3469 = vmatprep.subr.bf16.mxu0 0
        %3470 = vmatpush1.bf16.msra.mxu0 0
        %3471 = vmatprep.subr.bf16.mxu0 0
        %3472 = vmatpush1.bf16.msra.mxu0 0
        %3473 = vmatprep.subr.bf16.mxu0 0
        %3474 = vmatpush1.bf16.msra.mxu0 0
        %3475 = vmatprep.subr.bf16.mxu0 0
        %3476 = vmatpush1.bf16.msra.mxu0 0
        %3477 = vmatprep.subr.bf16.mxu0 0
        %3478 = vmatpush1.bf16.msra.mxu0 0
        %3479 = vmatprep.subr.bf16.mxu0 0
        %3480 = vmatpush1.bf16.msra.mxu0 0
        %3481 = vmatprep.subr.bf16.mxu0 0
        %3482 = vmatpush1.bf16.msra.mxu0 0
        %3483 = vmatprep.subr.bf16.mxu0 0
        %3484 = vmatpush1.bf16.msra.mxu0 0
        %3485 = vmatprep.mubr.bf16.mxu0 0
        %3486 = vmatmul.mubr.bf16.gmra.mrb[0].mxu0 %v3448
        %v3487 = vpop.f32.mrb[0].mxu0
        %v3488 = vadd.f32 0.0, %v3487
        %v3489 = vpop.f32.mrb[0].mxu0
        %v3490 = vpop.f32.mrb[0].mxu0
        %v3491 = vpop.f32.mrb[0].mxu0
        %3492 = vdwg.mxu0
        %v3494 = vsel %vm2891, %v3248, 0
        %v3497 = vsel %vm3311, %v3280, 0
        %3499 = vmatprep.subr.bf16.mxu0 0
        %3500 = vmatpush1.bf16.msra.mxu0 %v3497
        %3501 = vmatprep.subr.bf16.mxu0 0
        %3502 = vmatpush1.bf16.msra.mxu0 0
        %3503 = vmatprep.subr.bf16.mxu0 0
        %3504 = vmatpush1.bf16.msra.mxu0 0
        %3505 = vmatprep.subr.bf16.mxu0 0
        %3506 = vmatpush1.bf16.msra.mxu0 0
        %3507 = vmatprep.subr.bf16.mxu0 0
        %3508 = vmatpush1.bf16.msra.mxu0 0
        %3509 = vmatprep.subr.bf16.mxu0 0
        %3510 = vmatpush1.bf16.msra.mxu0 0
        %3511 = vmatprep.subr.bf16.mxu0 0
        %3512 = vmatpush1.bf16.msra.mxu0 0
        %3513 = vmatprep.subr.bf16.mxu0 0
        %3514 = vmatpush1.bf16.msra.mxu0 0
        %3515 = vmatprep.subr.bf16.mxu0 0
        %3516 = vmatpush1.bf16.msra.mxu0 0
        %3517 = vmatprep.subr.bf16.mxu0 0
        %3518 = vmatpush1.bf16.msra.mxu0 0
        %3519 = vmatprep.subr.bf16.mxu0 0
        %3520 = vmatpush1.bf16.msra.mxu0 0
        %3521 = vmatprep.subr.bf16.mxu0 0
        %3522 = vmatpush1.bf16.msra.mxu0 0
        %3523 = vmatprep.subr.bf16.mxu0 0
        %3524 = vmatpush1.bf16.msra.mxu0 0
        %3525 = vmatprep.subr.bf16.mxu0 0
        %3526 = vmatpush1.bf16.msra.mxu0 0
        %3527 = vmatprep.subr.bf16.mxu0 0
        %3528 = vmatpush1.bf16.msra.mxu0 0
        %3529 = vmatprep.subr.bf16.mxu0 0
        %3530 = vmatpush1.bf16.msra.mxu0 0
        %3531 = vmatprep.mubr.bf16.mxu0 0
        %3532 = vmatmul.mubr.bf16.gmra.mrb[0].mxu0 %v3494
        %v3533 = vpop.f32.mrb[0].mxu0
        %v3534 = vadd.f32 0.0, %v3533
        %v3535 = vpop.f32.mrb[0].mxu0
        %v3536 = vpop.f32.mrb[0].mxu0
        %v3537 = vpop.f32.mrb[0].mxu0
        %3538 = vdwg.mxu0
        %v3540 = vsel %vm2891, %v3249, 0
        %v3543 = vsel %vm3311, %v3281, 0
        %3545 = vmatprep.subr.bf16.mxu0 0
        %3546 = vmatpush1.bf16.msra.mxu0 %v3543
        %3547 = vmatprep.subr.bf16.mxu0 0
        %3548 = vmatpush1.bf16.msra.mxu0 0
        %3549 = vmatprep.subr.bf16.mxu0 0
        %3550 = vmatpush1.bf16.msra.mxu0 0
        %3551 = vmatprep.subr.bf16.mxu0 0
        %3552 = vmatpush1.bf16.msra.mxu0 0
        %3553 = vmatprep.subr.bf16.mxu0 0
        %3554 = vmatpush1.bf16.msra.mxu0 0
        %3555 = vmatprep.subr.bf16.mxu0 0
        %3556 = vmatpush1.bf16.msra.mxu0 0
        %3557 = vmatprep.subr.bf16.mxu0 0
        %3558 = vmatpush1.bf16.msra.mxu0 0
        %3559 = vmatprep.subr.bf16.mxu0 0
        %3560 = vmatpush1.bf16.msra.mxu0 0
        %3561 = vmatprep.subr.bf16.mxu0 0
        %3562 = vmatpush1.bf16.msra.mxu0 0
        %3563 = vmatprep.subr.bf16.mxu0 0
        %3564 = vmatpush1.bf16.msra.mxu0 0
        %3565 = vmatprep.subr.bf16.mxu0 0
        %3566 = vmatpush1.bf16.msra.mxu0 0
        %3567 = vmatprep.subr.bf16.mxu0 0
        %3568 = vmatpush1.bf16.msra.mxu0 0
        %3569 = vmatprep.subr.bf16.mxu0 0
        %3570 = vmatpush1.bf16.msra.mxu0 0
        %3571 = vmatprep.subr.bf16.mxu0 0
        %3572 = vmatpush1.bf16.msra.mxu0 0
        %3573 = vmatprep.subr.bf16.mxu0 0
        %3574 = vmatpush1.bf16.msra.mxu0 0
        %3575 = vmatprep.subr.bf16.mxu0 0
        %3576 = vmatpush1.bf16.msra.mxu0 0
        %3577 = vmatprep.mubr.bf16.mxu0 0
        %3578 = vmatmul.mubr.bf16.gmra.mrb[0].mxu0 %v3540
        %v3579 = vpop.f32.mrb[0].mxu0
        %v3580 = vadd.f32 0.0, %v3579
        %v3581 = vpop.f32.mrb[0].mxu0
        %v3582 = vpop.f32.mrb[0].mxu0
        %v3583 = vpop.f32.mrb[0].mxu0
        %3584 = vdwg.mxu0
        %v3586 = vsel %vm2891, %v3250, 0
        %v3589 = vsel %vm3311, %v3282, 0
        %3591 = vmatprep.subr.bf16.mxu0 0
        %3592 = vmatpush1.bf16.msra.mxu0 %v3589
        %3593 = vmatprep.subr.bf16.mxu0 0
        %3594 = vmatpush1.bf16.msra.mxu0 0
        %3595 = vmatprep.subr.bf16.mxu0 0
        %3596 = vmatpush1.bf16.msra.mxu0 0
        %3597 = vmatprep.subr.bf16.mxu0 0
        %3598 = vmatpush1.bf16.msra.mxu0 0
        %3599 = vmatprep.subr.bf16.mxu0 0
        %3600 = vmatpush1.bf16.msra.mxu0 0
        %3601 = vmatprep.subr.bf16.mxu0 0
        %3602 = vmatpush1.bf16.msra.mxu0 0
        %3603 = vmatprep.subr.bf16.mxu0 0
        %3604 = vmatpush1.bf16.msra.mxu0 0
        %3605 = vmatprep.subr.bf16.mxu0 0
        %3606 = vmatpush1.bf16.msra.mxu0 0
        %3607 = vmatprep.subr.bf16.mxu0 0
        %3608 = vmatpush1.bf16.msra.mxu0 0
        %3609 = vmatprep.subr.bf16.mxu0 0
        %3610 = vmatpush1.bf16.msra.mxu0 0
        %3611 = vmatprep.subr.bf16.mxu0 0
        %3612 = vmatpush1.bf16.msra.mxu0 0
        %3613 = vmatprep.subr.bf16.mxu0 0
        %3614 = vmatpush1.bf16.msra.mxu0 0
        %3615 = vmatprep.subr.bf16.mxu0 0
        %3616 = vmatpush1.bf16.msra.mxu0 0
        %3617 = vmatprep.subr.bf16.mxu0 0
        %3618 = vmatpush1.bf16.msra.mxu0 0
        %3619 = vmatprep.subr.bf16.mxu0 0
        %3620 = vmatpush1.bf16.msra.mxu0 0
        %3621 = vmatprep.subr.bf16.mxu0 0
        %3622 = vmatpush1.bf16.msra.mxu0 0
        %3623 = vmatprep.mubr.bf16.mxu0 0
        %3624 = vmatmul.mubr.bf16.gmra.mrb[0].mxu0 %v3586
        %v3625 = vpop.f32.mrb[0].mxu0
        %v3626 = vadd.f32 0.0, %v3625
        %v3627 = vpop.f32.mrb[0].mxu0
        %v3628 = vpop.f32.mrb[0].mxu0
        %v3629 = vpop.f32.mrb[0].mxu0
        %3630 = vdwg.mxu0
        %v3632 = vsel %vm2891, %v3251, 0
        %v3635 = vsel %vm3311, %v3283, 0
        %3637 = vmatprep.subr.bf16.mxu0 0
        %3638 = vmatpush1.bf16.msra.mxu0 %v3635
        %3639 = vmatprep.subr.bf16.mxu0 0
        %3640 = vmatpush1.bf16.msra.mxu0 0
        %3641 = vmatprep.subr.bf16.mxu0 0
        %3642 = vmatpush1.bf16.msra.mxu0 0
        %3643 = vmatprep.subr.bf16.mxu0 0
        %3644 = vmatpush1.bf16.msra.mxu0 0
        %3645 = vmatprep.subr.bf16.mxu0 0
        %3646 = vmatpush1.bf16.msra.mxu0 0
        %3647 = vmatprep.subr.bf16.mxu0 0
        %3648 = vmatpush1.bf16.msra.mxu0 0
        %3649 = vmatprep.subr.bf16.mxu0 0
        %3650 = vmatpush1.bf16.msra.mxu0 0
        %3651 = vmatprep.subr.bf16.mxu0 0
        %3652 = vmatpush1.bf16.msra.mxu0 0
        %3653 = vmatprep.subr.bf16.mxu0 0
        %3654 = vmatpush1.bf16.msra.mxu0 0
        %3655 = vmatprep.subr.bf16.mxu0 0
        %3656 = vmatpush1.bf16.msra.mxu0 0
        %3657 = vmatprep.subr.bf16.mxu0 0
        %3658 = vmatpush1.bf16.msra.mxu0 0
        %3659 = vmatprep.subr.bf16.mxu0 0
        %3660 = vmatpush1.bf16.msra.mxu0 0
        %3661 = vmatprep.subr.bf16.mxu0 0
        %3662 = vmatpush1.bf16.msra.mxu0 0
        %3663 = vmatprep.subr.bf16.mxu0 0
        %3664 = vmatpush1.bf16.msra.mxu0 0
        %3665 = vmatprep.subr.bf16.mxu0 0
        %3666 = vmatpush1.bf16.msra.mxu0 0
        %3667 = vmatprep.subr.bf16.mxu0 0
        %3668 = vmatpush1.bf16.msra.mxu0 0
        %3669 = vmatprep.mubr.bf16.mxu0 0
        %3670 = vmatmul.mubr.bf16.gmra.mrb[0].mxu0 %v3632
        %v3671 = vpop.f32.mrb[0].mxu0
        %v3672 = vadd.f32 0.0, %v3671
        %v3673 = vpop.f32.mrb[0].mxu0
        %v3674 = vpop.f32.mrb[0].mxu0
        %v3675 = vpop.f32.mrb[0].mxu0
        %3676 = vdwg.mxu0
        %v3678 = vsel %vm2891, %v3252, 0
        %v3681 = vsel %vm3311, %v3284, 0
        %3683 = vmatprep.subr.bf16.mxu0 0
        %3684 = vmatpush1.bf16.msra.mxu0 %v3681
        %3685 = vmatprep.subr.bf16.mxu0 0
        %3686 = vmatpush1.bf16.msra.mxu0 0
        %3687 = vmatprep.subr.bf16.mxu0 0
        %3688 = vmatpush1.bf16.msra.mxu0 0
        %3689 = vmatprep.subr.bf16.mxu0 0
        %3690 = vmatpush1.bf16.msra.mxu0 0
        %3691 = vmatprep.subr.bf16.mxu0 0
        %3692 = vmatpush1.bf16.msra.mxu0 0
        %3693 = vmatprep.subr.bf16.mxu0 0
        %3694 = vmatpush1.bf16.msra.mxu0 0
        %3695 = vmatprep.subr.bf16.mxu0 0
        %3696 = vmatpush1.bf16.msra.mxu0 0
        %3697 = vmatprep.subr.bf16.mxu0 0
        %3698 = vmatpush1.bf16.msra.mxu0 0
        %3699 = vmatprep.subr.bf16.mxu0 0
        %3700 = vmatpush1.bf16.msra.mxu0 0
        %3701 = vmatprep.subr.bf16.mxu0 0
        %3702 = vmatpush1.bf16.msra.mxu0 0
        %3703 = vmatprep.subr.bf16.mxu0 0
        %3704 = vmatpush1.bf16.msra.mxu0 0
        %3705 = vmatprep.subr.bf16.mxu0 0
        %3706 = vmatpush1.bf16.msra.mxu0 0
        %3707 = vmatprep.subr.bf16.mxu0 0
        %3708 = vmatpush1.bf16.msra.mxu0 0
        %3709 = vmatprep.subr.bf16.mxu0 0
        %3710 = vmatpush1.bf16.msra.mxu0 0
        %3711 = vmatprep.subr.bf16.mxu0 0
        %3712 = vmatpush1.bf16.msra.mxu0 0
        %3713 = vmatprep.subr.bf16.mxu0 0
        %3714 = vmatpush1.bf16.msra.mxu0 0
        %3715 = vmatprep.mubr.bf16.mxu0 0
        %3716 = vmatmul.mubr.bf16.gmra.mrb[0].mxu0 %v3678
        %v3717 = vpop.f32.mrb[0].mxu0
        %v3718 = vadd.f32 0.0, %v3717
        %v3719 = vpop.f32.mrb[0].mxu0
        %v3720 = vpop.f32.mrb[0].mxu0
        %v3721 = vpop.f32.mrb[0].mxu0
        %3722 = vdwg.mxu0
        %v3724 = vsel %vm2891, %v3253, 0
        %v3727 = vsel %vm3311, %v3285, 0
        %3729 = vmatprep.subr.bf16.mxu0 0
        %3730 = vmatpush1.bf16.msra.mxu0 %v3727
        %3731 = vmatprep.subr.bf16.mxu0 0
        %3732 = vmatpush1.bf16.msra.mxu0 0
        %3733 = vmatprep.subr.bf16.mxu0 0
        %3734 = vmatpush1.bf16.msra.mxu0 0
        %3735 = vmatprep.subr.bf16.mxu0 0
        %3736 = vmatpush1.bf16.msra.mxu0 0
        %3737 = vmatprep.subr.bf16.mxu0 0
        %3738 = vmatpush1.bf16.msra.mxu0 0
        %3739 = vmatprep.subr.bf16.mxu0 0
        %3740 = vmatpush1.bf16.msra.mxu0 0
        %3741 = vmatprep.subr.bf16.mxu0 0
        %3742 = vmatpush1.bf16.msra.mxu0 0
        %3743 = vmatprep.subr.bf16.mxu0 0
        %3744 = vmatpush1.bf16.msra.mxu0 0
        %3745 = vmatprep.subr.bf16.mxu0 0
        %3746 = vmatpush1.bf16.msra.mxu0 0
        %3747 = vmatprep.subr.bf16.mxu0 0
        %3748 = vmatpush1.bf16.msra.mxu0 0
        %3749 = vmatprep.subr.bf16.mxu0 0
        %3750 = vmatpush1.bf16.msra.mxu0 0
        %3751 = vmatprep.subr.bf16.mxu0 0
        %3752 = vmatpush1.bf16.msra.mxu0 0
        %3753 = vmatprep.subr.bf16.mxu0 0
        %3754 = vmatpush1.bf16.msra.mxu0 0
        %3755 = vmatprep.subr.bf16.mxu0 0
        %3756 = vmatpush1.bf16.msra.mxu0 0
        %3757 = vmatprep.subr.bf16.mxu0 0
        %3758 = vmatpush1.bf16.msra.mxu0 0
        %3759 = vmatprep.subr.bf16.mxu0 0
        %3760 = vmatpush1.bf16.msra.mxu0 0
        %3761 = vmatprep.mubr.bf16.mxu0 0
        %3762 = vmatmul.mubr.bf16.gmra.mrb[0].mxu0 %v3724
        %v3763 = vpop.f32.mrb[0].mxu0
        %v3764 = vadd.f32 0.0, %v3763
        %v3765 = vpop.f32.mrb[0].mxu0
        %v3766 = vpop.f32.mrb[0].mxu0
        %v3767 = vpop.f32.mrb[0].mxu0
        %3768 = vdwg.mxu0
        %v3770 = vsel %vm2891, %v3254, 0
        %v3773 = vsel %vm3311, %v3286, 0
        %3775 = vmatprep.subr.bf16.mxu0 0
        %3776 = vmatpush1.bf16.msra.mxu0 %v3773
        %3777 = vmatprep.subr.bf16.mxu0 0
        %3778 = vmatpush1.bf16.msra.mxu0 0
        %3779 = vmatprep.subr.bf16.mxu0 0
        %3780 = vmatpush1.bf16.msra.mxu0 0
        %3781 = vmatprep.subr.bf16.mxu0 0
        %3782 = vmatpush1.bf16.msra.mxu0 0
        %3783 = vmatprep.subr.bf16.mxu0 0
        %3784 = vmatpush1.bf16.msra.mxu0 0
        %3785 = vmatprep.subr.bf16.mxu0 0
        %3786 = vmatpush1.bf16.msra.mxu0 0
        %3787 = vmatprep.subr.bf16.mxu0 0
        %3788 = vmatpush1.bf16.msra.mxu0 0
        %3789 = vmatprep.subr.bf16.mxu0 0
        %3790 = vmatpush1.bf16.msra.mxu0 0
        %3791 = vmatprep.subr.bf16.mxu0 0
        %3792 = vmatpush1.bf16.msra.mxu0 0
        %3793 = vmatprep.subr.bf16.mxu0 0
        %3794 = vmatpush1.bf16.msra.mxu0 0
        %3795 = vmatprep.subr.bf16.mxu0 0
        %3796 = vmatpush1.bf16.msra.mxu0 0
        %3797 = vmatprep.subr.bf16.mxu0 0
        %3798 = vmatpush1.bf16.msra.mxu0 0
        %3799 = vmatprep.subr.bf16.mxu0 0
        %3800 = vmatpush1.bf16.msra.mxu0 0
        %3801 = vmatprep.subr.bf16.mxu0 0
        %3802 = vmatpush1.bf16.msra.mxu0 0
        %3803 = vmatprep.subr.bf16.mxu0 0
        %3804 = vmatpush1.bf16.msra.mxu0 0
        %3805 = vmatprep.subr.bf16.mxu0 0
        %3806 = vmatpush1.bf16.msra.mxu0 0
        %3807 = vmatprep.mubr.bf16.mxu0 0
        %3808 = vmatmul.mubr.bf16.gmra.mrb[0].mxu0 %v3770
        %v3809 = vpop.f32.mrb[0].mxu0
        %v3810 = vadd.f32 0.0, %v3809
        %v3811 = vpop.f32.mrb[0].mxu0
        %v3812 = vpop.f32.mrb[0].mxu0
        %v3813 = vpop.f32.mrb[0].mxu0
        %3814 = vdwg.mxu0
        %v3816 = vsel %vm2891, %v3255, 0
        %v3819 = vsel %vm3311, %v3287, 0
        %3821 = vmatprep.subr.bf16.mxu0 0
        %3822 = vmatpush1.bf16.msra.mxu0 %v3819
        %3823 = vmatprep.subr.bf16.mxu0 0
        %3824 = vmatpush1.bf16.msra.mxu0 0
        %3825 = vmatprep.subr.bf16.mxu0 0
        %3826 = vmatpush1.bf16.msra.mxu0 0
        %3827 = vmatprep.subr.bf16.mxu0 0
        %3828 = vmatpush1.bf16.msra.mxu0 0
        %3829 = vmatprep.subr.bf16.mxu0 0
        %3830 = vmatpush1.bf16.msra.mxu0 0
        %3831 = vmatprep.subr.bf16.mxu0 0
        %3832 = vmatpush1.bf16.msra.mxu0 0
        %3833 = vmatprep.subr.bf16.mxu0 0
        %3834 = vmatpush1.bf16.msra.mxu0 0
        %3835 = vmatprep.subr.bf16.mxu0 0
        %3836 = vmatpush1.bf16.msra.mxu0 0
        %3837 = vmatprep.subr.bf16.mxu0 0
        %3838 = vmatpush1.bf16.msra.mxu0 0
        %3839 = vmatprep.subr.bf16.mxu0 0
        %3840 = vmatpush1.bf16.msra.mxu0 0
        %3841 = vmatprep.subr.bf16.mxu0 0
        %3842 = vmatpush1.bf16.msra.mxu0 0
        %3843 = vmatprep.subr.bf16.mxu0 0
        %3844 = vmatpush1.bf16.msra.mxu0 0
        %3845 = vmatprep.subr.bf16.mxu0 0
        %3846 = vmatpush1.bf16.msra.mxu0 0
        %3847 = vmatprep.subr.bf16.mxu0 0
        %3848 = vmatpush1.bf16.msra.mxu0 0
        %3849 = vmatprep.subr.bf16.mxu0 0
        %3850 = vmatpush1.bf16.msra.mxu0 0
        %3851 = vmatprep.subr.bf16.mxu0 0
        %3852 = vmatpush1.bf16.msra.mxu0 0
        %3853 = vmatprep.mubr.bf16.mxu0 0
        %3854 = vmatmul.mubr.bf16.gmra.mrb[0].mxu0 %v3816
        %v3855 = vpop.f32.mrb[0].mxu0
        %v3856 = vadd.f32 0.0, %v3855
        %v3857 = vpop.f32.mrb[0].mxu0
        %v3858 = vpop.f32.mrb[0].mxu0
        %v3859 = vpop.f32.mrb[0].mxu0
        %3860 = vdwg.mxu0
        %v3862 = vsel %vm2891, %v3256, 0
        %v3865 = vsel %vm3311, %v3288, 0
        %3867 = vmatprep.subr.bf16.mxu0 0
        %3868 = vmatpush1.bf16.msra.mxu0 %v3865
        %3869 = vmatprep.subr.bf16.mxu0 0
        %3870 = vmatpush1.bf16.msra.mxu0 0
        %3871 = vmatprep.subr.bf16.mxu0 0
        %3872 = vmatpush1.bf16.msra.mxu0 0
        %3873 = vmatprep.subr.bf16.mxu0 0
        %3874 = vmatpush1.bf16.msra.mxu0 0
        %3875 = vmatprep.subr.bf16.mxu0 0
        %3876 = vmatpush1.bf16.msra.mxu0 0
        %3877 = vmatprep.subr.bf16.mxu0 0
        %3878 = vmatpush1.bf16.msra.mxu0 0
        %3879 = vmatprep.subr.bf16.mxu0 0
        %3880 = vmatpush1.bf16.msra.mxu0 0
        %3881 = vmatprep.subr.bf16.mxu0 0
        %3882 = vmatpush1.bf16.msra.mxu0 0
        %3883 = vmatprep.subr.bf16.mxu0 0
        %3884 = vmatpush1.bf16.msra.mxu0 0
        %3885 = vmatprep.subr.bf16.mxu0 0
        %3886 = vmatpush1.bf16.msra.mxu0 0
        %3887 = vmatprep.subr.bf16.mxu0 0
        %3888 = vmatpush1.bf16.msra.mxu0 0
        %3889 = vmatprep.subr.bf16.mxu0 0
        %3890 = vmatpush1.bf16.msra.mxu0 0
        %3891 = vmatprep.subr.bf16.mxu0 0
        %3892 = vmatpush1.bf16.msra.mxu0 0
        %3893 = vmatprep.subr.bf16.mxu0 0
        %3894 = vmatpush1.bf16.msra.mxu0 0
        %3895 = vmatprep.subr.bf16.mxu0 0
        %3896 = vmatpush1.bf16.msra.mxu0 0
        %3897 = vmatprep.subr.bf16.mxu0 0
        %3898 = vmatpush1.bf16.msra.mxu0 0
        %3899 = vmatprep.mubr.bf16.mxu0 0
        %3900 = vmatmul.mubr.bf16.gmra.mrb[0].mxu0 %v3862
        %v3901 = vpop.f32.mrb[0].mxu0
        %v3902 = vadd.f32 0.0, %v3901
        %v3903 = vpop.f32.mrb[0].mxu0
        %v3904 = vpop.f32.mrb[0].mxu0
        %v3905 = vpop.f32.mrb[0].mxu0
        %3906 = vdwg.mxu0
        %v3908 = vsel %vm2891, %v3257, 0
        %v3911 = vsel %vm3311, %v3289, 0
        %3913 = vmatprep.subr.bf16.mxu0 0
        %3914 = vmatpush1.bf16.msra.mxu0 %v3911
        %3915 = vmatprep.subr.bf16.mxu0 0
        %3916 = vmatpush1.bf16.msra.mxu0 0
        %3917 = vmatprep.subr.bf16.mxu0 0
        %3918 = vmatpush1.bf16.msra.mxu0 0
        %3919 = vmatprep.subr.bf16.mxu0 0
        %3920 = vmatpush1.bf16.msra.mxu0 0
        %3921 = vmatprep.subr.bf16.mxu0 0
        %3922 = vmatpush1.bf16.msra.mxu0 0
        %3923 = vmatprep.subr.bf16.mxu0 0
        %3924 = vmatpush1.bf16.msra.mxu0 0
        %3925 = vmatprep.subr.bf16.mxu0 0
        %3926 = vmatpush1.bf16.msra.mxu0 0
        %3927 = vmatprep.subr.bf16.mxu0 0
        %3928 = vmatpush1.bf16.msra.mxu0 0
        %3929 = vmatprep.subr.bf16.mxu0 0
        %3930 = vmatpush1.bf16.msra.mxu0 0
        %3931 = vmatprep.subr.bf16.mxu0 0
        %3932 = vmatpush1.bf16.msra.mxu0 0
        %3933 = vmatprep.subr.bf16.mxu0 0
        %3934 = vmatpush1.bf16.msra.mxu0 0
        %3935 = vmatprep.subr.bf16.mxu0 0
        %3936 = vmatpush1.bf16.msra.mxu0 0
        %3937 = vmatprep.subr.bf16.mxu0 0
        %3938 = vmatpush1.bf16.msra.mxu0 0
        %3939 = vmatprep.subr.bf16.mxu0 0
        %3940 = vmatpush1.bf16.msra.mxu0 0
        %3941 = vmatprep.subr.bf16.mxu0 0
        %3942 = vmatpush1.bf16.msra.mxu0 0
        %3943 = vmatprep.subr.bf16.mxu0 0
        %3944 = vmatpush1.bf16.msra.mxu0 0
        %3945 = vmatprep.mubr.bf16.mxu0 0
        %3946 = vmatmul.mubr.bf16.gmra.mrb[0].mxu0 %v3908
        %v3947 = vpop.f32.mrb[0].mxu0
        %v3948 = vadd.f32 0.0, %v3947
        %v3949 = vpop.f32.mrb[0].mxu0
        %v3950 = vpop.f32.mrb[0].mxu0
        %v3951 = vpop.f32.mrb[0].mxu0
        %3952 = vdwg.mxu0
        %v3954 = vsel %vm2891, %v3258, 0
        %v3957 = vsel %vm3311, %v3290, 0
        %3959 = vmatprep.subr.bf16.mxu0 0
        %3960 = vmatpush1.bf16.msra.mxu0 %v3957
        %3961 = vmatprep.subr.bf16.mxu0 0
        %3962 = vmatpush1.bf16.msra.mxu0 0
        %3963 = vmatprep.subr.bf16.mxu0 0
        %3964 = vmatpush1.bf16.msra.mxu0 0
        %3965 = vmatprep.subr.bf16.mxu0 0
        %3966 = vmatpush1.bf16.msra.mxu0 0
        %3967 = vmatprep.subr.bf16.mxu0 0
        %3968 = vmatpush1.bf16.msra.mxu0 0
        %3969 = vmatprep.subr.bf16.mxu0 0
        %3970 = vmatpush1.bf16.msra.mxu0 0
        %3971 = vmatprep.subr.bf16.mxu0 0
        %3972 = vmatpush1.bf16.msra.mxu0 0
        %3973 = vmatprep.subr.bf16.mxu0 0
        %3974 = vmatpush1.bf16.msra.mxu0 0
        %3975 = vmatprep.subr.bf16.mxu0 0
        %3976 = vmatpush1.bf16.msra.mxu0 0
        %3977 = vmatprep.subr.bf16.mxu0 0
        %3978 = vmatpush1.bf16.msra.mxu0 0
        %3979 = vmatprep.subr.bf16.mxu0 0
        %3980 = vmatpush1.bf16.msra.mxu0 0
        %3981 = vmatprep.subr.bf16.mxu0 0
        %3982 = vmatpush1.bf16.msra.mxu0 0
        %3983 = vmatprep.subr.bf16.mxu0 0
        %3984 = vmatpush1.bf16.msra.mxu0 0
        %3985 = vmatprep.subr.bf16.mxu0 0
        %3986 = vmatpush1.bf16.msra.mxu0 0
        %3987 = vmatprep.subr.bf16.mxu0 0
        %3988 = vmatpush1.bf16.msra.mxu0 0
        %3989 = vmatprep.subr.bf16.mxu0 0
        %3990 = vmatpush1.bf16.msra.mxu0 0
        %3991 = vmatprep.mubr.bf16.mxu0 0
        %3992 = vmatmul.mubr.bf16.gmra.mrb[0].mxu0 %v3954
        %v3993 = vpop.f32.mrb[0].mxu0
        %v3994 = vadd.f32 0.0, %v3993
        %v3995 = vpop.f32.mrb[0].mxu0
        %v3996 = vpop.f32.mrb[0].mxu0
        %v3997 = vpop.f32.mrb[0].mxu0
        %3998 = vdwg.mxu0
        %v4000 = vsel %vm2891, %v3259, 0
        %v4003 = vsel %vm3311, %v3291, 0
        %4005 = vmatprep.subr.bf16.mxu0 0
        %4006 = vmatpush1.bf16.msra.mxu0 %v4003
        %4007 = vmatprep.subr.bf16.mxu0 0
        %4008 = vmatpush1.bf16.msra.mxu0 0
        %4009 = vmatprep.subr.bf16.mxu0 0
        %4010 = vmatpush1.bf16.msra.mxu0 0
        %4011 = vmatprep.subr.bf16.mxu0 0
        %4012 = vmatpush1.bf16.msra.mxu0 0
        %4013 = vmatprep.subr.bf16.mxu0 0
        %4014 = vmatpush1.bf16.msra.mxu0 0
        %4015 = vmatprep.subr.bf16.mxu0 0
        %4016 = vmatpush1.bf16.msra.mxu0 0
        %4017 = vmatprep.subr.bf16.mxu0 0
        %4018 = vmatpush1.bf16.msra.mxu0 0
        %4019 = vmatprep.subr.bf16.mxu0 0
        %4020 = vmatpush1.bf16.msra.mxu0 0
        %4021 = vmatprep.subr.bf16.mxu0 0
        %4022 = vmatpush1.bf16.msra.mxu0 0
        %4023 = vmatprep.subr.bf16.mxu0 0
        %4024 = vmatpush1.bf16.msra.mxu0 0
        %4025 = vmatprep.subr.bf16.mxu0 0
        %4026 = vmatpush1.bf16.msra.mxu0 0
        %4027 = vmatprep.subr.bf16.mxu0 0
        %4028 = vmatpush1.bf16.msra.mxu0 0
        %4029 = vmatprep.subr.bf16.mxu0 0
        %4030 = vmatpush1.bf16.msra.mxu0 0
        %4031 = vmatprep.subr.bf16.mxu0 0
        %4032 = vmatpush1.bf16.msra.mxu0 0
        %4033 = vmatprep.subr.bf16.mxu0 0
        %4034 = vmatpush1.bf16.msra.mxu0 0
        %4035 = vmatprep.subr.bf16.mxu0 0
        %4036 = vmatpush1.bf16.msra.mxu0 0
        %4037 = vmatprep.mubr.bf16.mxu0 0
        %4038 = vmatmul.mubr.bf16.gmra.mrb[0].mxu0 %v4000
        %v4039 = vpop.f32.mrb[0].mxu0
        %v4040 = vadd.f32 0.0, %v4039
        %v4041 = vpop.f32.mrb[0].mxu0
        %v4042 = vpop.f32.mrb[0].mxu0
        %v4043 = vpop.f32.mrb[0].mxu0
        %4044 = vdwg.mxu0
        %v4046 = vsel %vm2891, %v3260, 0
        %v4049 = vsel %vm3311, %v3292, 0
        %4051 = vmatprep.subr.bf16.mxu0 0
        %4052 = vmatpush1.bf16.msra.mxu0 %v4049
        %4053 = vmatprep.subr.bf16.mxu0 0
        %4054 = vmatpush1.bf16.msra.mxu0 0
        %4055 = vmatprep.subr.bf16.mxu0 0
        %4056 = vmatpush1.bf16.msra.mxu0 0
        %4057 = vmatprep.subr.bf16.mxu0 0
        %4058 = vmatpush1.bf16.msra.mxu0 0
        %4059 = vmatprep.subr.bf16.mxu0 0
        %4060 = vmatpush1.bf16.msra.mxu0 0
        %4061 = vmatprep.subr.bf16.mxu0 0
        %4062 = vmatpush1.bf16.msra.mxu0 0
        %4063 = vmatprep.subr.bf16.mxu0 0
        %4064 = vmatpush1.bf16.msra.mxu0 0
        %4065 = vmatprep.subr.bf16.mxu0 0
        %4066 = vmatpush1.bf16.msra.mxu0 0
        %4067 = vmatprep.subr.bf16.mxu0 0
        %4068 = vmatpush1.bf16.msra.mxu0 0
        %4069 = vmatprep.subr.bf16.mxu0 0
        %4070 = vmatpush1.bf16.msra.mxu0 0
        %4071 = vmatprep.subr.bf16.mxu0 0
        %4072 = vmatpush1.bf16.msra.mxu0 0
        %4073 = vmatprep.subr.bf16.mxu0 0
        %4074 = vmatpush1.bf16.msra.mxu0 0
        %4075 = vmatprep.subr.bf16.mxu0 0
        %4076 = vmatpush1.bf16.msra.mxu0 0
        %4077 = vmatprep.subr.bf16.mxu0 0
        %4078 = vmatpush1.bf16.msra.mxu0 0
        %4079 = vmatprep.subr.bf16.mxu0 0
        %4080 = vmatpush1.bf16.msra.mxu0 0
        %4081 = vmatprep.subr.bf16.mxu0 0
        %4082 = vmatpush1.bf16.msra.mxu0 0
        %4083 = vmatprep.mubr.bf16.mxu0 0
        %4084 = vmatmul.mubr.bf16.gmra.mrb[0].mxu0 %v4046
        %v4085 = vpop.f32.mrb[0].mxu0
        %v4086 = vadd.f32 0.0, %v4085
        %v4087 = vpop.f32.mrb[0].mxu0
        %v4088 = vpop.f32.mrb[0].mxu0
        %v4089 = vpop.f32.mrb[0].mxu0
        %4090 = vdwg.mxu0
        %v4092 = vsel %vm2891, %v3261, 0
        %v4095 = vsel %vm3311, %v3293, 0
        %4097 = vmatprep.subr.bf16.mxu0 0
        %4098 = vmatpush1.bf16.msra.mxu0 %v4095
        %4099 = vmatprep.subr.bf16.mxu0 0
        %4100 = vmatpush1.bf16.msra.mxu0 0
        %4101 = vmatprep.subr.bf16.mxu0 0
        %4102 = vmatpush1.bf16.msra.mxu0 0
        %4103 = vmatprep.subr.bf16.mxu0 0
        %4104 = vmatpush1.bf16.msra.mxu0 0
        %4105 = vmatprep.subr.bf16.mxu0 0
        %4106 = vmatpush1.bf16.msra.mxu0 0
        %4107 = vmatprep.subr.bf16.mxu0 0
        %4108 = vmatpush1.bf16.msra.mxu0 0
        %4109 = vmatprep.subr.bf16.mxu0 0
        %4110 = vmatpush1.bf16.msra.mxu0 0
        %4111 = vmatprep.subr.bf16.mxu0 0
        %4112 = vmatpush1.bf16.msra.mxu0 0
        %4113 = vmatprep.subr.bf16.mxu0 0
        %4114 = vmatpush1.bf16.msra.mxu0 0
        %4115 = vmatprep.subr.bf16.mxu0 0
        %4116 = vmatpush1.bf16.msra.mxu0 0
        %4117 = vmatprep.subr.bf16.mxu0 0
        %4118 = vmatpush1.bf16.msra.mxu0 0
        %4119 = vmatprep.subr.bf16.mxu0 0
        %4120 = vmatpush1.bf16.msra.mxu0 0
        %4121 = vmatprep.subr.bf16.mxu0 0
        %4122 = vmatpush1.bf16.msra.mxu0 0
        %4123 = vmatprep.subr.bf16.mxu0 0
        %4124 = vmatpush1.bf16.msra.mxu0 0
        %4125 = vmatprep.subr.bf16.mxu0 0
        %4126 = vmatpush1.bf16.msra.mxu0 0
        %4127 = vmatprep.subr.bf16.mxu0 0
        %4128 = vmatpush1.bf16.msra.mxu0 0
        %4129 = vmatprep.mubr.bf16.mxu0 0
        %4130 = vmatmul.mubr.bf16.gmra.mrb[0].mxu0 %v4092
        %v4131 = vpop.f32.mrb[0].mxu0
        %v4132 = vadd.f32 0.0, %v4131
        %v4133 = vpop.f32.mrb[0].mxu0
        %v4134 = vpop.f32.mrb[0].mxu0
        %v4135 = vpop.f32.mrb[0].mxu0
        %4136 = vdwg.mxu0
        %v4138 = vsel %vm2891, %v3262, 0
        %v4141 = vsel %vm3311, %v3294, 0
        %4143 = vmatprep.subr.bf16.mxu0 0
        %4144 = vmatpush1.bf16.msra.mxu0 %v4141
        %4145 = vmatprep.subr.bf16.mxu0 0
        %4146 = vmatpush1.bf16.msra.mxu0 0
        %4147 = vmatprep.subr.bf16.mxu0 0
        %4148 = vmatpush1.bf16.msra.mxu0 0
        %4149 = vmatprep.subr.bf16.mxu0 0
        %4150 = vmatpush1.bf16.msra.mxu0 0
        %4151 = vmatprep.subr.bf16.mxu0 0
        %4152 = vmatpush1.bf16.msra.mxu0 0
        %4153 = vmatprep.subr.bf16.mxu0 0
        %4154 = vmatpush1.bf16.msra.mxu0 0
        %4155 = vmatprep.subr.bf16.mxu0 0
        %4156 = vmatpush1.bf16.msra.mxu0 0
        %4157 = vmatprep.subr.bf16.mxu0 0
        %4158 = vmatpush1.bf16.msra.mxu0 0
        %4159 = vmatprep.subr.bf16.mxu0 0
        %4160 = vmatpush1.bf16.msra.mxu0 0
        %4161 = vmatprep.subr.bf16.mxu0 0
        %4162 = vmatpush1.bf16.msra.mxu0 0
        %4163 = vmatprep.subr.bf16.mxu0 0
        %4164 = vmatpush1.bf16.msra.mxu0 0
        %4165 = vmatprep.subr.bf16.mxu0 0
        %4166 = vmatpush1.bf16.msra.mxu0 0
        %4167 = vmatprep.subr.bf16.mxu0 0
        %4168 = vmatpush1.bf16.msra.mxu0 0
        %4169 = vmatprep.subr.bf16.mxu0 0
        %4170 = vmatpush1.bf16.msra.mxu0 0
        %4171 = vmatprep.subr.bf16.mxu0 0
        %4172 = vmatpush1.bf16.msra.mxu0 0
        %4173 = vmatprep.subr.bf16.mxu0 0
        %4174 = vmatpush1.bf16.msra.mxu0 0
        %4175 = vmatprep.mubr.bf16.mxu0 0
        %4176 = vmatmul.mubr.bf16.gmra.mrb[0].mxu0 %v4138
        %v4177 = vpop.f32.mrb[0].mxu0
        %v4178 = vadd.f32 0.0, %v4177
        %v4179 = vpop.f32.mrb[0].mxu0
        %v4180 = vpop.f32.mrb[0].mxu0
        %v4181 = vpop.f32.mrb[0].mxu0
        %4182 = vdwg.mxu0
        %v4184 = vsel %vm2891, %v3263, 0
        %v4187 = vsel %vm3311, %v3295, 0
        %4189 = vmatprep.subr.bf16.mxu0 0
        %4190 = vmatpush1.bf16.msra.mxu0 %v4187
        %4191 = vmatprep.subr.bf16.mxu0 0
        %4192 = vmatpush1.bf16.msra.mxu0 0
        %4193 = vmatprep.subr.bf16.mxu0 0
        %4194 = vmatpush1.bf16.msra.mxu0 0
        %4195 = vmatprep.subr.bf16.mxu0 0
        %4196 = vmatpush1.bf16.msra.mxu0 0
        %4197 = vmatprep.subr.bf16.mxu0 0
        %4198 = vmatpush1.bf16.msra.mxu0 0
        %4199 = vmatprep.subr.bf16.mxu0 0
        %4200 = vmatpush1.bf16.msra.mxu0 0
        %4201 = vmatprep.subr.bf16.mxu0 0
        %4202 = vmatpush1.bf16.msra.mxu0 0
        %4203 = vmatprep.subr.bf16.mxu0 0
        %4204 = vmatpush1.bf16.msra.mxu0 0
        %4205 = vmatprep.subr.bf16.mxu0 0
        %4206 = vmatpush1.bf16.msra.mxu0 0
        %4207 = vmatprep.subr.bf16.mxu0 0
        %4208 = vmatpush1.bf16.msra.mxu0 0
        %4209 = vmatprep.subr.bf16.mxu0 0
        %4210 = vmatpush1.bf16.msra.mxu0 0
        %4211 = vmatprep.subr.bf16.mxu0 0
        %4212 = vmatpush1.bf16.msra.mxu0 0
        %4213 = vmatprep.subr.bf16.mxu0 0
        %4214 = vmatpush1.bf16.msra.mxu0 0
        %4215 = vmatprep.subr.bf16.mxu0 0
        %4216 = vmatpush1.bf16.msra.mxu0 0
        %4217 = vmatprep.subr.bf16.mxu0 0
        %4218 = vmatpush1.bf16.msra.mxu0 0
        %4219 = vmatprep.subr.bf16.mxu0 0
        %4220 = vmatpush1.bf16.msra.mxu0 0
        %4221 = vmatprep.mubr.bf16.mxu0 0
        %4222 = vmatmul.mubr.bf16.gmra.mrb[0].mxu0 %v4184
        %v4223 = vpop.f32.mrb[0].mxu0
        %v4224 = vadd.f32 0.0, %v4223
        %v4225 = vpop.f32.mrb[0].mxu0
        %v4226 = vpop.f32.mrb[0].mxu0
        %v4227 = vpop.f32.mrb[0].mxu0
        %4228 = vdwg.mxu0
        %v4230 = vsel %vm2891, %v3264, 0
        %v4233 = vsel %vm3311, %v3296, 0
        %4235 = vmatprep.subr.bf16.mxu0 0
        %4236 = vmatpush1.bf16.msra.mxu0 %v4233
        %4237 = vmatprep.subr.bf16.mxu0 0
        %4238 = vmatpush1.bf16.msra.mxu0 0
        %4239 = vmatprep.subr.bf16.mxu0 0
        %4240 = vmatpush1.bf16.msra.mxu0 0
        %4241 = vmatprep.subr.bf16.mxu0 0
        %4242 = vmatpush1.bf16.msra.mxu0 0
        %4243 = vmatprep.subr.bf16.mxu0 0
        %4244 = vmatpush1.bf16.msra.mxu0 0
        %4245 = vmatprep.subr.bf16.mxu0 0
        %4246 = vmatpush1.bf16.msra.mxu0 0
        %4247 = vmatprep.subr.bf16.mxu0 0
        %4248 = vmatpush1.bf16.msra.mxu0 0
        %4249 = vmatprep.subr.bf16.mxu0 0
        %4250 = vmatpush1.bf16.msra.mxu0 0
        %4251 = vmatprep.subr.bf16.mxu0 0
        %4252 = vmatpush1.bf16.msra.mxu0 0
        %4253 = vmatprep.subr.bf16.mxu0 0
        %4254 = vmatpush1.bf16.msra.mxu0 0
        %4255 = vmatprep.subr.bf16.mxu0 0
        %4256 = vmatpush1.bf16.msra.mxu0 0
        %4257 = vmatprep.subr.bf16.mxu0 0
        %4258 = vmatpush1.bf16.msra.mxu0 0
        %4259 = vmatprep.subr.bf16.mxu0 0
        %4260 = vmatpush1.bf16.msra.mxu0 0
        %4261 = vmatprep.subr.bf16.mxu0 0
        %4262 = vmatpush1.bf16.msra.mxu0 0
        %4263 = vmatprep.subr.bf16.mxu0 0
        %4264 = vmatpush1.bf16.msra.mxu0 0
        %4265 = vmatprep.subr.bf16.mxu0 0
        %4266 = vmatpush1.bf16.msra.mxu0 0
        %4267 = vmatprep.mubr.bf16.mxu0 0
        %4268 = vmatmul.mubr.bf16.gmra.mrb[0].mxu0 %v4230
        %v4269 = vpop.f32.mrb[0].mxu0
        %v4270 = vadd.f32 0.0, %v4269
        %v4271 = vpop.f32.mrb[0].mxu0
        %v4272 = vpop.f32.mrb[0].mxu0
        %v4273 = vpop.f32.mrb[0].mxu0
        %4274 = vdwg.mxu0
        %v4276 = vsel %vm2891, %v3265, 0
        %v4279 = vsel %vm3311, %v3297, 0
        %4281 = vmatprep.subr.bf16.mxu0 0
        %4282 = vmatpush1.bf16.msra.mxu0 %v4279
        %4283 = vmatprep.subr.bf16.mxu0 0
        %4284 = vmatpush1.bf16.msra.mxu0 0
        %4285 = vmatprep.subr.bf16.mxu0 0
        %4286 = vmatpush1.bf16.msra.mxu0 0
        %4287 = vmatprep.subr.bf16.mxu0 0
        %4288 = vmatpush1.bf16.msra.mxu0 0
        %4289 = vmatprep.subr.bf16.mxu0 0
        %4290 = vmatpush1.bf16.msra.mxu0 0
        %4291 = vmatprep.subr.bf16.mxu0 0
        %4292 = vmatpush1.bf16.msra.mxu0 0
        %4293 = vmatprep.subr.bf16.mxu0 0
        %4294 = vmatpush1.bf16.msra.mxu0 0
        %4295 = vmatprep.subr.bf16.mxu0 0
        %4296 = vmatpush1.bf16.msra.mxu0 0
        %4297 = vmatprep.subr.bf16.mxu0 0
        %4298 = vmatpush1.bf16.msra.mxu0 0
        %4299 = vmatprep.subr.bf16.mxu0 0
        %4300 = vmatpush1.bf16.msra.mxu0 0
        %4301 = vmatprep.subr.bf16.mxu0 0
        %4302 = vmatpush1.bf16.msra.mxu0 0
        %4303 = vmatprep.subr.bf16.mxu0 0
        %4304 = vmatpush1.bf16.msra.mxu0 0
        %4305 = vmatprep.subr.bf16.mxu0 0
        %4306 = vmatpush1.bf16.msra.mxu0 0
        %4307 = vmatprep.subr.bf16.mxu0 0
        %4308 = vmatpush1.bf16.msra.mxu0 0
        %4309 = vmatprep.subr.bf16.mxu0 0
        %4310 = vmatpush1.bf16.msra.mxu0 0
        %4311 = vmatprep.subr.bf16.mxu0 0
        %4312 = vmatpush1.bf16.msra.mxu0 0
        %4313 = vmatprep.mubr.bf16.mxu0 0
        %4314 = vmatmul.mubr.bf16.gmra.mrb[0].mxu0 %v4276
        %v4315 = vpop.f32.mrb[0].mxu0
        %v4316 = vadd.f32 0.0, %v4315
        %v4317 = vpop.f32.mrb[0].mxu0
        %v4318 = vpop.f32.mrb[0].mxu0
        %v4319 = vpop.f32.mrb[0].mxu0
        %4320 = vdwg.mxu0
        %v4322 = vsel %vm2891, %v3266, 0
        %v4325 = vsel %vm3311, %v3298, 0
        %4327 = vmatprep.subr.bf16.mxu0 0
        %4328 = vmatpush1.bf16.msra.mxu0 %v4325
        %4329 = vmatprep.subr.bf16.mxu0 0
        %4330 = vmatpush1.bf16.msra.mxu0 0
        %4331 = vmatprep.subr.bf16.mxu0 0
        %4332 = vmatpush1.bf16.msra.mxu0 0
        %4333 = vmatprep.subr.bf16.mxu0 0
        %4334 = vmatpush1.bf16.msra.mxu0 0
        %4335 = vmatprep.subr.bf16.mxu0 0
        %4336 = vmatpush1.bf16.msra.mxu0 0
        %4337 = vmatprep.subr.bf16.mxu0 0
        %4338 = vmatpush1.bf16.msra.mxu0 0
        %4339 = vmatprep.subr.bf16.mxu0 0
        %4340 = vmatpush1.bf16.msra.mxu0 0
        %4341 = vmatprep.subr.bf16.mxu0 0
        %4342 = vmatpush1.bf16.msra.mxu0 0
        %4343 = vmatprep.subr.bf16.mxu0 0
        %4344 = vmatpush1.bf16.msra.mxu0 0
        %4345 = vmatprep.subr.bf16.mxu0 0
        %4346 = vmatpush1.bf16.msra.mxu0 0
        %4347 = vmatprep.subr.bf16.mxu0 0
        %4348 = vmatpush1.bf16.msra.mxu0 0
        %4349 = vmatprep.subr.bf16.mxu0 0
        %4350 = vmatpush1.bf16.msra.mxu0 0
        %4351 = vmatprep.subr.bf16.mxu0 0
        %4352 = vmatpush1.bf16.msra.mxu0 0
        %4353 = vmatprep.subr.bf16.mxu0 0
        %4354 = vmatpush1.bf16.msra.mxu0 0
        %4355 = vmatprep.subr.bf16.mxu0 0
        %4356 = vmatpush1.bf16.msra.mxu0 0
        %4357 = vmatprep.subr.bf16.mxu0 0
        %4358 = vmatpush1.bf16.msra.mxu0 0
        %4359 = vmatprep.mubr.bf16.mxu0 0
        %4360 = vmatmul.mubr.bf16.gmra.mrb[0].mxu0 %v4322
        %v4361 = vpop.f32.mrb[0].mxu0
        %v4362 = vadd.f32 0.0, %v4361
        %v4363 = vpop.f32.mrb[0].mxu0
        %v4364 = vpop.f32.mrb[0].mxu0
        %v4365 = vpop.f32.mrb[0].mxu0
        %4366 = vdwg.mxu0
        %v4368 = vsel %vm2891, %v3267, 0
        %v4371 = vsel %vm3311, %v3299, 0
        %4373 = vmatprep.subr.bf16.mxu0 0
        %4374 = vmatpush1.bf16.msra.mxu0 %v4371
        %4375 = vmatprep.subr.bf16.mxu0 0
        %4376 = vmatpush1.bf16.msra.mxu0 0
        %4377 = vmatprep.subr.bf16.mxu0 0
        %4378 = vmatpush1.bf16.msra.mxu0 0
        %4379 = vmatprep.subr.bf16.mxu0 0
        %4380 = vmatpush1.bf16.msra.mxu0 0
        %4381 = vmatprep.subr.bf16.mxu0 0
        %4382 = vmatpush1.bf16.msra.mxu0 0
        %4383 = vmatprep.subr.bf16.mxu0 0
        %4384 = vmatpush1.bf16.msra.mxu0 0
        %4385 = vmatprep.subr.bf16.mxu0 0
        %4386 = vmatpush1.bf16.msra.mxu0 0
        %4387 = vmatprep.subr.bf16.mxu0 0
        %4388 = vmatpush1.bf16.msra.mxu0 0
        %4389 = vmatprep.subr.bf16.mxu0 0
        %4390 = vmatpush1.bf16.msra.mxu0 0
        %4391 = vmatprep.subr.bf16.mxu0 0
        %4392 = vmatpush1.bf16.msra.mxu0 0
        %4393 = vmatprep.subr.bf16.mxu0 0
        %4394 = vmatpush1.bf16.msra.mxu0 0
        %4395 = vmatprep.subr.bf16.mxu0 0
        %4396 = vmatpush1.bf16.msra.mxu0 0
        %4397 = vmatprep.subr.bf16.mxu0 0
        %4398 = vmatpush1.bf16.msra.mxu0 0
        %4399 = vmatprep.subr.bf16.mxu0 0
        %4400 = vmatpush1.bf16.msra.mxu0 0
        %4401 = vmatprep.subr.bf16.mxu0 0
        %4402 = vmatpush1.bf16.msra.mxu0 0
        %4403 = vmatprep.subr.bf16.mxu0 0
        %4404 = vmatpush1.bf16.msra.mxu0 0
        %4405 = vmatprep.mubr.bf16.mxu0 0
        %4406 = vmatmul.mubr.bf16.gmra.mrb[0].mxu0 %v4368
        %v4407 = vpop.f32.mrb[0].mxu0
        %v4408 = vadd.f32 0.0, %v4407
        %v4409 = vpop.f32.mrb[0].mxu0
        %v4410 = vpop.f32.mrb[0].mxu0
        %v4411 = vpop.f32.mrb[0].mxu0
        %4412 = vdwg.mxu0
        %v4414 = vsel %vm2891, %v3268, 0
        %v4417 = vsel %vm3311, %v3300, 0
        %4419 = vmatprep.subr.bf16.mxu0 0
        %4420 = vmatpush1.bf16.msra.mxu0 %v4417
        %4421 = vmatprep.subr.bf16.mxu0 0
        %4422 = vmatpush1.bf16.msra.mxu0 0
        %4423 = vmatprep.subr.bf16.mxu0 0
        %4424 = vmatpush1.bf16.msra.mxu0 0
        %4425 = vmatprep.subr.bf16.mxu0 0
        %4426 = vmatpush1.bf16.msra.mxu0 0
        %4427 = vmatprep.subr.bf16.mxu0 0
        %4428 = vmatpush1.bf16.msra.mxu0 0
        %4429 = vmatprep.subr.bf16.mxu0 0
        %4430 = vmatpush1.bf16.msra.mxu0 0
        %4431 = vmatprep.subr.bf16.mxu0 0
        %4432 = vmatpush1.bf16.msra.mxu0 0
        %4433 = vmatprep.subr.bf16.mxu0 0
        %4434 = vmatpush1.bf16.msra.mxu0 0
        %4435 = vmatprep.subr.bf16.mxu0 0
        %4436 = vmatpush1.bf16.msra.mxu0 0
        %4437 = vmatprep.subr.bf16.mxu0 0
        %4438 = vmatpush1.bf16.msra.mxu0 0
        %4439 = vmatprep.subr.bf16.mxu0 0
        %4440 = vmatpush1.bf16.msra.mxu0 0
        %4441 = vmatprep.subr.bf16.mxu0 0
        %4442 = vmatpush1.bf16.msra.mxu0 0
        %4443 = vmatprep.subr.bf16.mxu0 0
        %4444 = vmatpush1.bf16.msra.mxu0 0
        %4445 = vmatprep.subr.bf16.mxu0 0
        %4446 = vmatpush1.bf16.msra.mxu0 0
        %4447 = vmatprep.subr.bf16.mxu0 0
        %4448 = vmatpush1.bf16.msra.mxu0 0
        %4449 = vmatprep.subr.bf16.mxu0 0
        %4450 = vmatpush1.bf16.msra.mxu0 0
        %4451 = vmatprep.mubr.bf16.mxu0 0
        %4452 = vmatmul.mubr.bf16.gmra.mrb[0].mxu0 %v4414
        %v4453 = vpop.f32.mrb[0].mxu0
        %v4454 = vadd.f32 0.0, %v4453
        %v4455 = vpop.f32.mrb[0].mxu0
        %v4456 = vpop.f32.mrb[0].mxu0
        %v4457 = vpop.f32.mrb[0].mxu0
        %4458 = vdwg.mxu0
        %v4460 = vsel %vm2891, %v3269, 0
        %v4463 = vsel %vm3311, %v3301, 0
        %4465 = vmatprep.subr.bf16.mxu0 0
        %4466 = vmatpush1.bf16.msra.mxu0 %v4463
        %4467 = vmatprep.subr.bf16.mxu0 0
        %4468 = vmatpush1.bf16.msra.mxu0 0
        %4469 = vmatprep.subr.bf16.mxu0 0
        %4470 = vmatpush1.bf16.msra.mxu0 0
        %4471 = vmatprep.subr.bf16.mxu0 0
        %4472 = vmatpush1.bf16.msra.mxu0 0
        %4473 = vmatprep.subr.bf16.mxu0 0
        %4474 = vmatpush1.bf16.msra.mxu0 0
        %4475 = vmatprep.subr.bf16.mxu0 0
        %4476 = vmatpush1.bf16.msra.mxu0 0
        %4477 = vmatprep.subr.bf16.mxu0 0
        %4478 = vmatpush1.bf16.msra.mxu0 0
        %4479 = vmatprep.subr.bf16.mxu0 0
        %4480 = vmatpush1.bf16.msra.mxu0 0
        %4481 = vmatprep.subr.bf16.mxu0 0
        %4482 = vmatpush1.bf16.msra.mxu0 0
        %4483 = vmatprep.subr.bf16.mxu0 0
        %4484 = vmatpush1.bf16.msra.mxu0 0
        %4485 = vmatprep.subr.bf16.mxu0 0
        %4486 = vmatpush1.bf16.msra.mxu0 0
        %4487 = vmatprep.subr.bf16.mxu0 0
        %4488 = vmatpush1.bf16.msra.mxu0 0
        %4489 = vmatprep.subr.bf16.mxu0 0
        %4490 = vmatpush1.bf16.msra.mxu0 0
        %4491 = vmatprep.subr.bf16.mxu0 0
        %4492 = vmatpush1.bf16.msra.mxu0 0
        %4493 = vmatprep.subr.bf16.mxu0 0
        %4494 = vmatpush1.bf16.msra.mxu0 0
        %4495 = vmatprep.subr.bf16.mxu0 0
        %4496 = vmatpush1.bf16.msra.mxu0 0
        %4497 = vmatprep.mubr.bf16.mxu0 0
        %4498 = vmatmul.mubr.bf16.gmra.mrb[0].mxu0 %v4460
        %v4499 = vpop.f32.mrb[0].mxu0
        %v4500 = vadd.f32 0.0, %v4499
        %v4501 = vpop.f32.mrb[0].mxu0
        %v4502 = vpop.f32.mrb[0].mxu0
        %v4503 = vpop.f32.mrb[0].mxu0
        %4504 = vdwg.mxu0
        %v4506 = vsel %vm2891, %v3270, 0
        %v4509 = vsel %vm3311, %v3302, 0
        %4511 = vmatprep.subr.bf16.mxu0 0
        %4512 = vmatpush1.bf16.msra.mxu0 %v4509
        %4513 = vmatprep.subr.bf16.mxu0 0
        %4514 = vmatpush1.bf16.msra.mxu0 0
        %4515 = vmatprep.subr.bf16.mxu0 0
        %4516 = vmatpush1.bf16.msra.mxu0 0
        %4517 = vmatprep.subr.bf16.mxu0 0
        %4518 = vmatpush1.bf16.msra.mxu0 0
        %4519 = vmatprep.subr.bf16.mxu0 0
        %4520 = vmatpush1.bf16.msra.mxu0 0
        %4521 = vmatprep.subr.bf16.mxu0 0
        %4522 = vmatpush1.bf16.msra.mxu0 0
        %4523 = vmatprep.subr.bf16.mxu0 0
        %4524 = vmatpush1.bf16.msra.mxu0 0
        %4525 = vmatprep.subr.bf16.mxu0 0
        %4526 = vmatpush1.bf16.msra.mxu0 0
        %4527 = vmatprep.subr.bf16.mxu0 0
        %4528 = vmatpush1.bf16.msra.mxu0 0
        %4529 = vmatprep.subr.bf16.mxu0 0
        %4530 = vmatpush1.bf16.msra.mxu0 0
        %4531 = vmatprep.subr.bf16.mxu0 0
        %4532 = vmatpush1.bf16.msra.mxu0 0
        %4533 = vmatprep.subr.bf16.mxu0 0
        %4534 = vmatpush1.bf16.msra.mxu0 0
        %4535 = vmatprep.subr.bf16.mxu0 0
        %4536 = vmatpush1.bf16.msra.mxu0 0
        %4537 = vmatprep.subr.bf16.mxu0 0
        %4538 = vmatpush1.bf16.msra.mxu0 0
        %4539 = vmatprep.subr.bf16.mxu0 0
        %4540 = vmatpush1.bf16.msra.mxu0 0
        %4541 = vmatprep.subr.bf16.mxu0 0
        %4542 = vmatpush1.bf16.msra.mxu0 0
        %4543 = vmatprep.mubr.bf16.mxu0 0
        %4544 = vmatmul.mubr.bf16.gmra.mrb[0].mxu0 %v4506
        %v4545 = vpop.f32.mrb[0].mxu0
        %v4546 = vadd.f32 0.0, %v4545
        %v4547 = vpop.f32.mrb[0].mxu0
        %v4548 = vpop.f32.mrb[0].mxu0
        %v4549 = vpop.f32.mrb[0].mxu0
        %4550 = vdwg.mxu0
        %v4552 = vsel %vm2891, %v3271, 0
        %v4555 = vsel %vm3311, %v3303, 0
        %4557 = vmatprep.subr.bf16.mxu0 0
        %4558 = vmatpush1.bf16.msra.mxu0 %v4555
        %4559 = vmatprep.subr.bf16.mxu0 0
        %4560 = vmatpush1.bf16.msra.mxu0 0
        %4561 = vmatprep.subr.bf16.mxu0 0
        %4562 = vmatpush1.bf16.msra.mxu0 0
        %4563 = vmatprep.subr.bf16.mxu0 0
        %4564 = vmatpush1.bf16.msra.mxu0 0
        %4565 = vmatprep.subr.bf16.mxu0 0
        %4566 = vmatpush1.bf16.msra.mxu0 0
        %4567 = vmatprep.subr.bf16.mxu0 0
        %4568 = vmatpush1.bf16.msra.mxu0 0
        %4569 = vmatprep.subr.bf16.mxu0 0
        %4570 = vmatpush1.bf16.msra.mxu0 0
        %4571 = vmatprep.subr.bf16.mxu0 0
        %4572 = vmatpush1.bf16.msra.mxu0 0
        %4573 = vmatprep.subr.bf16.mxu0 0
        %4574 = vmatpush1.bf16.msra.mxu0 0
        %4575 = vmatprep.subr.bf16.mxu0 0
        %4576 = vmatpush1.bf16.msra.mxu0 0
        %4577 = vmatprep.subr.bf16.mxu0 0
        %4578 = vmatpush1.bf16.msra.mxu0 0
        %4579 = vmatprep.subr.bf16.mxu0 0
        %4580 = vmatpush1.bf16.msra.mxu0 0
        %4581 = vmatprep.subr.bf16.mxu0 0
        %4582 = vmatpush1.bf16.msra.mxu0 0
        %4583 = vmatprep.subr.bf16.mxu0 0
        %4584 = vmatpush1.bf16.msra.mxu0 0
        %4585 = vmatprep.subr.bf16.mxu0 0
        %4586 = vmatpush1.bf16.msra.mxu0 0
        %4587 = vmatprep.subr.bf16.mxu0 0
        %4588 = vmatpush1.bf16.msra.mxu0 0
        %4589 = vmatprep.mubr.bf16.mxu0 0
        %4590 = vmatmul.mubr.bf16.gmra.mrb[0].mxu0 %v4552
        %v4591 = vpop.f32.mrb[0].mxu0
        %v4592 = vadd.f32 0.0, %v4591
        %v4593 = vpop.f32.mrb[0].mxu0
        %v4594 = vpop.f32.mrb[0].mxu0
        %v4595 = vpop.f32.mrb[0].mxu0
        %4596 = vdwg.mxu0
        %v4598 = vsel %vm2891, %v3272, 0
        %v4601 = vsel %vm3311, %v3304, 0
        %4603 = vmatprep.subr.bf16.mxu0 0
        %4604 = vmatpush1.bf16.msra.mxu0 %v4601
        %4605 = vmatprep.subr.bf16.mxu0 0
        %4606 = vmatpush1.bf16.msra.mxu0 0
        %4607 = vmatprep.subr.bf16.mxu0 0
        %4608 = vmatpush1.bf16.msra.mxu0 0
        %4609 = vmatprep.subr.bf16.mxu0 0
        %4610 = vmatpush1.bf16.msra.mxu0 0
        %4611 = vmatprep.subr.bf16.mxu0 0
        %4612 = vmatpush1.bf16.msra.mxu0 0
        %4613 = vmatprep.subr.bf16.mxu0 0
        %4614 = vmatpush1.bf16.msra.mxu0 0
        %4615 = vmatprep.subr.bf16.mxu0 0
        %4616 = vmatpush1.bf16.msra.mxu0 0
        %4617 = vmatprep.subr.bf16.mxu0 0
        %4618 = vmatpush1.bf16.msra.mxu0 0
        %4619 = vmatprep.subr.bf16.mxu0 0
        %4620 = vmatpush1.bf16.msra.mxu0 0
        %4621 = vmatprep.subr.bf16.mxu0 0
        %4622 = vmatpush1.bf16.msra.mxu0 0
        %4623 = vmatprep.subr.bf16.mxu0 0
        %4624 = vmatpush1.bf16.msra.mxu0 0
        %4625 = vmatprep.subr.bf16.mxu0 0
        %4626 = vmatpush1.bf16.msra.mxu0 0
        %4627 = vmatprep.subr.bf16.mxu0 0
        %4628 = vmatpush1.bf16.msra.mxu0 0
        %4629 = vmatprep.subr.bf16.mxu0 0
        %4630 = vmatpush1.bf16.msra.mxu0 0
        %4631 = vmatprep.subr.bf16.mxu0 0
        %4632 = vmatpush1.bf16.msra.mxu0 0
        %4633 = vmatprep.subr.bf16.mxu0 0
        %4634 = vmatpush1.bf16.msra.mxu0 0
        %4635 = vmatprep.mubr.bf16.mxu0 0
        %4636 = vmatmul.mubr.bf16.gmra.mrb[0].mxu0 %v4598
        %v4637 = vpop.f32.mrb[0].mxu0
        %v4638 = vadd.f32 0.0, %v4637
        %v4639 = vpop.f32.mrb[0].mxu0
        %v4640 = vpop.f32.mrb[0].mxu0
        %v4641 = vpop.f32.mrb[0].mxu0
        %4642 = vdwg.mxu0
        %v4644 = vsel %vm2891, %v3273, 0
        %v4647 = vsel %vm3311, %v3305, 0
        %4649 = vmatprep.subr.bf16.mxu0 0
        %4650 = vmatpush1.bf16.msra.mxu0 %v4647
        %4651 = vmatprep.subr.bf16.mxu0 0
        %4652 = vmatpush1.bf16.msra.mxu0 0
        %4653 = vmatprep.subr.bf16.mxu0 0
        %4654 = vmatpush1.bf16.msra.mxu0 0
        %4655 = vmatprep.subr.bf16.mxu0 0
        %4656 = vmatpush1.bf16.msra.mxu0 0
        %4657 = vmatprep.subr.bf16.mxu0 0
        %4658 = vmatpush1.bf16.msra.mxu0 0
        %4659 = vmatprep.subr.bf16.mxu0 0
        %4660 = vmatpush1.bf16.msra.mxu0 0
        %4661 = vmatprep.subr.bf16.mxu0 0
        %4662 = vmatpush1.bf16.msra.mxu0 0
        %4663 = vmatprep.subr.bf16.mxu0 0
        %4664 = vmatpush1.bf16.msra.mxu0 0
        %4665 = vmatprep.subr.bf16.mxu0 0
        %4666 = vmatpush1.bf16.msra.mxu0 0
        %4667 = vmatprep.subr.bf16.mxu0 0
        %4668 = vmatpush1.bf16.msra.mxu0 0
        %4669 = vmatprep.subr.bf16.mxu0 0
        %4670 = vmatpush1.bf16.msra.mxu0 0
        %4671 = vmatprep.subr.bf16.mxu0 0
        %4672 = vmatpush1.bf16.msra.mxu0 0
        %4673 = vmatprep.subr.bf16.mxu0 0
        %4674 = vmatpush1.bf16.msra.mxu0 0
        %4675 = vmatprep.subr.bf16.mxu0 0
        %4676 = vmatpush1.bf16.msra.mxu0 0
        %4677 = vmatprep.subr.bf16.mxu0 0
        %4678 = vmatpush1.bf16.msra.mxu0 0
        %4679 = vmatprep.subr.bf16.mxu0 0
        %4680 = vmatpush1.bf16.msra.mxu0 0
        %4681 = vmatprep.mubr.bf16.mxu0 0
        %4682 = vmatmul.mubr.bf16.gmra.mrb[0].mxu0 %v4644
        %v4683 = vpop.f32.mrb[0].mxu0
        %v4684 = vadd.f32 0.0, %v4683
        %v4685 = vpop.f32.mrb[0].mxu0
        %v4686 = vpop.f32.mrb[0].mxu0
        %v4687 = vpop.f32.mrb[0].mxu0
        %4688 = vdwg.mxu0
        %v4690 = vsel %vm2891, %v3274, 0
        %v4693 = vsel %vm3311, %v3306, 0
        %4695 = vmatprep.subr.bf16.mxu0 0
        %4696 = vmatpush1.bf16.msra.mxu0 %v4693
        %4697 = vmatprep.subr.bf16.mxu0 0
        %4698 = vmatpush1.bf16.msra.mxu0 0
        %4699 = vmatprep.subr.bf16.mxu0 0
        %4700 = vmatpush1.bf16.msra.mxu0 0
        %4701 = vmatprep.subr.bf16.mxu0 0
        %4702 = vmatpush1.bf16.msra.mxu0 0
        %4703 = vmatprep.subr.bf16.mxu0 0
        %4704 = vmatpush1.bf16.msra.mxu0 0
        %4705 = vmatprep.subr.bf16.mxu0 0
        %4706 = vmatpush1.bf16.msra.mxu0 0
        %4707 = vmatprep.subr.bf16.mxu0 0
        %4708 = vmatpush1.bf16.msra.mxu0 0
        %4709 = vmatprep.subr.bf16.mxu0 0
        %4710 = vmatpush1.bf16.msra.mxu0 0
        %4711 = vmatprep.subr.bf16.mxu0 0
        %4712 = vmatpush1.bf16.msra.mxu0 0
        %4713 = vmatprep.subr.bf16.mxu0 0
        %4714 = vmatpush1.bf16.msra.mxu0 0
        %4715 = vmatprep.subr.bf16.mxu0 0
        %4716 = vmatpush1.bf16.msra.mxu0 0
        %4717 = vmatprep.subr.bf16.mxu0 0
        %4718 = vmatpush1.bf16.msra.mxu0 0
        %4719 = vmatprep.subr.bf16.mxu0 0
        %4720 = vmatpush1.bf16.msra.mxu0 0
        %4721 = vmatprep.subr.bf16.mxu0 0
        %4722 = vmatpush1.bf16.msra.mxu0 0
        %4723 = vmatprep.subr.bf16.mxu0 0
        %4724 = vmatpush1.bf16.msra.mxu0 0
        %4725 = vmatprep.subr.bf16.mxu0 0
        %4726 = vmatpush1.bf16.msra.mxu0 0
        %4727 = vmatprep.mubr.bf16.mxu0 0
        %4728 = vmatmul.mubr.bf16.gmra.mrb[0].mxu0 %v4690
        %v4729 = vpop.f32.mrb[0].mxu0
        %v4730 = vadd.f32 0.0, %v4729
        %v4731 = vpop.f32.mrb[0].mxu0
        %v4732 = vpop.f32.mrb[0].mxu0
        %v4733 = vpop.f32.mrb[0].mxu0
        %4734 = vdwg.mxu0
        %v4736 = vsel %vm2891, %v3275, 0
        %v4739 = vsel %vm3311, %v3307, 0
        %4741 = vmatprep.subr.bf16.mxu0 0
        %4742 = vmatpush1.bf16.msra.mxu0 %v4739
        %4743 = vmatprep.subr.bf16.mxu0 0
        %4744 = vmatpush1.bf16.msra.mxu0 0
        %4745 = vmatprep.subr.bf16.mxu0 0
        %4746 = vmatpush1.bf16.msra.mxu0 0
        %4747 = vmatprep.subr.bf16.mxu0 0
        %4748 = vmatpush1.bf16.msra.mxu0 0
        %4749 = vmatprep.subr.bf16.mxu0 0
        %4750 = vmatpush1.bf16.msra.mxu0 0
        %4751 = vmatprep.subr.bf16.mxu0 0
        %4752 = vmatpush1.bf16.msra.mxu0 0
        %4753 = vmatprep.subr.bf16.mxu0 0
        %4754 = vmatpush1.bf16.msra.mxu0 0
        %4755 = vmatprep.subr.bf16.mxu0 0
        %4756 = vmatpush1.bf16.msra.mxu0 0
        %4757 = vmatprep.subr.bf16.mxu0 0
        %4758 = vmatpush1.bf16.msra.mxu0 0
        %4759 = vmatprep.subr.bf16.mxu0 0
        %4760 = vmatpush1.bf16.msra.mxu0 0
        %4761 = vmatprep.subr.bf16.mxu0 0
        %4762 = vmatpush1.bf16.msra.mxu0 0
        %4763 = vmatprep.subr.bf16.mxu0 0
        %4764 = vmatpush1.bf16.msra.mxu0 0
        %4765 = vmatprep.subr.bf16.mxu0 0
        %4766 = vmatpush1.bf16.msra.mxu0 0
        %4767 = vmatprep.subr.bf16.mxu0 0
        %4768 = vmatpush1.bf16.msra.mxu0 0
        %4769 = vmatprep.subr.bf16.mxu0 0
        %4770 = vmatpush1.bf16.msra.mxu0 0
        %4771 = vmatprep.subr.bf16.mxu0 0
        %4772 = vmatpush1.bf16.msra.mxu0 0
        %4773 = vmatprep.mubr.bf16.mxu0 0
        %4774 = vmatmul.mubr.bf16.gmra.mrb[0].mxu0 %v4736
        %v4775 = vpop.f32.mrb[0].mxu0
        %v4776 = vadd.f32 0.0, %v4775
        %v4777 = vpop.f32.mrb[0].mxu0
        %v4778 = vpop.f32.mrb[0].mxu0
        %v4779 = vpop.f32.mrb[0].mxu0
        %4780 = vdwg.mxu0
        %v4781 = vld [vmem:[#allocation7] sm:$0xf]
        %v4782 = vld [vmem:[#allocation7 + $0x4] sm:$0xf]
        %v4783 = vld [vmem:[#allocation7 + $0x8] sm:$0xf]
        %v4784 = vld [vmem:[#allocation7 + $0xc] sm:$0xf]
        %v4785 = vld [vmem:[#allocation7 + $0x10] sm:$0xf]
        %v4786 = vld [vmem:[#allocation7 + $0x14] sm:$0xf]
        %v4787 = vld [vmem:[#allocation7 + $0x18] sm:$0xf]
        %v4788 = vld [vmem:[#allocation7 + $0x1c] sm:$0xf]
        %v4789 = vld [vmem:[#allocation7 + $0x20] sm:$0xf]
        %v4790 = vld [vmem:[#allocation7 + $0x24] sm:$0xf]
        %v4791 = vld [vmem:[#allocation7 + $0x28] sm:$0xf]
        %v4792 = vld [vmem:[#allocation7 + $0x2c] sm:$0xf]
        %v4793 = vld [vmem:[#allocation7 + $0x30] sm:$0xf]
        %v4794 = vld [vmem:[#allocation7 + $0x34] sm:$0xf]
        %v4795 = vld [vmem:[#allocation7 + $0x38] sm:$0xf]
        %v4796 = vld [vmem:[#allocation7 + $0x3c] sm:$0xf]
        %v4797 = vpack.c.bf16 %v3396, %v3350
        %v4798 = vpack.c.bf16 %v3488, %v3442
        %v4799 = vpack.c.bf16 %v3580, %v3534
        %v4800 = vpack.c.bf16 %v3672, %v3626
        %v4801 = vpack.c.bf16 %v3764, %v3718
        %v4802 = vpack.c.bf16 %v3856, %v3810
        %v4803 = vpack.c.bf16 %v3948, %v3902
        %v4804 = vpack.c.bf16 %v4040, %v3994
        %v4805 = vpack.c.bf16 %v4132, %v4086
        %v4806 = vpack.c.bf16 %v4224, %v4178
        %v4807 = vpack.c.bf16 %v4316, %v4270
        %v4808 = vpack.c.bf16 %v4408, %v4362
        %v4809 = vpack.c.bf16 %v4500, %v4454
        %v4810 = vpack.c.bf16 %v4592, %v4546
        %v4811 = vpack.c.bf16 %v4684, %v4638
        %v4812 = vpack.c.bf16 %v4776, %v4730
        %v4813 = vlaneseq
        %v4814 = vshrl.u32 %v4813, 7
        %v4815 = vsub.s32 0, %v4814
        %v4816 = vrot.slane %v963, %v4815
        %v4833 = vunpack.c.l.b16 %v4781
        %v4834 = vunpack.c.l.b16 %v4782
        %v4835 = vunpack.c.l.b16 %v4783
        %v4836 = vunpack.c.l.b16 %v4784
        %v4837 = vunpack.c.l.b16 %v4785
        %v4838 = vunpack.c.l.b16 %v4786
        %v4839 = vunpack.c.l.b16 %v4787
        %v4840 = vunpack.c.l.b16 %v4788
        %v4841 = vunpack.c.l.b16 %v4789
        %v4842 = vunpack.c.l.b16 %v4790
        %v4843 = vunpack.c.l.b16 %v4791
        %v4844 = vunpack.c.l.b16 %v4792
        %v4845 = vunpack.c.l.b16 %v4793
        %v4846 = vunpack.c.l.b16 %v4794
        %v4847 = vunpack.c.l.b16 %v4795
        %v4848 = vunpack.c.l.b16 %v4796
        %v4849 = vpack.c.b16 %v4834, %v4833
        %v4850 = vpack.c.b16 %v4836, %v4835
        %v4851 = vpack.c.b16 %v4838, %v4837
        %v4852 = vpack.c.b16 %v4840, %v4839
        %v4853 = vpack.c.b16 %v4842, %v4841
        %v4854 = vpack.c.b16 %v4844, %v4843
        %v4855 = vpack.c.b16 %v4846, %v4845
        %v4856 = vpack.c.b16 %v4848, %v4847
        %4865 = vmatprep.subr.bf16.mxu0 0
        %4866 = vmatpush1.bf16.msra.mxu0 %v4849
        %4867 = vmatprep.subr.bf16.mxu0 0
        %4868 = vmatpush1.bf16.msra.mxu0 %v4850
        %4869 = vmatprep.subr.bf16.mxu0 0
        %4870 = vmatpush1.bf16.msra.mxu0 %v4851
        %4871 = vmatprep.subr.bf16.mxu0 0
        %4872 = vmatpush1.bf16.msra.mxu0 %v4852
        %4873 = vmatprep.subr.bf16.mxu0 0
        %4874 = vmatpush1.bf16.msra.mxu0 %v4853
        %4875 = vmatprep.subr.bf16.mxu0 0
        %4876 = vmatpush1.bf16.msra.mxu0 %v4854
        %4877 = vmatprep.subr.bf16.mxu0 0
        %4878 = vmatpush1.bf16.msra.mxu0 %v4855
        %4879 = vmatprep.subr.bf16.mxu0 0
        %4880 = vmatpush1.bf16.msra.mxu0 %v4856
        %4881 = vmatprep.subr.bf16.mxu0 0
        %4882 = vmatpush1.bf16.msra.mxu0 0
        %4883 = vmatprep.subr.bf16.mxu0 0
        %4884 = vmatpush1.bf16.msra.mxu0 0
        %4885 = vmatprep.subr.bf16.mxu0 0
        %4886 = vmatpush1.bf16.msra.mxu0 0
        %4887 = vmatprep.subr.bf16.mxu0 0
        %4888 = vmatpush1.bf16.msra.mxu0 0
        %4889 = vmatprep.subr.bf16.mxu0 0
        %4890 = vmatpush1.bf16.msra.mxu0 0
        %4891 = vmatprep.subr.bf16.mxu0 0
        %4892 = vmatpush1.bf16.msra.mxu0 0
        %4893 = vmatprep.subr.bf16.mxu0 0
        %4894 = vmatpush1.bf16.msra.mxu0 0
        %4895 = vmatprep.subr.bf16.mxu0 0
        %4896 = vmatpush1.bf16.msra.mxu0 0
        %4897 = vmatprep.mubr.bf16.mxu0 0
        %4898 = vmatmul.mubr.bf16.gmra.mrb[0].mxu0 %v4797
        %v4899 = vpop.f32.mrb[0].mxu0
        %v4900 = vadd.f32 %v4816, %v4899
        %v4901 = vpop.f32.mrb[0].mxu0
        %v4902 = vpop.f32.mrb[0].mxu0
        %v4903 = vadd.f32 %v4816, %v4902
        %v4904 = vpop.f32.mrb[0].mxu0
        %4905 = vmatprep.mubr.bf16.mxu0 0
        %4906 = vmatmul.mubr.bf16.gmra.mrb[0].mxu0 %v4798
        %v4907 = vpop.f32.mrb[0].mxu0
        %v4908 = vadd.f32 %v4816, %v4907
        %v4909 = vpop.f32.mrb[0].mxu0
        %v4910 = vpop.f32.mrb[0].mxu0
        %v4911 = vadd.f32 %v4816, %v4910
        %v4912 = vpop.f32.mrb[0].mxu0
        %4913 = vmatprep.mubr.bf16.mxu0 0
        %4914 = vmatmul.mubr.bf16.gmra.mrb[0].mxu0 %v4799
        %v4915 = vpop.f32.mrb[0].mxu0
        %v4916 = vadd.f32 %v4816, %v4915
        %v4917 = vpop.f32.mrb[0].mxu0
        %v4918 = vpop.f32.mrb[0].mxu0
        %v4919 = vadd.f32 %v4816, %v4918
        %v4920 = vpop.f32.mrb[0].mxu0
        %4921 = vmatprep.mubr.bf16.mxu0 0
        %4922 = vmatmul.mubr.bf16.gmra.mrb[0].mxu0 %v4800
        %v4923 = vpop.f32.mrb[0].mxu0
        %v4924 = vadd.f32 %v4816, %v4923
        %v4925 = vpop.f32.mrb[0].mxu0
        %v4926 = vpop.f32.mrb[0].mxu0
        %v4927 = vadd.f32 %v4816, %v4926
        %v4928 = vpop.f32.mrb[0].mxu0
        %4929 = vmatprep.mubr.bf16.mxu0 0
        %4930 = vmatmul.mubr.bf16.gmra.mrb[0].mxu0 %v4801
        %v4931 = vpop.f32.mrb[0].mxu0
        %v4932 = vadd.f32 %v4816, %v4931
        %v4933 = vpop.f32.mrb[0].mxu0
        %v4934 = vpop.f32.mrb[0].mxu0
        %v4935 = vadd.f32 %v4816, %v4934
        %v4936 = vpop.f32.mrb[0].mxu0
        %4937 = vmatprep.mubr.bf16.mxu0 0
        %4938 = vmatmul.mubr.bf16.gmra.mrb[0].mxu0 %v4802
        %v4939 = vpop.f32.mrb[0].mxu0
        %v4940 = vadd.f32 %v4816, %v4939
        %v4941 = vpop.f32.mrb[0].mxu0
        %v4942 = vpop.f32.mrb[0].mxu0
        %v4943 = vadd.f32 %v4816, %v4942
        %v4944 = vpop.f32.mrb[0].mxu0
        %4945 = vmatprep.mubr.bf16.mxu0 0
        %4946 = vmatmul.mubr.bf16.gmra.mrb[0].mxu0 %v4803
        %v4947 = vpop.f32.mrb[0].mxu0
        %v4948 = vadd.f32 %v4816, %v4947
        %v4949 = vpop.f32.mrb[0].mxu0
        %v4950 = vpop.f32.mrb[0].mxu0
        %v4951 = vadd.f32 %v4816, %v4950
        %v4952 = vpop.f32.mrb[0].mxu0
        %4953 = vmatprep.mubr.bf16.mxu0 0
        %4954 = vmatmul.mubr.bf16.gmra.mrb[0].mxu0 %v4804
        %v4955 = vpop.f32.mrb[0].mxu0
        %v4956 = vadd.f32 %v4816, %v4955
        %v4957 = vpop.f32.mrb[0].mxu0
        %v4958 = vpop.f32.mrb[0].mxu0
        %v4959 = vadd.f32 %v4816, %v4958
        %v4960 = vpop.f32.mrb[0].mxu0
        %4961 = vmatprep.mubr.bf16.mxu0 0
        %4962 = vmatmul.mubr.bf16.gmra.mrb[0].mxu0 %v4805
        %v4963 = vpop.f32.mrb[0].mxu0
        %v4964 = vadd.f32 %v4816, %v4963
        %v4965 = vpop.f32.mrb[0].mxu0
        %v4966 = vpop.f32.mrb[0].mxu0
        %v4967 = vadd.f32 %v4816, %v4966
        %v4968 = vpop.f32.mrb[0].mxu0
        %4969 = vmatprep.mubr.bf16.mxu0 0
        %4970 = vmatmul.mubr.bf16.gmra.mrb[0].mxu0 %v4806
        %v4971 = vpop.f32.mrb[0].mxu0
        %v4972 = vadd.f32 %v4816, %v4971
        %v4973 = vpop.f32.mrb[0].mxu0
        %v4974 = vpop.f32.mrb[0].mxu0
        %v4975 = vadd.f32 %v4816, %v4974
        %v4976 = vpop.f32.mrb[0].mxu0
        %4977 = vmatprep.mubr.bf16.mxu0 0
        %4978 = vmatmul.mubr.bf16.gmra.mrb[0].mxu0 %v4807
        %v4979 = vpop.f32.mrb[0].mxu0
        %v4980 = vadd.f32 %v4816, %v4979
        %v4981 = vpop.f32.mrb[0].mxu0
        %v4982 = vpop.f32.mrb[0].mxu0
        %v4983 = vadd.f32 %v4816, %v4982
        %v4984 = vpop.f32.mrb[0].mxu0
        %4985 = vmatprep.mubr.bf16.mxu0 0
        %4986 = vmatmul.mubr.bf16.gmra.mrb[0].mxu0 %v4808
        %v4987 = vpop.f32.mrb[0].mxu0
        %v4988 = vadd.f32 %v4816, %v4987
        %v4989 = vpop.f32.mrb[0].mxu0
        %v4990 = vpop.f32.mrb[0].mxu0
        %v4991 = vadd.f32 %v4816, %v4990
        %v4992 = vpop.f32.mrb[0].mxu0
        %4993 = vmatprep.mubr.bf16.mxu0 0
        %4994 = vmatmul.mubr.bf16.gmra.mrb[0].mxu0 %v4809
        %v4995 = vpop.f32.mrb[0].mxu0
        %v4996 = vadd.f32 %v4816, %v4995
        %v4997 = vpop.f32.mrb[0].mxu0
        %v4998 = vpop.f32.mrb[0].mxu0
        %v4999 = vadd.f32 %v4816, %v4998
        %v5000 = vpop.f32.mrb[0].mxu0
        %5001 = vmatprep.mubr.bf16.mxu0 0
        %5002 = vmatmul.mubr.bf16.gmra.mrb[0].mxu0 %v4810
        %v5003 = vpop.f32.mrb[0].mxu0
        %v5004 = vadd.f32 %v4816, %v5003
        %v5005 = vpop.f32.mrb[0].mxu0
        %v5006 = vpop.f32.mrb[0].mxu0
        %v5007 = vadd.f32 %v4816, %v5006
        %v5008 = vpop.f32.mrb[0].mxu0
        %5009 = vmatprep.mubr.bf16.mxu0 0
        %5010 = vmatmul.mubr.bf16.gmra.mrb[0].mxu0 %v4811
        %v5011 = vpop.f32.mrb[0].mxu0
        %v5012 = vadd.f32 %v4816, %v5011
        %v5013 = vpop.f32.mrb[0].mxu0
        %v5014 = vpop.f32.mrb[0].mxu0
        %v5015 = vadd.f32 %v4816, %v5014
        %v5016 = vpop.f32.mrb[0].mxu0
        %5017 = vmatprep.mubr.bf16.mxu0 0
        %5018 = vmatmul.mubr.bf16.gmra.mrb[0].mxu0 %v4812
        %v5019 = vpop.f32.mrb[0].mxu0
        %v5020 = vadd.f32 %v4816, %v5019
        %v5021 = vpop.f32.mrb[0].mxu0
        %v5022 = vpop.f32.mrb[0].mxu0
        %v5023 = vadd.f32 %v4816, %v5022
        %v5024 = vpop.f32.mrb[0].mxu0
        %5025 = vdwg.mxu0
        %v5026 = vadd.f32 %v899, %v4900
        %v5027 = vadd.f32 %v901, %v4903
        %v5028 = vadd.f32 %v903, %v4908
        %v5029 = vadd.f32 %v905, %v4911
        %v5030 = vadd.f32 %v907, %v4916
        %v5031 = vadd.f32 %v909, %v4919
        %v5032 = vadd.f32 %v911, %v4924
        %v5033 = vadd.f32 %v913, %v4927
        %v5034 = vadd.f32 %v915, %v4932
        %v5035 = vadd.f32 %v917, %v4935
        %v5036 = vadd.f32 %v919, %v4940
        %v5037 = vadd.f32 %v921, %v4943
        %v5038 = vadd.f32 %v923, %v4948
        %v5039 = vadd.f32 %v925, %v4951
        %v5040 = vadd.f32 %v927, %v4956
        %v5041 = vadd.f32 %v929, %v4959
        %v5042 = vadd.f32 %v931, %v4964
        %v5043 = vadd.f32 %v933, %v4967
        %v5044 = vadd.f32 %v935, %v4972
        %v5045 = vadd.f32 %v937, %v4975
        %v5046 = vadd.f32 %v939, %v4980
        %v5047 = vadd.f32 %v941, %v4983
        %v5048 = vadd.f32 %v943, %v4988
        %v5049 = vadd.f32 %v945, %v4991
        %v5050 = vadd.f32 %v947, %v4996
        %v5051 = vadd.f32 %v949, %v4999
        %v5052 = vadd.f32 %v951, %v5004
        %v5053 = vadd.f32 %v953, %v5007
        %v5054 = vadd.f32 %v955, %v5012
        %v5055 = vadd.f32 %v957, %v5015
        %v5056 = vadd.f32 %v959, %v5020
        %v5057 = vadd.f32 %v961, %v5023
        %5058 = vadd.xlane.f32.xlu0 %v5026
        %v5059 = vpop.xlane.xlu0 %5058
        %5060 = vadd.xlane.f32.xlu0 %v5027
        %v5061 = vpop.xlane.xlu0 %5060
        %5062 = vadd.xlane.f32.xlu0 %v5028
        %v5063 = vpop.xlane.xlu0 %5062
        %5064 = vadd.xlane.f32.xlu0 %v5029
        %v5065 = vpop.xlane.xlu0 %5064
        %5066 = vadd.xlane.f32.xlu0 %v5030
        %v5067 = vpop.xlane.xlu0 %5066
        %5068 = vadd.xlane.f32.xlu0 %v5031
        %v5069 = vpop.xlane.xlu0 %5068
        %5070 = vadd.xlane.f32.xlu0 %v5032
        %v5071 = vpop.xlane.xlu0 %5070
        %5072 = vadd.xlane.f32.xlu0 %v5033
        %v5073 = vpop.xlane.xlu0 %5072
        %5074 = vadd.xlane.f32.xlu0 %v5034
        %v5075 = vpop.xlane.xlu0 %5074
        %5076 = vadd.xlane.f32.xlu0 %v5035
        %v5077 = vpop.xlane.xlu0 %5076
        %5078 = vadd.xlane.f32.xlu0 %v5036
        %v5079 = vpop.xlane.xlu0 %5078
        %5080 = vadd.xlane.f32.xlu0 %v5037
        %v5081 = vpop.xlane.xlu0 %5080
        %5082 = vadd.xlane.f32.xlu0 %v5038
        %v5083 = vpop.xlane.xlu0 %5082
        %5084 = vadd.xlane.f32.xlu0 %v5039
        %v5085 = vpop.xlane.xlu0 %5084
        %5086 = vadd.xlane.f32.xlu0 %v5040
        %v5087 = vpop.xlane.xlu0 %5086
        %5088 = vadd.xlane.f32.xlu0 %v5041
        %v5089 = vpop.xlane.xlu0 %5088
        %5090 = vadd.xlane.f32.xlu0 %v5042
        %v5091 = vpop.xlane.xlu0 %5090
        %5092 = vadd.xlane.f32.xlu0 %v5043
        %v5093 = vpop.xlane.xlu0 %5092
        %5094 = vadd.xlane.f32.xlu0 %v5044
        %v5095 = vpop.xlane.xlu0 %5094
        %5096 = vadd.xlane.f32.xlu0 %v5045
        %v5097 = vpop.xlane.xlu0 %5096
        %5098 = vadd.xlane.f32.xlu0 %v5046
        %v5099 = vpop.xlane.xlu0 %5098
        %5100 = vadd.xlane.f32.xlu0 %v5047
        %v5101 = vpop.xlane.xlu0 %5100
        %5102 = vadd.xlane.f32.xlu0 %v5048
        %v5103 = vpop.xlane.xlu0 %5102
        %5104 = vadd.xlane.f32.xlu0 %v5049
        %v5105 = vpop.xlane.xlu0 %5104
        %5106 = vadd.xlane.f32.xlu0 %v5050
        %v5107 = vpop.xlane.xlu0 %5106
        %5108 = vadd.xlane.f32.xlu0 %v5051
        %v5109 = vpop.xlane.xlu0 %5108
        %5110 = vadd.xlane.f32.xlu0 %v5052
        %v5111 = vpop.xlane.xlu0 %5110
        %5112 = vadd.xlane.f32.xlu0 %v5053
        %v5113 = vpop.xlane.xlu0 %5112
        %5114 = vadd.xlane.f32.xlu0 %v5054
        %v5115 = vpop.xlane.xlu0 %5114
        %5116 = vadd.xlane.f32.xlu0 %v5055
        %v5117 = vpop.xlane.xlu0 %5116
        %5118 = vadd.xlane.f32.xlu0 %v5056
        %v5119 = vpop.xlane.xlu0 %5118
        %5120 = vadd.xlane.f32.xlu0 %v5057
        %v5121 = vpop.xlane.xlu0 %5120
        %v5122 = vrcp.pop 128.0
        %v5123 = vmul.f32 %v5059, %v5122
        %v5124 = vmul.f32 %v5061, %v5122
        %v5125 = vmul.f32 %v5063, %v5122
        %v5126 = vmul.f32 %v5065, %v5122
        %v5127 = vmul.f32 %v5067, %v5122
        %v5128 = vmul.f32 %v5069, %v5122
        %v5129 = vmul.f32 %v5071, %v5122
        %v5130 = vmul.f32 %v5073, %v5122
        %v5131 = vmul.f32 %v5075, %v5122
        %v5132 = vmul.f32 %v5077, %v5122
        %v5133 = vmul.f32 %v5079, %v5122
        %v5134 = vmul.f32 %v5081, %v5122
        %v5135 = vmul.f32 %v5083, %v5122
        %v5136 = vmul.f32 %v5085, %v5122
        %v5137 = vmul.f32 %v5087, %v5122
        %v5138 = vmul.f32 %v5089, %v5122
        %v5139 = vmul.f32 %v5091, %v5122
        %v5140 = vmul.f32 %v5093, %v5122
        %v5141 = vmul.f32 %v5095, %v5122
        %v5142 = vmul.f32 %v5097, %v5122
        %v5143 = vmul.f32 %v5099, %v5122
        %v5144 = vmul.f32 %v5101, %v5122
        %v5145 = vmul.f32 %v5103, %v5122
        %v5146 = vmul.f32 %v5105, %v5122
        %v5147 = vmul.f32 %v5107, %v5122
        %v5148 = vmul.f32 %v5109, %v5122
        %v5149 = vmul.f32 %v5111, %v5122
        %v5150 = vmul.f32 %v5113, %v5122
        %v5151 = vmul.f32 %v5115, %v5122
        %v5152 = vmul.f32 %v5117, %v5122
        %v5153 = vmul.f32 %v5119, %v5122
        %v5154 = vmul.f32 %v5121, %v5122
        %v5155 = vsub.f32 %v5026, %v5123
        %v5156 = vsub.f32 %v5027, %v5124
        %v5157 = vsub.f32 %v5028, %v5125
        %v5158 = vsub.f32 %v5029, %v5126
        %v5159 = vsub.f32 %v5030, %v5127
        %v5160 = vsub.f32 %v5031, %v5128
        %v5161 = vsub.f32 %v5032, %v5129
        %v5162 = vsub.f32 %v5033, %v5130
        %v5163 = vsub.f32 %v5034, %v5131
        %v5164 = vsub.f32 %v5035, %v5132
        %v5165 = vsub.f32 %v5036, %v5133
        %v5166 = vsub.f32 %v5037, %v5134
        %v5167 = vsub.f32 %v5038, %v5135
        %v5168 = vsub.f32 %v5039, %v5136
        %v5169 = vsub.f32 %v5040, %v5137
        %v5170 = vsub.f32 %v5041, %v5138
        %v5171 = vsub.f32 %v5042, %v5139
        %v5172 = vsub.f32 %v5043, %v5140
        %v5173 = vsub.f32 %v5044, %v5141
        %v5174 = vsub.f32 %v5045, %v5142
        %v5175 = vsub.f32 %v5046, %v5143
        %v5176 = vsub.f32 %v5047, %v5144
        %v5177 = vsub.f32 %v5048, %v5145
        %v5178 = vsub.f32 %v5049, %v5146
        %v5179 = vsub.f32 %v5050, %v5147
        %v5180 = vsub.f32 %v5051, %v5148
        %v5181 = vsub.f32 %v5052, %v5149
        %v5182 = vsub.f32 %v5053, %v5150
        %v5183 = vsub.f32 %v5054, %v5151
        %v5184 = vsub.f32 %v5055, %v5152
        %v5185 = vsub.f32 %v5056, %v5153
        %v5186 = vsub.f32 %v5057, %v5154
        %v5187 = vmul.f32 %v5155, %v5155
        %v5188 = vmul.f32 %v5156, %v5156
        %v5189 = vmul.f32 %v5157, %v5157
        %v5190 = vmul.f32 %v5158, %v5158
        %v5191 = vmul.f32 %v5159, %v5159
        %v5192 = vmul.f32 %v5160, %v5160
        %v5193 = vmul.f32 %v5161, %v5161
        %v5194 = vmul.f32 %v5162, %v5162
        %v5195 = vmul.f32 %v5163, %v5163
        %v5196 = vmul.f32 %v5164, %v5164
        %v5197 = vmul.f32 %v5165, %v5165
        %v5198 = vmul.f32 %v5166, %v5166
        %v5199 = vmul.f32 %v5167, %v5167
        %v5200 = vmul.f32 %v5168, %v5168
        %v5201 = vmul.f32 %v5169, %v5169
        %v5202 = vmul.f32 %v5170, %v5170
        %v5203 = vmul.f32 %v5171, %v5171
        %v5204 = vmul.f32 %v5172, %v5172
        %v5205 = vmul.f32 %v5173, %v5173
        %v5206 = vmul.f32 %v5174, %v5174
        %v5207 = vmul.f32 %v5175, %v5175
        %v5208 = vmul.f32 %v5176, %v5176
        %v5209 = vmul.f32 %v5177, %v5177
        %v5210 = vmul.f32 %v5178, %v5178
        %v5211 = vmul.f32 %v5179, %v5179
        %v5212 = vmul.f32 %v5180, %v5180
        %v5213 = vmul.f32 %v5181, %v5181
        %v5214 = vmul.f32 %v5182, %v5182
        %v5215 = vmul.f32 %v5183, %v5183
        %v5216 = vmul.f32 %v5184, %v5184
        %v5217 = vmul.f32 %v5185, %v5185
        %v5218 = vmul.f32 %v5186, %v5186
        %5219 = vadd.xlane.f32.xlu0 %v5187
        %v5220 = vpop.xlane.xlu0 %5219
        %5221 = vadd.xlane.f32.xlu0 %v5188
        %v5222 = vpop.xlane.xlu0 %5221
        %5223 = vadd.xlane.f32.xlu0 %v5189
        %v5224 = vpop.xlane.xlu0 %5223
        %5225 = vadd.xlane.f32.xlu0 %v5190
        %v5226 = vpop.xlane.xlu0 %5225
        %5227 = vadd.xlane.f32.xlu0 %v5191
        %v5228 = vpop.xlane.xlu0 %5227
        %5229 = vadd.xlane.f32.xlu0 %v5192
        %v5230 = vpop.xlane.xlu0 %5229
        %5231 = vadd.xlane.f32.xlu0 %v5193
        %v5232 = vpop.xlane.xlu0 %5231
        %5233 = vadd.xlane.f32.xlu0 %v5194
        %v5234 = vpop.xlane.xlu0 %5233
        %5235 = vadd.xlane.f32.xlu0 %v5195
        %v5236 = vpop.xlane.xlu0 %5235
        %5237 = vadd.xlane.f32.xlu0 %v5196
        %v5238 = vpop.xlane.xlu0 %5237
        %5239 = vadd.xlane.f32.xlu0 %v5197
        %v5240 = vpop.xlane.xlu0 %5239
        %5241 = vadd.xlane.f32.xlu0 %v5198
        %v5242 = vpop.xlane.xlu0 %5241
        %5243 = vadd.xlane.f32.xlu0 %v5199
        %v5244 = vpop.xlane.xlu0 %5243
        %5245 = vadd.xlane.f32.xlu0 %v5200
        %v5246 = vpop.xlane.xlu0 %5245
        %5247 = vadd.xlane.f32.xlu0 %v5201
        %v5248 = vpop.xlane.xlu0 %5247
        %5249 = vadd.xlane.f32.xlu0 %v5202
        %v5250 = vpop.xlane.xlu0 %5249
        %5251 = vadd.xlane.f32.xlu0 %v5203
        %v5252 = vpop.xlane.xlu0 %5251
        %5253 = vadd.xlane.f32.xlu0 %v5204
        %v5254 = vpop.xlane.xlu0 %5253
        %5255 = vadd.xlane.f32.xlu0 %v5205
        %v5256 = vpop.xlane.xlu0 %5255
        %5257 = vadd.xlane.f32.xlu0 %v5206
        %v5258 = vpop.xlane.xlu0 %5257
        %5259 = vadd.xlane.f32.xlu0 %v5207
        %v5260 = vpop.xlane.xlu0 %5259
        %5261 = vadd.xlane.f32.xlu0 %v5208
        %v5262 = vpop.xlane.xlu0 %5261
        %5263 = vadd.xlane.f32.xlu0 %v5209
        %v5264 = vpop.xlane.xlu0 %5263
        %5265 = vadd.xlane.f32.xlu0 %v5210
        %v5266 = vpop.xlane.xlu0 %5265
        %5267 = vadd.xlane.f32.xlu0 %v5211
        %v5268 = vpop.xlane.xlu0 %5267
        %5269 = vadd.xlane.f32.xlu0 %v5212
        %v5270 = vpop.xlane.xlu0 %5269
        %5271 = vadd.xlane.f32.xlu0 %v5213
        %v5272 = vpop.xlane.xlu0 %5271
        %5273 = vadd.xlane.f32.xlu0 %v5214
        %v5274 = vpop.xlane.xlu0 %5273
        %5275 = vadd.xlane.f32.xlu0 %v5215
        %v5276 = vpop.xlane.xlu0 %5275
        %5277 = vadd.xlane.f32.xlu0 %v5216
        %v5278 = vpop.xlane.xlu0 %5277
        %5279 = vadd.xlane.f32.xlu0 %v5217
        %v5280 = vpop.xlane.xlu0 %5279
        %5281 = vadd.xlane.f32.xlu0 %v5218
        %v5282 = vpop.xlane.xlu0 %5281
        %v5283 = vmul.f32 %v5220, %v5122
        %v5284 = vmul.f32 %v5222, %v5122
        %v5285 = vmul.f32 %v5224, %v5122
        %v5286 = vmul.f32 %v5226, %v5122
        %v5287 = vmul.f32 %v5228, %v5122
        %v5288 = vmul.f32 %v5230, %v5122
        %v5289 = vmul.f32 %v5232, %v5122
        %v5290 = vmul.f32 %v5234, %v5122
        %v5291 = vmul.f32 %v5236, %v5122
        %v5292 = vmul.f32 %v5238, %v5122
        %v5293 = vmul.f32 %v5240, %v5122
        %v5294 = vmul.f32 %v5242, %v5122
        %v5295 = vmul.f32 %v5244, %v5122
        %v5296 = vmul.f32 %v5246, %v5122
        %v5297 = vmul.f32 %v5248, %v5122
        %v5298 = vmul.f32 %v5250, %v5122
        %v5299 = vmul.f32 %v5252, %v5122
        %v5300 = vmul.f32 %v5254, %v5122
        %v5301 = vmul.f32 %v5256, %v5122
        %v5302 = vmul.f32 %v5258, %v5122
        %v5303 = vmul.f32 %v5260, %v5122
        %v5304 = vmul.f32 %v5262, %v5122
        %v5305 = vmul.f32 %v5264, %v5122
        %v5306 = vmul.f32 %v5266, %v5122
        %v5307 = vmul.f32 %v5268, %v5122
        %v5308 = vmul.f32 %v5270, %v5122
        %v5309 = vmul.f32 %v5272, %v5122
        %v5310 = vmul.f32 %v5274, %v5122
        %v5311 = vmul.f32 %v5276, %v5122
        %v5312 = vmul.f32 %v5278, %v5122
        %v5313 = vmul.f32 %v5280, %v5122
        %v5314 = vmul.f32 %v5282, %v5122
        %v5315 = vadd.f32 %v5283, 1e-05
        %v5316 = vadd.f32 %v5284, 1e-05
        %v5317 = vadd.f32 %v5285, 1e-05
        %v5318 = vadd.f32 %v5286, 1e-05
        %v5319 = vadd.f32 %v5287, 1e-05
        %v5320 = vadd.f32 %v5288, 1e-05
        %v5321 = vadd.f32 %v5289, 1e-05
        %v5322 = vadd.f32 %v5290, 1e-05
        %v5323 = vadd.f32 %v5291, 1e-05
        %v5324 = vadd.f32 %v5292, 1e-05
        %v5325 = vadd.f32 %v5293, 1e-05
        %v5326 = vadd.f32 %v5294, 1e-05
        %v5327 = vadd.f32 %v5295, 1e-05
        %v5328 = vadd.f32 %v5296, 1e-05
        %v5329 = vadd.f32 %v5297, 1e-05
        %v5330 = vadd.f32 %v5298, 1e-05
        %v5331 = vadd.f32 %v5299, 1e-05
        %v5332 = vadd.f32 %v5300, 1e-05
        %v5333 = vadd.f32 %v5301, 1e-05
        %v5334 = vadd.f32 %v5302, 1e-05
        %v5335 = vadd.f32 %v5303, 1e-05
        %v5336 = vadd.f32 %v5304, 1e-05
        %v5337 = vadd.f32 %v5305, 1e-05
        %v5338 = vadd.f32 %v5306, 1e-05
        %v5339 = vadd.f32 %v5307, 1e-05
        %v5340 = vadd.f32 %v5308, 1e-05
        %v5341 = vadd.f32 %v5309, 1e-05
        %v5342 = vadd.f32 %v5310, 1e-05
        %v5343 = vadd.f32 %v5311, 1e-05
        %v5344 = vadd.f32 %v5312, 1e-05
        %v5345 = vadd.f32 %v5313, 1e-05
        %v5346 = vadd.f32 %v5314, 1e-05
        %v5347 = vrsqrt.pop %v5315
        %v5348 = vrsqrt.pop %v5316
        %v5349 = vrsqrt.pop %v5317
        %v5350 = vrsqrt.pop %v5318
        %v5351 = vrsqrt.pop %v5319
        %v5352 = vrsqrt.pop %v5320
        %v5353 = vrsqrt.pop %v5321
        %v5354 = vrsqrt.pop %v5322
        %v5355 = vrsqrt.pop %v5323
        %v5356 = vrsqrt.pop %v5324
        %v5357 = vrsqrt.pop %v5325
        %v5358 = vrsqrt.pop %v5326
        %v5359 = vrsqrt.pop %v5327
        %v5360 = vrsqrt.pop %v5328
        %v5361 = vrsqrt.pop %v5329
        %v5362 = vrsqrt.pop %v5330
        %v5363 = vrsqrt.pop %v5331
        %v5364 = vrsqrt.pop %v5332
        %v5365 = vrsqrt.pop %v5333
        %v5366 = vrsqrt.pop %v5334
        %v5367 = vrsqrt.pop %v5335
        %v5368 = vrsqrt.pop %v5336
        %v5369 = vrsqrt.pop %v5337
        %v5370 = vrsqrt.pop %v5338
        %v5371 = vrsqrt.pop %v5339
        %v5372 = vrsqrt.pop %v5340
        %v5373 = vrsqrt.pop %v5341
        %v5374 = vrsqrt.pop %v5342
        %v5375 = vrsqrt.pop %v5343
        %v5376 = vrsqrt.pop %v5344
        %v5377 = vrsqrt.pop %v5345
        %v5378 = vrsqrt.pop %v5346
        %v5379 = vmul.f32 %v5155, %v5347
        %v5380 = vmul.f32 %v5156, %v5348
        %v5381 = vmul.f32 %v5157, %v5349
        %v5382 = vmul.f32 %v5158, %v5350
        %v5383 = vmul.f32 %v5159, %v5351
        %v5384 = vmul.f32 %v5160, %v5352
        %v5385 = vmul.f32 %v5161, %v5353
        %v5386 = vmul.f32 %v5162, %v5354
        %v5387 = vmul.f32 %v5163, %v5355
        %v5388 = vmul.f32 %v5164, %v5356
        %v5389 = vmul.f32 %v5165, %v5357
        %v5390 = vmul.f32 %v5166, %v5358
        %v5391 = vmul.f32 %v5167, %v5359
        %v5392 = vmul.f32 %v5168, %v5360
        %v5393 = vmul.f32 %v5169, %v5361
        %v5394 = vmul.f32 %v5170, %v5362
        %v5395 = vmul.f32 %v5171, %v5363
        %v5396 = vmul.f32 %v5172, %v5364
        %v5397 = vmul.f32 %v5173, %v5365
        %v5398 = vmul.f32 %v5174, %v5366
        %v5399 = vmul.f32 %v5175, %v5367
        %v5400 = vmul.f32 %v5176, %v5368
        %v5401 = vmul.f32 %v5177, %v5369
        %v5402 = vmul.f32 %v5178, %v5370
        %v5403 = vmul.f32 %v5179, %v5371
        %v5404 = vmul.f32 %v5180, %v5372
        %v5405 = vmul.f32 %v5181, %v5373
        %v5406 = vmul.f32 %v5182, %v5374
        %v5407 = vmul.f32 %v5183, %v5375
        %v5408 = vmul.f32 %v5184, %v5376
        %v5409 = vmul.f32 %v5185, %v5377
        %v5410 = vmul.f32 %v5186, %v5378
        %v5411 = vlaneseq
        %v5412 = vshrl.u32 %v5411, 7
        %v5413 = vsub.s32 0, %v5412
        %v5414 = vrot.slane %v964, %v5413
        %v5415 = vmul.f32 %v5379, %v5414
        %v5416 = vmul.f32 %v5380, %v5414
        %v5417 = vmul.f32 %v5381, %v5414
        %v5418 = vmul.f32 %v5382, %v5414
        %v5419 = vmul.f32 %v5383, %v5414
        %v5420 = vmul.f32 %v5384, %v5414
        %v5421 = vmul.f32 %v5385, %v5414
        %v5422 = vmul.f32 %v5386, %v5414
        %v5423 = vmul.f32 %v5387, %v5414
        %v5424 = vmul.f32 %v5388, %v5414
        %v5425 = vmul.f32 %v5389, %v5414
        %v5426 = vmul.f32 %v5390, %v5414
        %v5427 = vmul.f32 %v5391, %v5414
        %v5428 = vmul.f32 %v5392, %v5414
        %v5429 = vmul.f32 %v5393, %v5414
        %v5430 = vmul.f32 %v5394, %v5414
        %v5431 = vmul.f32 %v5395, %v5414
        %v5432 = vmul.f32 %v5396, %v5414
        %v5433 = vmul.f32 %v5397, %v5414
        %v5434 = vmul.f32 %v5398, %v5414
        %v5435 = vmul.f32 %v5399, %v5414
        %v5436 = vmul.f32 %v5400, %v5414
        %v5437 = vmul.f32 %v5401, %v5414
        %v5438 = vmul.f32 %v5402, %v5414
        %v5439 = vmul.f32 %v5403, %v5414
        %v5440 = vmul.f32 %v5404, %v5414
        %v5441 = vmul.f32 %v5405, %v5414
        %v5442 = vmul.f32 %v5406, %v5414
        %v5443 = vmul.f32 %v5407, %v5414
        %v5444 = vmul.f32 %v5408, %v5414
        %v5445 = vmul.f32 %v5409, %v5414
        %v5446 = vmul.f32 %v5410, %v5414
        %v5447 = vlaneseq
        %v5448 = vshrl.u32 %v5447, 7
        %v5449 = vsub.s32 0, %v5448
        %v5450 = vrot.slane %v965, %v5449
        %v5451 = vadd.f32 %v5415, %v5450
        %v5452 = vadd.f32 %v5416, %v5450
        %v5453 = vadd.f32 %v5417, %v5450
        %v5454 = vadd.f32 %v5418, %v5450
        %v5455 = vadd.f32 %v5419, %v5450
        %v5456 = vadd.f32 %v5420, %v5450
        %v5457 = vadd.f32 %v5421, %v5450
        %v5458 = vadd.f32 %v5422, %v5450
        %v5459 = vadd.f32 %v5423, %v5450
        %v5460 = vadd.f32 %v5424, %v5450
        %v5461 = vadd.f32 %v5425, %v5450
        %v5462 = vadd.f32 %v5426, %v5450
        %v5463 = vadd.f32 %v5427, %v5450
        %v5464 = vadd.f32 %v5428, %v5450
        %v5465 = vadd.f32 %v5429, %v5450
        %v5466 = vadd.f32 %v5430, %v5450
        %v5467 = vadd.f32 %v5431, %v5450
        %v5468 = vadd.f32 %v5432, %v5450
        %v5469 = vadd.f32 %v5433, %v5450
        %v5470 = vadd.f32 %v5434, %v5450
        %v5471 = vadd.f32 %v5435, %v5450
        %v5472 = vadd.f32 %v5436, %v5450
        %v5473 = vadd.f32 %v5437, %v5450
        %v5474 = vadd.f32 %v5438, %v5450
        %v5475 = vadd.f32 %v5439, %v5450
        %v5476 = vadd.f32 %v5440, %v5450
        %v5477 = vadd.f32 %v5441, %v5450
        %v5478 = vadd.f32 %v5442, %v5450
        %v5479 = vadd.f32 %v5443, %v5450
        %v5480 = vadd.f32 %v5444, %v5450
        %v5481 = vadd.f32 %v5445, %v5450
        %v5482 = vadd.f32 %v5446, %v5450
        %v5483 = vld [vmem:[#allocation8] sm:$0xf]
        %v5484 = vld [vmem:[#allocation8 + $0x4] sm:$0xf]
        %v5485 = vld [vmem:[#allocation8 + $0x8] sm:$0xf]
        %v5486 = vld [vmem:[#allocation8 + $0xc] sm:$0xf]
        %v5487 = vld [vmem:[#allocation8 + $0x10] sm:$0xf]
        %v5488 = vld [vmem:[#allocation8 + $0x14] sm:$0xf]
        %v5489 = vld [vmem:[#allocation8 + $0x18] sm:$0xf]
        %v5490 = vld [vmem:[#allocation8 + $0x1c] sm:$0xf]
        %v5491 = vld [vmem:[#allocation8 + $0x20] sm:$0xf]
        %v5492 = vld [vmem:[#allocation8 + $0x24] sm:$0xf]
        %v5493 = vld [vmem:[#allocation8 + $0x28] sm:$0xf]
        %v5494 = vld [vmem:[#allocation8 + $0x2c] sm:$0xf]
        %v5495 = vld [vmem:[#allocation8 + $0x30] sm:$0xf]
        %v5496 = vld [vmem:[#allocation8 + $0x34] sm:$0xf]
        %v5497 = vld [vmem:[#allocation8 + $0x38] sm:$0xf]
        %v5498 = vld [vmem:[#allocation8 + $0x3c] sm:$0xf]
        %v5499 = vpack.c.bf16 %v5452, %v5451
        %v5500 = vpack.c.bf16 %v5454, %v5453
        %v5501 = vpack.c.bf16 %v5456, %v5455
        %v5502 = vpack.c.bf16 %v5458, %v5457
        %v5503 = vpack.c.bf16 %v5460, %v5459
        %v5504 = vpack.c.bf16 %v5462, %v5461
        %v5505 = vpack.c.bf16 %v5464, %v5463
        %v5506 = vpack.c.bf16 %v5466, %v5465
        %v5507 = vpack.c.bf16 %v5468, %v5467
        %v5508 = vpack.c.bf16 %v5470, %v5469
        %v5509 = vpack.c.bf16 %v5472, %v5471
        %v5510 = vpack.c.bf16 %v5474, %v5473
        %v5511 = vpack.c.bf16 %v5476, %v5475
        %v5512 = vpack.c.bf16 %v5478, %v5477
        %v5513 = vpack.c.bf16 %v5480, %v5479
        %v5514 = vpack.c.bf16 %v5482, %v5481
        %v5515 = vlaneseq
        %v5516 = vshrl.u32 %v5515, 7
        %v5517 = vsub.s32 0, %v5516
        %v5518 = vrot.slane %v966, %v5517
        %v5535 = vunpack.c.l.b16 %v5483
        %v5536 = vunpack.c.l.b16 %v5484
        %v5537 = vunpack.c.l.b16 %v5485
        %v5538 = vunpack.c.l.b16 %v5486
        %v5539 = vunpack.c.l.b16 %v5487
        %v5540 = vunpack.c.l.b16 %v5488
        %v5541 = vunpack.c.l.b16 %v5489
        %v5542 = vunpack.c.l.b16 %v5490
        %v5543 = vunpack.c.l.b16 %v5491
        %v5544 = vunpack.c.l.b16 %v5492
        %v5545 = vunpack.c.l.b16 %v5493
        %v5546 = vunpack.c.l.b16 %v5494
        %v5547 = vunpack.c.l.b16 %v5495
        %v5548 = vunpack.c.l.b16 %v5496
        %v5549 = vunpack.c.l.b16 %v5497
        %v5550 = vunpack.c.l.b16 %v5498
        %v5551 = vpack.c.b16 %v5536, %v5535
        %v5552 = vpack.c.b16 %v5538, %v5537
        %v5553 = vpack.c.b16 %v5540, %v5539
        %v5554 = vpack.c.b16 %v5542, %v5541
        %v5555 = vpack.c.b16 %v5544, %v5543
        %v5556 = vpack.c.b16 %v5546, %v5545
        %v5557 = vpack.c.b16 %v5548, %v5547
        %v5558 = vpack.c.b16 %v5550, %v5549
        %5567 = vmatprep.subr.bf16.mxu0 0
        %5568 = vmatpush1.bf16.msra.mxu0 %v5551
        %5569 = vmatprep.subr.bf16.mxu0 0
        %5570 = vmatpush1.bf16.msra.mxu0 %v5552
        %5571 = vmatprep.subr.bf16.mxu0 0
        %5572 = vmatpush1.bf16.msra.mxu0 %v5553
        %5573 = vmatprep.subr.bf16.mxu0 0
        %5574 = vmatpush1.bf16.msra.mxu0 %v5554
        %5575 = vmatprep.subr.bf16.mxu0 0
        %5576 = vmatpush1.bf16.msra.mxu0 %v5555
        %5577 = vmatprep.subr.bf16.mxu0 0
        %5578 = vmatpush1.bf16.msra.mxu0 %v5556
        %5579 = vmatprep.subr.bf16.mxu0 0
        %5580 = vmatpush1.bf16.msra.mxu0 %v5557
        %5581 = vmatprep.subr.bf16.mxu0 0
        %5582 = vmatpush1.bf16.msra.mxu0 %v5558
        %5583 = vmatprep.subr.bf16.mxu0 0
        %5584 = vmatpush1.bf16.msra.mxu0 0
        %5585 = vmatprep.subr.bf16.mxu0 0
        %5586 = vmatpush1.bf16.msra.mxu0 0
        %5587 = vmatprep.subr.bf16.mxu0 0
        %5588 = vmatpush1.bf16.msra.mxu0 0
        %5589 = vmatprep.subr.bf16.mxu0 0
        %5590 = vmatpush1.bf16.msra.mxu0 0
        %5591 = vmatprep.subr.bf16.mxu0 0
        %5592 = vmatpush1.bf16.msra.mxu0 0
        %5593 = vmatprep.subr.bf16.mxu0 0
        %5594 = vmatpush1.bf16.msra.mxu0 0
        %5595 = vmatprep.subr.bf16.mxu0 0
        %5596 = vmatpush1.bf16.msra.mxu0 0
        %5597 = vmatprep.subr.bf16.mxu0 0
        %5598 = vmatpush1.bf16.msra.mxu0 0
        %5599 = vmatprep.mubr.bf16.mxu0 0
        %5600 = vmatmul.mubr.bf16.gmra.mrb[0].mxu0 %v5499
        %v5601 = vpop.f32.mrb[0].mxu0
        %v5602 = vadd.f32 %v5518, %v5601
        %v5603 = vpop.f32.mrb[0].mxu0
        %v5604 = vpop.f32.mrb[0].mxu0
        %v5605 = vadd.f32 %v5518, %v5604
        %v5606 = vpop.f32.mrb[0].mxu0
        %5607 = vmatprep.mubr.bf16.mxu0 0
        %5608 = vmatmul.mubr.bf16.gmra.mrb[0].mxu0 %v5500
        %v5609 = vpop.f32.mrb[0].mxu0
        %v5610 = vadd.f32 %v5518, %v5609
        %v5611 = vpop.f32.mrb[0].mxu0
        %v5612 = vpop.f32.mrb[0].mxu0
        %v5613 = vadd.f32 %v5518, %v5612
        %v5614 = vpop.f32.mrb[0].mxu0
        %5615 = vmatprep.mubr.bf16.mxu0 0
        %5616 = vmatmul.mubr.bf16.gmra.mrb[0].mxu0 %v5501
        %v5617 = vpop.f32.mrb[0].mxu0
        %v5618 = vadd.f32 %v5518, %v5617
        %v5619 = vpop.f32.mrb[0].mxu0
        %v5620 = vpop.f32.mrb[0].mxu0
        %v5621 = vadd.f32 %v5518, %v5620
        %v5622 = vpop.f32.mrb[0].mxu0
        %5623 = vmatprep.mubr.bf16.mxu0 0
        %5624 = vmatmul.mubr.bf16.gmra.mrb[0].mxu0 %v5502
        %v5625 = vpop.f32.mrb[0].mxu0
        %v5626 = vadd.f32 %v5518, %v5625
        %v5627 = vpop.f32.mrb[0].mxu0
        %v5628 = vpop.f32.mrb[0].mxu0
        %v5629 = vadd.f32 %v5518, %v5628
        %v5630 = vpop.f32.mrb[0].mxu0
        %5631 = vmatprep.mubr.bf16.mxu0 0
        %5632 = vmatmul.mubr.bf16.gmra.mrb[0].mxu0 %v5503
        %v5633 = vpop.f32.mrb[0].mxu0
        %v5634 = vadd.f32 %v5518, %v5633
        %v5635 = vpop.f32.mrb[0].mxu0
        %v5636 = vpop.f32.mrb[0].mxu0
        %v5637 = vadd.f32 %v5518, %v5636
        %v5638 = vpop.f32.mrb[0].mxu0
        %5639 = vmatprep.mubr.bf16.mxu0 0
        %5640 = vmatmul.mubr.bf16.gmra.mrb[0].mxu0 %v5504
        %v5641 = vpop.f32.mrb[0].mxu0
        %v5642 = vadd.f32 %v5518, %v5641
        %v5643 = vpop.f32.mrb[0].mxu0
        %v5644 = vpop.f32.mrb[0].mxu0
        %v5645 = vadd.f32 %v5518, %v5644
        %v5646 = vpop.f32.mrb[0].mxu0
        %5647 = vmatprep.mubr.bf16.mxu0 0
        %5648 = vmatmul.mubr.bf16.gmra.mrb[0].mxu0 %v5505
        %v5649 = vpop.f32.mrb[0].mxu0
        %v5650 = vadd.f32 %v5518, %v5649
        %v5651 = vpop.f32.mrb[0].mxu0
        %v5652 = vpop.f32.mrb[0].mxu0
        %v5653 = vadd.f32 %v5518, %v5652
        %v5654 = vpop.f32.mrb[0].mxu0
        %5655 = vmatprep.mubr.bf16.mxu0 0
        %5656 = vmatmul.mubr.bf16.gmra.mrb[0].mxu0 %v5506
        %v5657 = vpop.f32.mrb[0].mxu0
        %v5658 = vadd.f32 %v5518, %v5657
        %v5659 = vpop.f32.mrb[0].mxu0
        %v5660 = vpop.f32.mrb[0].mxu0
        %v5661 = vadd.f32 %v5518, %v5660
        %v5662 = vpop.f32.mrb[0].mxu0
        %5663 = vmatprep.mubr.bf16.mxu0 0
        %5664 = vmatmul.mubr.bf16.gmra.mrb[0].mxu0 %v5507
        %v5665 = vpop.f32.mrb[0].mxu0
        %v5666 = vadd.f32 %v5518, %v5665
        %v5667 = vpop.f32.mrb[0].mxu0
        %v5668 = vpop.f32.mrb[0].mxu0
        %v5669 = vadd.f32 %v5518, %v5668
        %v5670 = vpop.f32.mrb[0].mxu0
        %5671 = vmatprep.mubr.bf16.mxu0 0
        %5672 = vmatmul.mubr.bf16.gmra.mrb[0].mxu0 %v5508
        %v5673 = vpop.f32.mrb[0].mxu0
        %v5674 = vadd.f32 %v5518, %v5673
        %v5675 = vpop.f32.mrb[0].mxu0
        %v5676 = vpop.f32.mrb[0].mxu0
        %v5677 = vadd.f32 %v5518, %v5676
        %v5678 = vpop.f32.mrb[0].mxu0
        %5679 = vmatprep.mubr.bf16.mxu0 0
        %5680 = vmatmul.mubr.bf16.gmra.mrb[0].mxu0 %v5509
        %v5681 = vpop.f32.mrb[0].mxu0
        %v5682 = vadd.f32 %v5518, %v5681
        %v5683 = vpop.f32.mrb[0].mxu0
        %v5684 = vpop.f32.mrb[0].mxu0
        %v5685 = vadd.f32 %v5518, %v5684
        %v5686 = vpop.f32.mrb[0].mxu0
        %5687 = vmatprep.mubr.bf16.mxu0 0
        %5688 = vmatmul.mubr.bf16.gmra.mrb[0].mxu0 %v5510
        %v5689 = vpop.f32.mrb[0].mxu0
        %v5690 = vadd.f32 %v5518, %v5689
        %v5691 = vpop.f32.mrb[0].mxu0
        %v5692 = vpop.f32.mrb[0].mxu0
        %v5693 = vadd.f32 %v5518, %v5692
        %v5694 = vpop.f32.mrb[0].mxu0
        %5695 = vmatprep.mubr.bf16.mxu0 0
        %5696 = vmatmul.mubr.bf16.gmra.mrb[0].mxu0 %v5511
        %v5697 = vpop.f32.mrb[0].mxu0
        %v5698 = vadd.f32 %v5518, %v5697
        %v5699 = vpop.f32.mrb[0].mxu0
        %v5700 = vpop.f32.mrb[0].mxu0
        %v5701 = vadd.f32 %v5518, %v5700
        %v5702 = vpop.f32.mrb[0].mxu0
        %5703 = vmatprep.mubr.bf16.mxu0 0
        %5704 = vmatmul.mubr.bf16.gmra.mrb[0].mxu0 %v5512
        %v5705 = vpop.f32.mrb[0].mxu0
        %v5706 = vadd.f32 %v5518, %v5705
        %v5707 = vpop.f32.mrb[0].mxu0
        %v5708 = vpop.f32.mrb[0].mxu0
        %v5709 = vadd.f32 %v5518, %v5708
        %v5710 = vpop.f32.mrb[0].mxu0
        %5711 = vmatprep.mubr.bf16.mxu0 0
        %5712 = vmatmul.mubr.bf16.gmra.mrb[0].mxu0 %v5513
        %v5713 = vpop.f32.mrb[0].mxu0
        %v5714 = vadd.f32 %v5518, %v5713
        %v5715 = vpop.f32.mrb[0].mxu0
        %v5716 = vpop.f32.mrb[0].mxu0
        %v5717 = vadd.f32 %v5518, %v5716
        %v5718 = vpop.f32.mrb[0].mxu0
        %5719 = vmatprep.mubr.bf16.mxu0 0
        %5720 = vmatmul.mubr.bf16.gmra.mrb[0].mxu0 %v5514
        %v5721 = vpop.f32.mrb[0].mxu0
        %v5722 = vadd.f32 %v5518, %v5721
        %v5723 = vpop.f32.mrb[0].mxu0
        %v5724 = vpop.f32.mrb[0].mxu0
        %v5725 = vadd.f32 %v5518, %v5724
        %v5726 = vpop.f32.mrb[0].mxu0
        %5727 = vdwg.mxu0
        %v5728 = vadd.f32 %v5451, %v5602
        %v5729 = vadd.f32 %v5452, %v5605
        %v5730 = vadd.f32 %v5453, %v5610
        %v5731 = vadd.f32 %v5454, %v5613
        %v5732 = vadd.f32 %v5455, %v5618
        %v5733 = vadd.f32 %v5456, %v5621
        %v5734 = vadd.f32 %v5457, %v5626
        %v5735 = vadd.f32 %v5458, %v5629
        %v5736 = vadd.f32 %v5459, %v5634
        %v5737 = vadd.f32 %v5460, %v5637
        %v5738 = vadd.f32 %v5461, %v5642
        %v5739 = vadd.f32 %v5462, %v5645
        %v5740 = vadd.f32 %v5463, %v5650
        %v5741 = vadd.f32 %v5464, %v5653
        %v5742 = vadd.f32 %v5465, %v5658
        %v5743 = vadd.f32 %v5466, %v5661
        %v5744 = vadd.f32 %v5467, %v5666
        %v5745 = vadd.f32 %v5468, %v5669
        %v5746 = vadd.f32 %v5469, %v5674
        %v5747 = vadd.f32 %v5470, %v5677
        %v5748 = vadd.f32 %v5471, %v5682
        %v5749 = vadd.f32 %v5472, %v5685
        %v5750 = vadd.f32 %v5473, %v5690
        %v5751 = vadd.f32 %v5474, %v5693
        %v5752 = vadd.f32 %v5475, %v5698
        %v5753 = vadd.f32 %v5476, %v5701
        %v5754 = vadd.f32 %v5477, %v5706
        %v5755 = vadd.f32 %v5478, %v5709
        %v5756 = vadd.f32 %v5479, %v5714
        %v5757 = vadd.f32 %v5480, %v5717
        %v5758 = vadd.f32 %v5481, %v5722
        %v5759 = vadd.f32 %v5482, %v5725
        %5760 = vadd.xlane.f32.xlu0 %v5728
        %v5761 = vpop.xlane.xlu0 %5760
        %5762 = vadd.xlane.f32.xlu0 %v5729
        %v5763 = vpop.xlane.xlu0 %5762
        %5764 = vadd.xlane.f32.xlu0 %v5730
        %v5765 = vpop.xlane.xlu0 %5764
        %5766 = vadd.xlane.f32.xlu0 %v5731
        %v5767 = vpop.xlane.xlu0 %5766
        %5768 = vadd.xlane.f32.xlu0 %v5732
        %v5769 = vpop.xlane.xlu0 %5768
        %5770 = vadd.xlane.f32.xlu0 %v5733
        %v5771 = vpop.xlane.xlu0 %5770
        %5772 = vadd.xlane.f32.xlu0 %v5734
        %v5773 = vpop.xlane.xlu0 %5772
        %5774 = vadd.xlane.f32.xlu0 %v5735
        %v5775 = vpop.xlane.xlu0 %5774
        %5776 = vadd.xlane.f32.xlu0 %v5736
        %v5777 = vpop.xlane.xlu0 %5776
        %5778 = vadd.xlane.f32.xlu0 %v5737
        %v5779 = vpop.xlane.xlu0 %5778
        %5780 = vadd.xlane.f32.xlu0 %v5738
        %v5781 = vpop.xlane.xlu0 %5780
        %5782 = vadd.xlane.f32.xlu0 %v5739
        %v5783 = vpop.xlane.xlu0 %5782
        %5784 = vadd.xlane.f32.xlu0 %v5740
        %v5785 = vpop.xlane.xlu0 %5784
        %5786 = vadd.xlane.f32.xlu0 %v5741
        %v5787 = vpop.xlane.xlu0 %5786
        %5788 = vadd.xlane.f32.xlu0 %v5742
        %v5789 = vpop.xlane.xlu0 %5788
        %5790 = vadd.xlane.f32.xlu0 %v5743
        %v5791 = vpop.xlane.xlu0 %5790
        %5792 = vadd.xlane.f32.xlu0 %v5744
        %v5793 = vpop.xlane.xlu0 %5792
        %5794 = vadd.xlane.f32.xlu0 %v5745
        %v5795 = vpop.xlane.xlu0 %5794
        %5796 = vadd.xlane.f32.xlu0 %v5746
        %v5797 = vpop.xlane.xlu0 %5796
        %5798 = vadd.xlane.f32.xlu0 %v5747
        %v5799 = vpop.xlane.xlu0 %5798
        %5800 = vadd.xlane.f32.xlu0 %v5748
        %v5801 = vpop.xlane.xlu0 %5800
        %5802 = vadd.xlane.f32.xlu0 %v5749
        %v5803 = vpop.xlane.xlu0 %5802
        %5804 = vadd.xlane.f32.xlu0 %v5750
        %v5805 = vpop.xlane.xlu0 %5804
        %5806 = vadd.xlane.f32.xlu0 %v5751
        %v5807 = vpop.xlane.xlu0 %5806
        %5808 = vadd.xlane.f32.xlu0 %v5752
        %v5809 = vpop.xlane.xlu0 %5808
        %5810 = vadd.xlane.f32.xlu0 %v5753
        %v5811 = vpop.xlane.xlu0 %5810
        %5812 = vadd.xlane.f32.xlu0 %v5754
        %v5813 = vpop.xlane.xlu0 %5812
        %5814 = vadd.xlane.f32.xlu0 %v5755
        %v5815 = vpop.xlane.xlu0 %5814
        %5816 = vadd.xlane.f32.xlu0 %v5756
        %v5817 = vpop.xlane.xlu0 %5816
        %5818 = vadd.xlane.f32.xlu0 %v5757
        %v5819 = vpop.xlane.xlu0 %5818
        %5820 = vadd.xlane.f32.xlu0 %v5758
        %v5821 = vpop.xlane.xlu0 %5820
        %5822 = vadd.xlane.f32.xlu0 %v5759
        %v5823 = vpop.xlane.xlu0 %5822
        %v5824 = vmul.f32 %v5761, %v5122
        %v5825 = vmul.f32 %v5763, %v5122
        %v5826 = vmul.f32 %v5765, %v5122
        %v5827 = vmul.f32 %v5767, %v5122
        %v5828 = vmul.f32 %v5769, %v5122
        %v5829 = vmul.f32 %v5771, %v5122
        %v5830 = vmul.f32 %v5773, %v5122
        %v5831 = vmul.f32 %v5775, %v5122
        %v5832 = vmul.f32 %v5777, %v5122
        %v5833 = vmul.f32 %v5779, %v5122
        %v5834 = vmul.f32 %v5781, %v5122
        %v5835 = vmul.f32 %v5783, %v5122
        %v5836 = vmul.f32 %v5785, %v5122
        %v5837 = vmul.f32 %v5787, %v5122
        %v5838 = vmul.f32 %v5789, %v5122
        %v5839 = vmul.f32 %v5791, %v5122
        %v5840 = vmul.f32 %v5793, %v5122
        %v5841 = vmul.f32 %v5795, %v5122
        %v5842 = vmul.f32 %v5797, %v5122
        %v5843 = vmul.f32 %v5799, %v5122
        %v5844 = vmul.f32 %v5801, %v5122
        %v5845 = vmul.f32 %v5803, %v5122
        %v5846 = vmul.f32 %v5805, %v5122
        %v5847 = vmul.f32 %v5807, %v5122
        %v5848 = vmul.f32 %v5809, %v5122
        %v5849 = vmul.f32 %v5811, %v5122
        %v5850 = vmul.f32 %v5813, %v5122
        %v5851 = vmul.f32 %v5815, %v5122
        %v5852 = vmul.f32 %v5817, %v5122
        %v5853 = vmul.f32 %v5819, %v5122
        %v5854 = vmul.f32 %v5821, %v5122
        %v5855 = vmul.f32 %v5823, %v5122
        %v5856 = vsub.f32 %v5728, %v5824
        %v5857 = vsub.f32 %v5729, %v5825
        %v5858 = vsub.f32 %v5730, %v5826
        %v5859 = vsub.f32 %v5731, %v5827
        %v5860 = vsub.f32 %v5732, %v5828
        %v5861 = vsub.f32 %v5733, %v5829
        %v5862 = vsub.f32 %v5734, %v5830
        %v5863 = vsub.f32 %v5735, %v5831
        %v5864 = vsub.f32 %v5736, %v5832
        %v5865 = vsub.f32 %v5737, %v5833
        %v5866 = vsub.f32 %v5738, %v5834
        %v5867 = vsub.f32 %v5739, %v5835
        %v5868 = vsub.f32 %v5740, %v5836
        %v5869 = vsub.f32 %v5741, %v5837
        %v5870 = vsub.f32 %v5742, %v5838
        %v5871 = vsub.f32 %v5743, %v5839
        %v5872 = vsub.f32 %v5744, %v5840
        %v5873 = vsub.f32 %v5745, %v5841
        %v5874 = vsub.f32 %v5746, %v5842
        %v5875 = vsub.f32 %v5747, %v5843
        %v5876 = vsub.f32 %v5748, %v5844
        %v5877 = vsub.f32 %v5749, %v5845
        %v5878 = vsub.f32 %v5750, %v5846
        %v5879 = vsub.f32 %v5751, %v5847
        %v5880 = vsub.f32 %v5752, %v5848
        %v5881 = vsub.f32 %v5753, %v5849
        %v5882 = vsub.f32 %v5754, %v5850
        %v5883 = vsub.f32 %v5755, %v5851
        %v5884 = vsub.f32 %v5756, %v5852
        %v5885 = vsub.f32 %v5757, %v5853
        %v5886 = vsub.f32 %v5758, %v5854
        %v5887 = vsub.f32 %v5759, %v5855
        %v5888 = vmul.f32 %v5856, %v5856
        %v5889 = vmul.f32 %v5857, %v5857
        %v5890 = vmul.f32 %v5858, %v5858
        %v5891 = vmul.f32 %v5859, %v5859
        %v5892 = vmul.f32 %v5860, %v5860
        %v5893 = vmul.f32 %v5861, %v5861
        %v5894 = vmul.f32 %v5862, %v5862
        %v5895 = vmul.f32 %v5863, %v5863
        %v5896 = vmul.f32 %v5864, %v5864
        %v5897 = vmul.f32 %v5865, %v5865
        %v5898 = vmul.f32 %v5866, %v5866
        %v5899 = vmul.f32 %v5867, %v5867
        %v5900 = vmul.f32 %v5868, %v5868
        %v5901 = vmul.f32 %v5869, %v5869
        %v5902 = vmul.f32 %v5870, %v5870
        %v5903 = vmul.f32 %v5871, %v5871
        %v5904 = vmul.f32 %v5872, %v5872
        %v5905 = vmul.f32 %v5873, %v5873
        %v5906 = vmul.f32 %v5874, %v5874
        %v5907 = vmul.f32 %v5875, %v5875
        %v5908 = vmul.f32 %v5876, %v5876
        %v5909 = vmul.f32 %v5877, %v5877
        %v5910 = vmul.f32 %v5878, %v5878
        %v5911 = vmul.f32 %v5879, %v5879
        %v5912 = vmul.f32 %v5880, %v5880
        %v5913 = vmul.f32 %v5881, %v5881
        %v5914 = vmul.f32 %v5882, %v5882
        %v5915 = vmul.f32 %v5883, %v5883
        %v5916 = vmul.f32 %v5884, %v5884
        %v5917 = vmul.f32 %v5885, %v5885
        %v5918 = vmul.f32 %v5886, %v5886
        %v5919 = vmul.f32 %v5887, %v5887
        %5920 = vadd.xlane.f32.xlu0 %v5888
        %v5921 = vpop.xlane.xlu0 %5920
        %5922 = vadd.xlane.f32.xlu0 %v5889
        %v5923 = vpop.xlane.xlu0 %5922
        %5924 = vadd.xlane.f32.xlu0 %v5890
        %v5925 = vpop.xlane.xlu0 %5924
        %5926 = vadd.xlane.f32.xlu0 %v5891
        %v5927 = vpop.xlane.xlu0 %5926
        %5928 = vadd.xlane.f32.xlu0 %v5892
        %v5929 = vpop.xlane.xlu0 %5928
        %5930 = vadd.xlane.f32.xlu0 %v5893
        %v5931 = vpop.xlane.xlu0 %5930
        %5932 = vadd.xlane.f32.xlu0 %v5894
        %v5933 = vpop.xlane.xlu0 %5932
        %5934 = vadd.xlane.f32.xlu0 %v5895
        %v5935 = vpop.xlane.xlu0 %5934
        %5936 = vadd.xlane.f32.xlu0 %v5896
        %v5937 = vpop.xlane.xlu0 %5936
        %5938 = vadd.xlane.f32.xlu0 %v5897
        %v5939 = vpop.xlane.xlu0 %5938
        %5940 = vadd.xlane.f32.xlu0 %v5898
        %v5941 = vpop.xlane.xlu0 %5940
        %5942 = vadd.xlane.f32.xlu0 %v5899
        %v5943 = vpop.xlane.xlu0 %5942
        %5944 = vadd.xlane.f32.xlu0 %v5900
        %v5945 = vpop.xlane.xlu0 %5944
        %5946 = vadd.xlane.f32.xlu0 %v5901
        %v5947 = vpop.xlane.xlu0 %5946
        %5948 = vadd.xlane.f32.xlu0 %v5902
        %v5949 = vpop.xlane.xlu0 %5948
        %5950 = vadd.xlane.f32.xlu0 %v5903
        %v5951 = vpop.xlane.xlu0 %5950
        %5952 = vadd.xlane.f32.xlu0 %v5904
        %v5953 = vpop.xlane.xlu0 %5952
        %5954 = vadd.xlane.f32.xlu0 %v5905
        %v5955 = vpop.xlane.xlu0 %5954
        %5956 = vadd.xlane.f32.xlu0 %v5906
        %v5957 = vpop.xlane.xlu0 %5956
        %5958 = vadd.xlane.f32.xlu0 %v5907
        %v5959 = vpop.xlane.xlu0 %5958
        %5960 = vadd.xlane.f32.xlu0 %v5908
        %v5961 = vpop.xlane.xlu0 %5960
        %5962 = vadd.xlane.f32.xlu0 %v5909
        %v5963 = vpop.xlane.xlu0 %5962
        %5964 = vadd.xlane.f32.xlu0 %v5910
        %v5965 = vpop.xlane.xlu0 %5964
        %5966 = vadd.xlane.f32.xlu0 %v5911
        %v5967 = vpop.xlane.xlu0 %5966
        %5968 = vadd.xlane.f32.xlu0 %v5912
        %v5969 = vpop.xlane.xlu0 %5968
        %5970 = vadd.xlane.f32.xlu0 %v5913
        %v5971 = vpop.xlane.xlu0 %5970
        %5972 = vadd.xlane.f32.xlu0 %v5914
        %v5973 = vpop.xlane.xlu0 %5972
        %5974 = vadd.xlane.f32.xlu0 %v5915
        %v5975 = vpop.xlane.xlu0 %5974
        %5976 = vadd.xlane.f32.xlu0 %v5916
        %v5977 = vpop.xlane.xlu0 %5976
        %5978 = vadd.xlane.f32.xlu0 %v5917
        %v5979 = vpop.xlane.xlu0 %5978
        %5980 = vadd.xlane.f32.xlu0 %v5918
        %v5981 = vpop.xlane.xlu0 %5980
        %5982 = vadd.xlane.f32.xlu0 %v5919
        %v5983 = vpop.xlane.xlu0 %5982
        %v5984 = vmul.f32 %v5921, %v5122
        %v5985 = vmul.f32 %v5923, %v5122
        %v5986 = vmul.f32 %v5925, %v5122
        %v5987 = vmul.f32 %v5927, %v5122
        %v5988 = vmul.f32 %v5929, %v5122
        %v5989 = vmul.f32 %v5931, %v5122
        %v5990 = vmul.f32 %v5933, %v5122
        %v5991 = vmul.f32 %v5935, %v5122
        %v5992 = vmul.f32 %v5937, %v5122
        %v5993 = vmul.f32 %v5939, %v5122
        %v5994 = vmul.f32 %v5941, %v5122
        %v5995 = vmul.f32 %v5943, %v5122
        %v5996 = vmul.f32 %v5945, %v5122
        %v5997 = vmul.f32 %v5947, %v5122
        %v5998 = vmul.f32 %v5949, %v5122
        %v5999 = vmul.f32 %v5951, %v5122
        %v6000 = vmul.f32 %v5953, %v5122
        %v6001 = vmul.f32 %v5955, %v5122
        %v6002 = vmul.f32 %v5957, %v5122
        %v6003 = vmul.f32 %v5959, %v5122
        %v6004 = vmul.f32 %v5961, %v5122
        %v6005 = vmul.f32 %v5963, %v5122
        %v6006 = vmul.f32 %v5965, %v5122
        %v6007 = vmul.f32 %v5967, %v5122
        %v6008 = vmul.f32 %v5969, %v5122
        %v6009 = vmul.f32 %v5971, %v5122
        %v6010 = vmul.f32 %v5973, %v5122
        %v6011 = vmul.f32 %v5975, %v5122
        %v6012 = vmul.f32 %v5977, %v5122
        %v6013 = vmul.f32 %v5979, %v5122
        %v6014 = vmul.f32 %v5981, %v5122
        %v6015 = vmul.f32 %v5983, %v5122
        %v6016 = vadd.f32 %v5984, 1e-05
        %v6017 = vadd.f32 %v5985, 1e-05
        %v6018 = vadd.f32 %v5986, 1e-05
        %v6019 = vadd.f32 %v5987, 1e-05
        %v6020 = vadd.f32 %v5988, 1e-05
        %v6021 = vadd.f32 %v5989, 1e-05
        %v6022 = vadd.f32 %v5990, 1e-05
        %v6023 = vadd.f32 %v5991, 1e-05
        %v6024 = vadd.f32 %v5992, 1e-05
        %v6025 = vadd.f32 %v5993, 1e-05
        %v6026 = vadd.f32 %v5994, 1e-05
        %v6027 = vadd.f32 %v5995, 1e-05
        %v6028 = vadd.f32 %v5996, 1e-05
        %v6029 = vadd.f32 %v5997, 1e-05
        %v6030 = vadd.f32 %v5998, 1e-05
        %v6031 = vadd.f32 %v5999, 1e-05
        %v6032 = vadd.f32 %v6000, 1e-05
        %v6033 = vadd.f32 %v6001, 1e-05
        %v6034 = vadd.f32 %v6002, 1e-05
        %v6035 = vadd.f32 %v6003, 1e-05
        %v6036 = vadd.f32 %v6004, 1e-05
        %v6037 = vadd.f32 %v6005, 1e-05
        %v6038 = vadd.f32 %v6006, 1e-05
        %v6039 = vadd.f32 %v6007, 1e-05
        %v6040 = vadd.f32 %v6008, 1e-05
        %v6041 = vadd.f32 %v6009, 1e-05
        %v6042 = vadd.f32 %v6010, 1e-05
        %v6043 = vadd.f32 %v6011, 1e-05
        %v6044 = vadd.f32 %v6012, 1e-05
        %v6045 = vadd.f32 %v6013, 1e-05
        %v6046 = vadd.f32 %v6014, 1e-05
        %v6047 = vadd.f32 %v6015, 1e-05
        %v6048 = vrsqrt.pop %v6016
        %v6049 = vrsqrt.pop %v6017
        %v6050 = vrsqrt.pop %v6018
        %v6051 = vrsqrt.pop %v6019
        %v6052 = vrsqrt.pop %v6020
        %v6053 = vrsqrt.pop %v6021
        %v6054 = vrsqrt.pop %v6022
        %v6055 = vrsqrt.pop %v6023
        %v6056 = vrsqrt.pop %v6024
        %v6057 = vrsqrt.pop %v6025
        %v6058 = vrsqrt.pop %v6026
        %v6059 = vrsqrt.pop %v6027
        %v6060 = vrsqrt.pop %v6028
        %v6061 = vrsqrt.pop %v6029
        %v6062 = vrsqrt.pop %v6030
        %v6063 = vrsqrt.pop %v6031
        %v6064 = vrsqrt.pop %v6032
        %v6065 = vrsqrt.pop %v6033
        %v6066 = vrsqrt.pop %v6034
        %v6067 = vrsqrt.pop %v6035
        %v6068 = vrsqrt.pop %v6036
        %v6069 = vrsqrt.pop %v6037
        %v6070 = vrsqrt.pop %v6038
        %v6071 = vrsqrt.pop %v6039
        %v6072 = vrsqrt.pop %v6040
        %v6073 = vrsqrt.pop %v6041
        %v6074 = vrsqrt.pop %v6042
        %v6075 = vrsqrt.pop %v6043
        %v6076 = vrsqrt.pop %v6044
        %v6077 = vrsqrt.pop %v6045
        %v6078 = vrsqrt.pop %v6046
        %v6079 = vrsqrt.pop %v6047
        %v6080 = vmul.f32 %v5856, %v6048
        %v6081 = vmul.f32 %v5857, %v6049
        %v6082 = vmul.f32 %v5858, %v6050
        %v6083 = vmul.f32 %v5859, %v6051
        %v6084 = vmul.f32 %v5860, %v6052
        %v6085 = vmul.f32 %v5861, %v6053
        %v6086 = vmul.f32 %v5862, %v6054
        %v6087 = vmul.f32 %v5863, %v6055
        %v6088 = vmul.f32 %v5864, %v6056
        %v6089 = vmul.f32 %v5865, %v6057
        %v6090 = vmul.f32 %v5866, %v6058
        %v6091 = vmul.f32 %v5867, %v6059
        %v6092 = vmul.f32 %v5868, %v6060
        %v6093 = vmul.f32 %v5869, %v6061
        %v6094 = vmul.f32 %v5870, %v6062
        %v6095 = vmul.f32 %v5871, %v6063
        %v6096 = vmul.f32 %v5872, %v6064
        %v6097 = vmul.f32 %v5873, %v6065
        %v6098 = vmul.f32 %v5874, %v6066
        %v6099 = vmul.f32 %v5875, %v6067
        %v6100 = vmul.f32 %v5876, %v6068
        %v6101 = vmul.f32 %v5877, %v6069
        %v6102 = vmul.f32 %v5878, %v6070
        %v6103 = vmul.f32 %v5879, %v6071
        %v6104 = vmul.f32 %v5880, %v6072
        %v6105 = vmul.f32 %v5881, %v6073
        %v6106 = vmul.f32 %v5882, %v6074
        %v6107 = vmul.f32 %v5883, %v6075
        %v6108 = vmul.f32 %v5884, %v6076
        %v6109 = vmul.f32 %v5885, %v6077
        %v6110 = vmul.f32 %v5886, %v6078
        %v6111 = vmul.f32 %v5887, %v6079
        %v6112 = vlaneseq
        %v6113 = vshrl.u32 %v6112, 7
        %v6114 = vsub.s32 0, %v6113
        %v6115 = vrot.slane %v967, %v6114
        %v6116 = vmul.f32 %v6080, %v6115
        %v6117 = vmul.f32 %v6081, %v6115
        %v6118 = vmul.f32 %v6082, %v6115
        %v6119 = vmul.f32 %v6083, %v6115
        %v6120 = vmul.f32 %v6084, %v6115
        %v6121 = vmul.f32 %v6085, %v6115
        %v6122 = vmul.f32 %v6086, %v6115
        %v6123 = vmul.f32 %v6087, %v6115
        %v6124 = vmul.f32 %v6088, %v6115
        %v6125 = vmul.f32 %v6089, %v6115
        %v6126 = vmul.f32 %v6090, %v6115
        %v6127 = vmul.f32 %v6091, %v6115
        %v6128 = vmul.f32 %v6092, %v6115
        %v6129 = vmul.f32 %v6093, %v6115
        %v6130 = vmul.f32 %v6094, %v6115
        %v6131 = vmul.f32 %v6095, %v6115
        %v6132 = vmul.f32 %v6096, %v6115
        %v6133 = vmul.f32 %v6097, %v6115
        %v6134 = vmul.f32 %v6098, %v6115
        %v6135 = vmul.f32 %v6099, %v6115
        %v6136 = vmul.f32 %v6100, %v6115
        %v6137 = vmul.f32 %v6101, %v6115
        %v6138 = vmul.f32 %v6102, %v6115
        %v6139 = vmul.f32 %v6103, %v6115
        %v6140 = vmul.f32 %v6104, %v6115
        %v6141 = vmul.f32 %v6105, %v6115
        %v6142 = vmul.f32 %v6106, %v6115
        %v6143 = vmul.f32 %v6107, %v6115
        %v6144 = vmul.f32 %v6108, %v6115
        %v6145 = vmul.f32 %v6109, %v6115
        %v6146 = vmul.f32 %v6110, %v6115
        %v6147 = vmul.f32 %v6111, %v6115
        %v6148 = vlaneseq
        %v6149 = vshrl.u32 %v6148, 7
        %v6150 = vsub.s32 0, %v6149
        %v6151 = vrot.slane %v968, %v6150
        %v6152 = vadd.f32 %v6116, %v6151
        %v6153 = vadd.f32 %v6117, %v6151
        %v6154 = vadd.f32 %v6118, %v6151
        %v6155 = vadd.f32 %v6119, %v6151
        %v6156 = vadd.f32 %v6120, %v6151
        %v6157 = vadd.f32 %v6121, %v6151
        %v6158 = vadd.f32 %v6122, %v6151
        %v6159 = vadd.f32 %v6123, %v6151
        %v6160 = vadd.f32 %v6124, %v6151
        %v6161 = vadd.f32 %v6125, %v6151
        %v6162 = vadd.f32 %v6126, %v6151
        %v6163 = vadd.f32 %v6127, %v6151
        %v6164 = vadd.f32 %v6128, %v6151
        %v6165 = vadd.f32 %v6129, %v6151
        %v6166 = vadd.f32 %v6130, %v6151
        %v6167 = vadd.f32 %v6131, %v6151
        %v6168 = vadd.f32 %v6132, %v6151
        %v6169 = vadd.f32 %v6133, %v6151
        %v6170 = vadd.f32 %v6134, %v6151
        %v6171 = vadd.f32 %v6135, %v6151
        %v6172 = vadd.f32 %v6136, %v6151
        %v6173 = vadd.f32 %v6137, %v6151
        %v6174 = vadd.f32 %v6138, %v6151
        %v6175 = vadd.f32 %v6139, %v6151
        %v6176 = vadd.f32 %v6140, %v6151
        %v6177 = vadd.f32 %v6141, %v6151
        %v6178 = vadd.f32 %v6142, %v6151
        %v6179 = vadd.f32 %v6143, %v6151
        %v6180 = vadd.f32 %v6144, %v6151
        %v6181 = vadd.f32 %v6145, %v6151
        %v6182 = vadd.f32 %v6146, %v6151
        %v6183 = vadd.f32 %v6147, %v6151
        %6184 = vst [vmem:[%s286] sm:$0xff] %v6152
        %6185 = vst [vmem:[%s286 + $0x8] sm:$0xff] %v6153
        %6186 = vst [vmem:[%s286 + $0x10] sm:$0xff] %v6154
        %6187 = vst [vmem:[%s286 + $0x18] sm:$0xff] %v6155
        %6188 = vst [vmem:[%s286 + $0x20] sm:$0xff] %v6156
        %6189 = vst [vmem:[%s286 + $0x28] sm:$0xff] %v6157
        %6190 = vst [vmem:[%s286 + $0x30] sm:$0xff] %v6158
        %6191 = vst [vmem:[%s286 + $0x38] sm:$0xff] %v6159
        %6192 = vst [vmem:[%s286 + $0x40] sm:$0xff] %v6160
        %6193 = vst [vmem:[%s286 + $0x48] sm:$0xff] %v6161
        %6194 = vst [vmem:[%s286 + $0x50] sm:$0xff] %v6162
        %6195 = vst [vmem:[%s286 + $0x58] sm:$0xff] %v6163
        %6196 = vst [vmem:[%s286 + $0x60] sm:$0xff] %v6164
        %6197 = vst [vmem:[%s286 + $0x68] sm:$0xff] %v6165
        %6198 = vst [vmem:[%s286 + $0x70] sm:$0xff] %v6166
        %6199 = vst [vmem:[%s286 + $0x78] sm:$0xff] %v6167
        %6200 = vst [vmem:[%s286 + $0x80] sm:$0xff] %v6168
        %6201 = vst [vmem:[%s286 + $0x88] sm:$0xff] %v6169
        %6202 = vst [vmem:[%s286 + $0x90] sm:$0xff] %v6170
        %6203 = vst [vmem:[%s286 + $0x98] sm:$0xff] %v6171
        %6204 = vst [vmem:[%s286 + $0xa0] sm:$0xff] %v6172
        %6205 = vst [vmem:[%s286 + $0xa8] sm:$0xff] %v6173
        %6206 = vst [vmem:[%s286 + $0xb0] sm:$0xff] %v6174
        %6207 = vst [vmem:[%s286 + $0xb8] sm:$0xff] %v6175
        %6208 = vst [vmem:[%s286 + $0xc0] sm:$0xff] %v6176
        %6209 = vst [vmem:[%s286 + $0xc8] sm:$0xff] %v6177
        %6210 = vst [vmem:[%s286 + $0xd0] sm:$0xff] %v6178
        %6211 = vst [vmem:[%s286 + $0xd8] sm:$0xff] %v6179
        %6212 = vst [vmem:[%s286 + $0xe0] sm:$0xff] %v6180
        %6213 = vst [vmem:[%s286 + $0xe8] sm:$0xff] %v6181
        %6214 = vst [vmem:[%s286 + $0xf0] sm:$0xff] %v6182
        %6215 = vst [vmem:[%s286 + $0xf8] sm:$0xff] %v6183
        %s6216 = sand.u32 %s142, 1
        %s6217 = scalar_lea.sflag [#allocation4], %s6216
        %s6218 = sand.u32 %s142, 1
        %s6219 = smul.addr %s6218, 256
        %s6220 = scalar_lea.vmem [#allocation10], %s6219
        // Predicated region
        $region57: #{tpu_custom_call.1} parent=39 // pred_check
          %p6221 = pneg %p152
        $region58: #{tpu_custom_call.1} parent=39 // pred_check_branch
          %6223 = sbr.rel (%p6221) target = $region60
        $region59: #{tpu_custom_call.1} parent=39 // pred_region
          %s6224 = smul.u32 32, %s24
          %s6226 = ssub.s32 4096, 4096
          %6227 = vsyncadd %s6217, %s6226
          %s6228 = smul.addr %s6224, 128
          %s6229 = scalar_lea.hbm %s5, %s6228
          %s6230 = sshll.u32 %s6220, 4
          %s6231 = int_to_ptr.vmem [resolvable:$true] %s6230
          %6236 = dma.vmem_to_hbm [thread:$0]  %s6231, 4096, %s6229, %s6217, 128, 128, 8
        $region60: #{tpu_custom_call.1} parent=39 // pred_fallthru
          _
      $region40: #{tpu_custom_call.1} parent=5 // pred_fallthru
        _
      %p6237 = scmp.le.s32.totalorder 2, %s19
      // Predicated region
      $region61: #{tpu_custom_call.1} parent=5 // pred_check
        %p6238 = pneg %p6237
      $region62: #{tpu_custom_call.1} parent=5 // pred_check_branch
        %6240 = sbr.rel (%p6238) target = $region64
      $region63: #{tpu_custom_call.1} parent=5 // pred_region
        %s6241 = ssub.s32 %s19, 2
        // Predicated region
        $region65: #{tpu_custom_call.1} parent=63 // pred_check
          %p6242 = pneg %p158
        $region66: #{tpu_custom_call.1} parent=63 // pred_check_branch
          %6244 = sbr.rel (%p6242) target = $region68
        $region67: #{tpu_custom_call.1} parent=63 // pred_region
          %s6245 = sand.u32 %s143, 1
          %s6246 = scalar_lea.sflag [#allocation4], %s6245
          %s6247 = sand.u32 %s143, 1
          %s6248 = smul.addr %s6247, 256
          %s6249 = scalar_lea.vmem [#allocation10], %s6248
          %6250 = dma.done %s6246, 4096
        $region68: #{tpu_custom_call.1} parent=63 // pred_fallthru
          _
      $region64: #{tpu_custom_call.1} parent=5 // pred_fallthru
        _
    $region6: #{tpu_custom_call.1} parent=1 // loop_footer
      %s23 = sadd.s32 1, %s19
    $region7: #{tpu_custom_call.1} parent=1 // loop_footer_branch
      %18 = sbr.rel target = $region3
    $region8: #{tpu_custom_call.1} parent=1 // loop_exit
      _
    %6251 = vsyncpa [#allocation3], 1
    %s6252 = scalar_lea.sflag [#allocation3], 1
    %6253 = vsyncpa %s6252, 1
    %6254 = vsyncpa [#allocation6], 1
    %6255 = vsyncpa [#allocation9], 1
    %6256 = vsyncpa [#allocation4], 1
    %s6257 = scalar_lea.sflag [#allocation4], 1
    %6258 = vsyncpa %s6257, 1

</llo_original>
